<compile_context>
chip_gen: v7x
topology: tpu7x:2x2x1
jax: 0.10.0
libtpu: 0.0.40
codegen_flags: <defaults>
</compile_context>

<pallas_src>
import math
from functools import lru_cache

import numpy as np
import jax
import jax.numpy as jnp
from jax.experimental import pallas as pl
from jax.experimental.pallas import tpu as pltpu

_GN_EPS = 1e-5  # PyTorch GroupNorm default eps


def _gelu(x):
    # nn.GELU() default = exact (erf) GELU.  (tanh-approx would use the EUP slot
    # instead of a VALU polynomial but changes numerics slightly -> keep exact.)
    return 0.5 * x * (1.0 + jax.lax.erf(x * (1.0 / math.sqrt(2.0))))


# ----------------------- hoisted 'same'-padding masks (built once) ----------------------
def _build_pad_masks(H, W):
    """9 zero-padding masks for a 3x3 'same' conv, each (1, H*W) bool
    (None for the centre tap).  Depend only on (H, W) -> built once per kernel
    invocation and shared by all conv3x3 calls."""
    HW = H * W
    p = jax.lax.broadcasted_iota(jnp.int32, (1, HW), 1)
    if (W & (W - 1)) == 0:
        col = jnp.bitwise_and(p, W - 1)                      # p % W, W power of two
    else:
        col = jnp.tile(jax.lax.broadcasted_iota(jnp.int32, (1, W), 1), (1, H))
    masks = []
    for ky in range(3):
        for kx in range(3):
            dy, dx = ky - 1, kx - 1
            conds = []
            if dy == -1:
                conds.append(p >= W)
            if dy == +1:
                conds.append(p < (H - 1) * W)
            if dx == -1:
                conds.append(col >= 1)
            if dx == +1:
                conds.append(col <= W - 2)
            if not conds:
                masks.append(None)
            else:
                m = conds[0]
                for c in conds[1:]:
                    m = jnp.logical_and(m, c)
                masks.append(m)
    return masks


# ----------------- in-kernel: conv3x3(same, bias=False) + GroupNorm(1) -----------------
def _conv3x3_gn(x, w, gamma, beta, masks, W, n_valid):
    """x: (Cin, H*W); w: (Cout, 9*Cin) with w[co, t*Cin + ci] == torch.weight[co, ci, ky, kx],
    t = 3*ky + kx.  Output rows co >= n_valid must have all-zero weights (channel
    padding); GroupNorm(1) stats are taken over the n_valid real channels only.
    Returns (Cout, H*W) float32."""
    Cin, HW = x.shape
    taps = []
    for t in range(9):
        ky, kx = divmod(t, 3)
        s = (ky - 1) * W + (kx - 1)                          # flat lane offset of this tap
        tap = x if s == 0 else pltpu.roll(x, (-s) % HW, 1)   # tap[c, p] = x[c, p+s] (circular)
        if masks[t] is not None:
            tap = jnp.where(masks[t], tap, 0.0)              # zero 'same'-padding semantics
        taps.append(tap)
    # single im2col matmul (Cin is a multiple of 8 by construction -> aligned concat)
    patches = jnp.concatenate(taps, axis=0)                  # (9*Cin, HW)
    y = jnp.dot(w, patches, preferred_element_type=jnp.float32)

    # GroupNorm(num_groups=1), single pass: biased var = E[y^2] - E[y]^2 over the
    # n_valid real channels (padded output rows are exactly zero -> drop out of sums).
    inv_n = 1.0 / float(n_valid * HW)
    mean = jnp.sum(y) * inv_n
    var = jnp.sum(y * y) * inv_n - mean * mean
    scale = gamma.astype(jnp.float32) * jax.lax.rsqrt(var + _GN_EPS)   # (Cout, 1)
    shift = beta.astype(jnp.float32) - mean * scale
    return y * scale + shift


# ---------------- pixel-shuffle scatter matrices (host constants, per offset) ----------
@lru_cache(maxsize=None)
def _shuffle_scatter_np(H, W):
    """S[k=2a+b, p, q] = 1  iff  q == (2y+a)*2W + (2x+b)  with p = y*W + x.
    Lets the 2x2 ConvTranspose pixel shuffle run as a matmul on the idle MXU."""
    HWi, HWo = H * W, 4 * H * W
    S = np.zeros((4, HWi, HWo), dtype=np.float32)
    p = np.arange(HWi)
    y, x = p // W, p % W
    for a in range(2):
        for b in range(2):
            q = (2 * y + a) * (2 * W) + (2 * x + b)
            S[2 * a + b, p, q] = 1.0
    return S


# ------------------------------- fully fused Up kernel ----------------------------------
def _make_up_kernel(H, W, mid_valid, fuse_convt):
    def kernel(*refs):
        it = iter(refs)
        if fuse_convt:
            x_ref = next(it); upw_ref = next(it); upb_ref = next(it); s_ref = next(it)
        else:
            up_ref = next(it)
        skip_ref = next(it)
        d1w1 = next(it); d1g1 = next(it); d1b1 = next(it)
        d1w2 = next(it); d1g2 = next(it); d1b2 = next(it)
        d2w1 = next(it); d2g1 = next(it); d2b1 = next(it)
        d2w2 = next(it); d2g2 = next(it); d2b2 = next(it)
        emb_ref = next(it)
        o_ref = next(it)

        skip = skip_ref[0].astype(jnp.float32)                        # (Cs, HWo)

        if fuse_convt:
            # ConvTranspose2d(k=2, s=2): one tiny matmul per 2x2 offset, then a
            # constant 0/1 scatter matmul places it in the upsampled lane layout.
            x = x_ref[0].astype(jnp.float32)                          # (Ch, HWi)
            acc = None
            for k in range(4):
                t_k = jnp.dot(upw_ref[k], x, preferred_element_type=jnp.float32)
                c_k = jnp.dot(t_k, s_ref[k], preferred_element_type=jnp.float32)
                acc = c_k if acc is None else acc + c_k
            up = acc + upb_ref[...].astype(jnp.float32)               # (Ch, HWo)
        else:
            up = up_ref[0].astype(jnp.float32)

        # torch.cat([skip_x, x], dim=1)
        xcat = jnp.concatenate([skip, up], axis=0)                    # (Cs+Ch, HWo)

        masks = _build_pad_masks(H, W)                                # shared by all 4 convs

        # DoubleConv(in, in, residual=True)
        h = _gelu(_conv3x3_gn(xcat, d1w1[...], d1g1[...], d1b1[...], masks, W,
                              n_valid=d1w1.shape[0]))
        h = _conv3x3_gn(h, d1w2[...], d1g2[...], d1b2[...], masks, W,
                        n_valid=d1w2.shape[0])
        h = _gelu(xcat + h)

        # DoubleConv(in, out, mid=in//2); mid channels zero-padded to 8 in the weights
        h = _gelu(_conv3x3_gn(h, d2w1[...], d2g1[...], d2b1[...], masks, W,
                              n_valid=mid_valid))
        y = _conv3x3_gn(h, d2w2[...], d2g2[...], d2b2[...], masks, W,
                        n_valid=d2w2.shape[0])

        # + Linear(emb_dim, Cout)(SiLU(t)) broadcast over H, W
        y = y + emb_ref[0].astype(jnp.float32)
        o_ref[0] = y.astype(o_ref.dtype)
    return kernel


# --------------------- bilinear interpolate (align_corners=True) -----------------------
# TODO(synk): rare glue path (only when the upsampled size mismatches the skip) kept in
#             plain JAX; it never triggers for power-of-two UNet feature maps.
def bilinear_resize_nchw(x, out_h, out_w):
    N, C, H, W = x.shape
    if (H, W) == (out_h, out_w):
        return x
    ys = jnp.linspace(0.0, H - 1.0, out_h)
    xs = jnp.linspace(0.0, W - 1.0, out_w)
    y0 = jnp.floor(ys).astype(jnp.int32); y1 = jnp.minimum(y0 + 1, H - 1)
    x0 = jnp.floor(xs).astype(jnp.int32); x1 = jnp.minimum(x0 + 1, W - 1)
    wy = (ys - y0)[None, None, :, None]; wx = (xs - x0)[None, None, None, :]
    a = x[:, :, y0][:, :, :, x0]; b = x[:, :, y0][:, :, :, x1]
    c = x[:, :, y1][:, :, :, x0]; d = x[:, :, y1][:, :, :, x1]
    return (a * (1 - wy) * (1 - wx) + b * (1 - wy) * wx
            + c * wy * (1 - wx) + d * wy * wx).astype(x.dtype)


# ------------------------------------ Up.forward ---------------------------------------
def up_forward(params, x_nchw, skip_nchw, t):
    N, Ch, H, W = x_nchw.shape
    _, Cs, Hs, Ws = skip_nchw.shape
    C_in = Cs + Ch                               # channels after torch.cat([skip, up])
    # TODO(synk): the aligned single-matmul im2col assumes C_in % 8 == 0; pad the concat
    #             activation channels (like dc2's mid) if other channel counts are needed.
    assert C_in % 8 == 0, "concat channel count must be a multiple of 8"
    HWo = Hs * Ws
    Cout = params["dc2_w2"].shape[0]
    mid_valid = C_in // 2                        # true mid-channel count of DoubleConv2

    # SiLU + Linear time embedding: tiny (N,E)@(E,Cout) matmul; its add is fused in-kernel.
    emb = (jax.nn.silu(t) @ params["lin_w"] + params["lin_b"]).reshape(N, Cout, 1)

    skip_flat = skip_nchw.reshape(N, Cs, HWo)    # free, contiguous reshape

    weight_args = [params["dc1_w1"], params["dc1_g1"], params["dc1_b1"],
                   params["dc1_w2"], params["dc1_g2"], params["dc1_b2"],
                   params["dc2_w1"], params["dc2_g1"], params["dc2_b1"],
                   params["dc2_w2"], params["dc2_g2"], params["dc2_b2"]]
    weight_specs = [pl.BlockSpec(w.shape, lambda n: (0, 0)) for w in weight_args]
    skip_spec = pl.BlockSpec((1, Cs, HWo), lambda n: (n, 0, 0))
    emb_spec = pl.BlockSpec((1, Cout, 1), lambda n: (n, 0, 0))

    fuse_convt = (2 * H, 2 * W) == (Hs, Ws)
    if fuse_convt:
        # TODO(synk): the scatter matrix is (HW_in, 4*HW_in) per offset (quadratic in
        #             image area); for large images do the shuffle with strided stores
        #             and add an H-tile grid axis + two-pass GN stats (v7x 64 MiB VMEM).
        S = jnp.asarray(_shuffle_scatter_np(H, W), dtype=jnp.float32)
        args = ([x_nchw.reshape(N, Ch, H * W), params["up_w"], params["up_b"], S,
                 skip_flat] + weight_args + [emb])
        in_specs = ([pl.BlockSpec((1, Ch, H * W), lambda n: (n, 0, 0)),
                     pl.BlockSpec(params["up_w"].shape, lambda n: (0, 0, 0)),
                     pl.BlockSpec(params["up_b"].shape, lambda n: (0, 0)),
                     pl.BlockSpec(S.shape, lambda n: (0, 0, 0)),
                     skip_spec] + weight_specs + [emb_spec])
    else:
        # rare mismatch path: ConvT + pixel shuffle + bilinear in plain JAX, rest fused
        x_flat = x_nchw.reshape(N, Ch, H * W)
        raw = (jnp.einsum("koi,nip->nkop", params["up_w"], x_flat)
               + params["up_b"][None, None])                          # (N,4,Ch,H*W)
        up = (raw.reshape(N, 2, 2, Ch, H, W).transpose(0, 3, 4, 1, 5, 2)
                 .reshape(N, Ch, 2 * H, 2 * W))
        up = bilinear_resize_nchw(up, Hs, Ws).reshape(N, Ch, HWo)
        args = [up, skip_flat] + weight_args + [emb]
        in_specs = ([pl.BlockSpec((1, Ch, HWo), lambda n: (n, 0, 0)),
                     skip_spec] + weight_specs + [emb_spec])

    kernel = _make_up_kernel(Hs, Ws, mid_valid, fuse_convt)
    out = pl.pallas_call(
        kernel,
        out_shape=jax.ShapeDtypeStruct((N, Cout, HWo), x_nchw.dtype),
        grid=(N,),
        in_specs=in_specs,
        out_specs=pl.BlockSpec((1, Cout, HWo), lambda n: (n, 0, 0)),
        compiler_params=pltpu.CompilerParams(dimension_semantics=("parallel",)),
    )(*args)
    return out.reshape(N, Cout, Hs, Ws)                               # NCHW, free reshape


# -------------------------------- deterministic params ---------------------------------
def init_params(key, in_channels, out_channels, emb_dim, dtype=jnp.float32):
    half = in_channels // 2            # ConvTranspose channels == skip channels
    mid = in_channels // 2             # DoubleConv2 mid channels (true count)
    mid_pad = -(-mid // 8) * 8         # zero-padded so the im2col matmul stays aligned
    ks = list(jax.random.split(key, 8))

    def nrm(k, shape, scale=0.1):
        return (scale * jax.random.normal(k, shape)).astype(dtype)

    def conv_w(k, cout, cin, cout_pad=None, cin_pad=None):
        # (cout_pad, 9*cin_pad) with w[co, t*cin_pad + ci] == torch.weight[co, ci, ky, kx],
        # t = 3*ky + kx; all padded entries are zero (does not change conv output or GN).
        cout_pad = cout_pad or cout
        cin_pad = cin_pad or cin
        w = 0.1 * jax.random.normal(k, (cout, 9, cin))
        w = jnp.pad(w, ((0, cout_pad - cout), (0, 0), (0, cin_pad - cin)))
        return w.reshape(cout_pad, 9 * cin_pad).astype(dtype)

    def gn(c, c_pad=None):
        # GroupNorm affine; gamma/beta of padded rows are 0 so those rows stay exactly 0.
        c_pad = c_pad or c
        g = jnp.concatenate([jnp.ones((c, 1)), jnp.zeros((c_pad - c, 1))], axis=0)
        return g.astype(dtype), jnp.zeros((c_pad, 1), dtype)

    p = {}
    # ConvTranspose2d(half, half, 2, 2): up_w[2a+b, co, ci] == torch.weight[ci, co, a, b]
    p["up_w"] = nrm(ks[0], (4, half, half))
    p["up_b"] = nrm(ks[1], (half, 1))
    # DoubleConv(in, in, residual=True)
    p["dc1_w1"] = conv_w(ks[2], in_channels, in_channels)
    p["dc1_g1"], p["dc1_b1"] = gn(in_channels)
    p["dc1_w2"] = conv_w(ks[3], in_channels, in_channels)
    p["dc1_g2"], p["dc1_b2"] = gn(in_channels)
    # DoubleConv(in, out, mid=in//2): mid channels zero-padded up to mid_pad
    p["dc2_w1"] = conv_w(ks[4], mid, in_channels, cout_pad=mid_pad)
    p["dc2_g1"], p["dc2_b1"] = gn(mid, mid_pad)
    p["dc2_w2"] = conv_w(ks[5], out_channels, mid, cin_pad=mid_pad)
    p["dc2_g2"], p["dc2_b2"] = gn(out_channels)
    # Linear(emb_dim, out): lin_w == torch.weight.T, lin_b == torch.bias
    p["lin_w"] = nrm(ks[6], (emb_dim, out_channels))
    p["lin_b"] = nrm(ks[7], (out_channels,))
    return p


if __name__ == "__main__":
    in_channels, out_channels, emb_dim = 8, 4, 32
    N, H, W = 2, 8, 8

    key = jax.random.PRNGKey(0)
    kx, ks, kt, kp = jax.random.split(key, 4)
    x = jax.random.normal(kx, (N, in_channels // 2, H, W), jnp.float32)                 # NCHW
    skip_x = jax.random.normal(ks, (N, in_channels // 2, 2 * H, 2 * W), jnp.float32)    # NCHW
    t = jax.random.normal(kt, (N, emb_dim), jnp.float32)
    params = init_params(kp, in_channels, out_channels, emb_dim)

    out = jax.jit(up_forward)(params, x, skip_x, t)
    out = jax.block_until_ready(out)
    assert out.shape == (N, out_channels, 2 * H, 2 * W), out.shape
    assert bool(jnp.all(jnp.isfinite(out)))
    print("KERNEL_OK")
</pallas_src>

<mosaic_0001>
module attributes {stable_mosaic.version = 11 : i64} {
  func.func @kernel(%arg0: i32, %arg1: memref<1x4x64xf32, #tpu.memory_space<vmem>>, %arg2: memref<4x4x4xf32, #tpu.memory_space<vmem>>, %arg3: memref<4x1xf32, #tpu.memory_space<vmem>>, %arg4: memref<4x64x256xf32, #tpu.memory_space<vmem>>, %arg5: memref<1x4x256xf32, #tpu.memory_space<vmem>>, %arg6: memref<8x72xf32, #tpu.memory_space<vmem>>, %arg7: memref<8x1xf32, #tpu.memory_space<vmem>>, %arg8: memref<8x1xf32, #tpu.memory_space<vmem>>, %arg9: memref<8x72xf32, #tpu.memory_space<vmem>>, %arg10: memref<8x1xf32, #tpu.memory_space<vmem>>, %arg11: memref<8x1xf32, #tpu.memory_space<vmem>>, %arg12: memref<8x72xf32, #tpu.memory_space<vmem>>, %arg13: memref<8x1xf32, #tpu.memory_space<vmem>>, %arg14: memref<8x1xf32, #tpu.memory_space<vmem>>, %arg15: memref<4x72xf32, #tpu.memory_space<vmem>>, %arg16: memref<4x1xf32, #tpu.memory_space<vmem>>, %arg17: memref<4x1xf32, #tpu.memory_space<vmem>>, %arg18: memref<1x4x1xf32, #tpu.memory_space<vmem>>, %arg19: memref<1x4x256xf32, #tpu.memory_space<vmem>>) attributes {dimension_semantics = [#tpu.dimension_semantics<parallel>], iteration_bounds = array<i64: 2>, scalar_prefetch = 0 : i64, scratch_operands = 0 : i64, tpu.core_type = #tpu.core_type<tc>, window_params = [{transform_indices = @transform_0, window_bounds = array<i64: 1, 4, 64>}, {pipeline_mode = #tpu.pipeline_mode<synchronous>, transform_indices = @transform_1, window_bounds = array<i64: 4, 4, 4>}, {pipeline_mode = #tpu.pipeline_mode<synchronous>, transform_indices = @transform_2, window_bounds = array<i64: 4, 1>}, {pipeline_mode = #tpu.pipeline_mode<synchronous>, transform_indices = @transform_3, window_bounds = array<i64: 4, 64, 256>}, {transform_indices = @transform_4, window_bounds = array<i64: 1, 4, 256>}, {pipeline_mode = #tpu.pipeline_mode<synchronous>, transform_indices = @transform_5, window_bounds = array<i64: 8, 72>}, {pipeline_mode = #tpu.pipeline_mode<synchronous>, transform_indices = @transform_6, window_bounds = array<i64: 8, 1>}, {pipeline_mode = #tpu.pipeline_mode<synchronous>, transform_indices = @transform_7, window_bounds = array<i64: 8, 1>}, {pipeline_mode = #tpu.pipeline_mode<synchronous>, transform_indices = @transform_8, window_bounds = array<i64: 8, 72>}, {pipeline_mode = #tpu.pipeline_mode<synchronous>, transform_indices = @transform_9, window_bounds = array<i64: 8, 1>}, {pipeline_mode = #tpu.pipeline_mode<synchronous>, transform_indices = @transform_10, window_bounds = array<i64: 8, 1>}, {pipeline_mode = #tpu.pipeline_mode<synchronous>, transform_indices = @transform_11, window_bounds = array<i64: 8, 72>}, {pipeline_mode = #tpu.pipeline_mode<synchronous>, transform_indices = @transform_12, window_bounds = array<i64: 8, 1>}, {pipeline_mode = #tpu.pipeline_mode<synchronous>, transform_indices = @transform_13, window_bounds = array<i64: 8, 1>}, {pipeline_mode = #tpu.pipeline_mode<synchronous>, transform_indices = @transform_14, window_bounds = array<i64: 4, 72>}, {pipeline_mode = #tpu.pipeline_mode<synchronous>, transform_indices = @transform_15, window_bounds = array<i64: 4, 1>}, {pipeline_mode = #tpu.pipeline_mode<synchronous>, transform_indices = @transform_16, window_bounds = array<i64: 4, 1>}, {transform_indices = @transform_17, window_bounds = array<i64: 1, 4, 1>}, {transform_indices = @transform_18, window_bounds = array<i64: 1, 4, 256>}]} {
    %c0 = arith.constant 0 : index
    %c0_0 = arith.constant 0 : index
    %c0_1 = arith.constant 0 : index
    %0 = vector.load %arg5[%c0, %c0_0, %c0_1] : memref<1x4x256xf32, #tpu.memory_space<vmem>>, vector<1x4x256xf32>
    %1 = vector.shape_cast %0 : vector<1x4x256xf32> to vector<4x256xf32>
    %c0_2 = arith.constant 0 : index
    %c0_3 = arith.constant 0 : index
    %c0_4 = arith.constant 0 : index
    %2 = vector.load %arg1[%c0_2, %c0_3, %c0_4] : memref<1x4x64xf32, #tpu.memory_space<vmem>>, vector<1x4x64xf32>
    %3 = vector.shape_cast %2 : vector<1x4x64xf32> to vector<4x64xf32>
    %c0_5 = arith.constant 0 : index
    %c0_6 = arith.constant 0 : index
    %c0_7 = arith.constant 0 : index
    %4 = vector.load %arg2[%c0_5, %c0_6, %c0_7] : memref<4x4x4xf32, #tpu.memory_space<vmem>>, vector<1x4x4xf32>
    %5 = vector.shape_cast %4 : vector<1x4x4xf32> to vector<4x4xf32>
    %cst = arith.constant dense<0.000000e+00> : vector<4x64xf32>
    %6 = tpu.matmul %5, %3, %cst {dimension_numbers = #tpu.dot_dimension_numbers<[1], [0], [0], [1], [0, 0, 1, 1], [], []>} : vector<4x4xf32>, vector<4x64xf32>, vector<4x64xf32> -> vector<4x64xf32>
    %c0_8 = arith.constant 0 : index
    %c0_9 = arith.constant 0 : index
    %c0_10 = arith.constant 0 : index
    %7 = vector.load %arg4[%c0_8, %c0_9, %c0_10] : memref<4x64x256xf32, #tpu.memory_space<vmem>>, vector<1x64x256xf32>
    %8 = vector.shape_cast %7 : vector<1x64x256xf32> to vector<64x256xf32>
    %cst_11 = arith.constant dense<0.000000e+00> : vector<4x256xf32>
    %9 = tpu.matmul %6, %8, %cst_11 {dimension_numbers = #tpu.dot_dimension_numbers<[1], [0], [0], [1], [0, 0, 1, 1], [], []>} : vector<4x64xf32>, vector<64x256xf32>, vector<4x256xf32> -> vector<4x256xf32>
    %c1 = arith.constant 1 : index
    %c0_12 = arith.constant 0 : index
    %c0_13 = arith.constant 0 : index
    %10 = vector.load %arg2[%c1, %c0_12, %c0_13] : memref<4x4x4xf32, #tpu.memory_space<vmem>>, vector<1x4x4xf32>
    %11 = vector.shape_cast %10 : vector<1x4x4xf32> to vector<4x4xf32>
    %cst_14 = arith.constant dense<0.000000e+00> : vector<4x64xf32>
    %12 = tpu.matmul %11, %3, %cst_14 {dimension_numbers = #tpu.dot_dimension_numbers<[1], [0], [0], [1], [0, 0, 1, 1], [], []>} : vector<4x4xf32>, vector<4x64xf32>, vector<4x64xf32> -> vector<4x64xf32>
    %c1_15 = arith.constant 1 : index
    %c0_16 = arith.constant 0 : index
    %c0_17 = arith.constant 0 : index
    %13 = vector.load %arg4[%c1_15, %c0_16, %c0_17] : memref<4x64x256xf32, #tpu.memory_space<vmem>>, vector<1x64x256xf32>
    %14 = vector.shape_cast %13 : vector<1x64x256xf32> to vector<64x256xf32>
    %cst_18 = arith.constant dense<0.000000e+00> : vector<4x256xf32>
    %15 = tpu.matmul %12, %14, %cst_18 {dimension_numbers = #tpu.dot_dimension_numbers<[1], [0], [0], [1], [0, 0, 1, 1], [], []>} : vector<4x64xf32>, vector<64x256xf32>, vector<4x256xf32> -> vector<4x256xf32>
    %16 = arith.addf %9, %15 : vector<4x256xf32>
    %c2 = arith.constant 2 : index
    %c0_19 = arith.constant 0 : index
    %c0_20 = arith.constant 0 : index
    %17 = vector.load %arg2[%c2, %c0_19, %c0_20] : memref<4x4x4xf32, #tpu.memory_space<vmem>>, vector<1x4x4xf32>
    %18 = vector.shape_cast %17 : vector<1x4x4xf32> to vector<4x4xf32>
    %cst_21 = arith.constant dense<0.000000e+00> : vector<4x64xf32>
    %19 = tpu.matmul %18, %3, %cst_21 {dimension_numbers = #tpu.dot_dimension_numbers<[1], [0], [0], [1], [0, 0, 1, 1], [], []>} : vector<4x4xf32>, vector<4x64xf32>, vector<4x64xf32> -> vector<4x64xf32>
    %c2_22 = arith.constant 2 : index
    %c0_23 = arith.constant 0 : index
    %c0_24 = arith.constant 0 : index
    %20 = vector.load %arg4[%c2_22, %c0_23, %c0_24] : memref<4x64x256xf32, #tpu.memory_space<vmem>>, vector<1x64x256xf32>
    %21 = vector.shape_cast %20 : vector<1x64x256xf32> to vector<64x256xf32>
    %cst_25 = arith.constant dense<0.000000e+00> : vector<4x256xf32>
    %22 = tpu.matmul %19, %21, %cst_25 {dimension_numbers = #tpu.dot_dimension_numbers<[1], [0], [0], [1], [0, 0, 1, 1], [], []>} : vector<4x64xf32>, vector<64x256xf32>, vector<4x256xf32> -> vector<4x256xf32>
    %23 = arith.addf %16, %22 : vector<4x256xf32>
    %c3 = arith.constant 3 : index
    %c0_26 = arith.constant 0 : index
    %c0_27 = arith.constant 0 : index
    %24 = vector.load %arg2[%c3, %c0_26, %c0_27] : memref<4x4x4xf32, #tpu.memory_space<vmem>>, vector<1x4x4xf32>
    %25 = vector.shape_cast %24 : vector<1x4x4xf32> to vector<4x4xf32>
    %cst_28 = arith.constant dense<0.000000e+00> : vector<4x64xf32>
    %26 = tpu.matmul %25, %3, %cst_28 {dimension_numbers = #tpu.dot_dimension_numbers<[1], [0], [0], [1], [0, 0, 1, 1], [], []>} : vector<4x4xf32>, vector<4x64xf32>, vector<4x64xf32> -> vector<4x64xf32>
    %c3_29 = arith.constant 3 : index
    %c0_30 = arith.constant 0 : index
    %c0_31 = arith.constant 0 : index
    %27 = vector.load %arg4[%c3_29, %c0_30, %c0_31] : memref<4x64x256xf32, #tpu.memory_space<vmem>>, vector<1x64x256xf32>
    %28 = vector.shape_cast %27 : vector<1x64x256xf32> to vector<64x256xf32>
    %cst_32 = arith.constant dense<0.000000e+00> : vector<4x256xf32>
    %29 = tpu.matmul %26, %28, %cst_32 {dimension_numbers = #tpu.dot_dimension_numbers<[1], [0], [0], [1], [0, 0, 1, 1], [], []>} : vector<4x64xf32>, vector<64x256xf32>, vector<4x256xf32> -> vector<4x256xf32>
    %30 = arith.addf %23, %29 : vector<4x256xf32>
    %c0_33 = arith.constant 0 : index
    %c0_34 = arith.constant 0 : index
    %31 = vector.load %arg3[%c0_33, %c0_34] : memref<4x1xf32, #tpu.memory_space<vmem>>, vector<4x1xf32>
    %32 = vector.broadcast %31 : vector<4x1xf32> to vector<4x256xf32>
    %33 = arith.addf %30, %32 : vector<4x256xf32>
    %34 = tpu.concatenate %1, %33 in 0 : vector<4x256xf32>, vector<4x256xf32> -> vector<8x256xf32>
    %35 = tpu.iota {dimensions = array<i32: 1>} : vector<1x256xi32>
    %c15_i32 = arith.constant 15 : i32
    %36 = vector.broadcast %c15_i32 : i32 to vector<1x256xi32>
    %37 = arith.andi %35, %36 : vector<1x256xi32>
    %c16_i32 = arith.constant 16 : i32
    %38 = vector.broadcast %c16_i32 : i32 to vector<1x256xi32>
    %39 = arith.cmpi sge, %35, %38 : vector<1x256xi32>
    %c1_i32 = arith.constant 1 : i32
    %40 = vector.broadcast %c1_i32 : i32 to vector<1x256xi32>
    %41 = arith.cmpi sge, %37, %40 : vector<1x256xi32>
    %42 = arith.andi %39, %41 : vector<1x256xi1>
    %c16_i32_35 = arith.constant 16 : i32
    %43 = vector.broadcast %c16_i32_35 : i32 to vector<1x256xi32>
    %44 = arith.cmpi sge, %35, %43 : vector<1x256xi32>
    %c16_i32_36 = arith.constant 16 : i32
    %45 = vector.broadcast %c16_i32_36 : i32 to vector<1x256xi32>
    %46 = arith.cmpi sge, %35, %45 : vector<1x256xi32>
    %c14_i32 = arith.constant 14 : i32
    %47 = vector.broadcast %c14_i32 : i32 to vector<1x256xi32>
    %48 = arith.cmpi sle, %37, %47 : vector<1x256xi32>
    %49 = arith.andi %46, %48 : vector<1x256xi1>
    %c1_i32_37 = arith.constant 1 : i32
    %50 = vector.broadcast %c1_i32_37 : i32 to vector<1x256xi32>
    %51 = arith.cmpi sge, %37, %50 : vector<1x256xi32>
    %c14_i32_38 = arith.constant 14 : i32
    %52 = vector.broadcast %c14_i32_38 : i32 to vector<1x256xi32>
    %53 = arith.cmpi sle, %37, %52 : vector<1x256xi32>
    %c240_i32 = arith.constant 240 : i32
    %54 = vector.broadcast %c240_i32 : i32 to vector<1x256xi32>
    %55 = arith.cmpi slt, %35, %54 : vector<1x256xi32>
    %c1_i32_39 = arith.constant 1 : i32
    %56 = vector.broadcast %c1_i32_39 : i32 to vector<1x256xi32>
    %57 = arith.cmpi sge, %37, %56 : vector<1x256xi32>
    %58 = arith.andi %55, %57 : vector<1x256xi1>
    %c240_i32_40 = arith.constant 240 : i32
    %59 = vector.broadcast %c240_i32_40 : i32 to vector<1x256xi32>
    %60 = arith.cmpi slt, %35, %59 : vector<1x256xi32>
    %c240_i32_41 = arith.constant 240 : i32
    %61 = vector.broadcast %c240_i32_41 : i32 to vector<1x256xi32>
    %62 = arith.cmpi slt, %35, %61 : vector<1x256xi32>
    %c14_i32_42 = arith.constant 14 : i32
    %63 = vector.broadcast %c14_i32_42 : i32 to vector<1x256xi32>
    %64 = arith.cmpi sle, %37, %63 : vector<1x256xi32>
    %65 = arith.andi %62, %64 : vector<1x256xi1>
    %c0_43 = arith.constant 0 : index
    %c0_44 = arith.constant 0 : index
    %66 = vector.load %arg6[%c0_43, %c0_44] : memref<8x72xf32, #tpu.memory_space<vmem>>, vector<8x72xf32>
    %c0_45 = arith.constant 0 : index
    %c0_46 = arith.constant 0 : index
    %67 = vector.load %arg7[%c0_45, %c0_46] : memref<8x1xf32, #tpu.memory_space<vmem>>, vector<8x1xf32>
    %c0_47 = arith.constant 0 : index
    %c0_48 = arith.constant 0 : index
    %68 = vector.load %arg8[%c0_47, %c0_48] : memref<8x1xf32, #tpu.memory_space<vmem>>, vector<8x1xf32>
    %c17_i32 = arith.constant 17 : i32
    %69 = tpu.dynamic_rotate %34 by %c17_i32 dim 1 : vector<8x256xf32>, i32 -> vector<8x256xf32>
    %cst_49 = arith.constant 0.000000e+00 : f32
    %70 = vector.shape_cast %42 : vector<1x256xi1> to vector<1x256xi1>
    %71 = vector.broadcast %70 : vector<1x256xi1> to vector<8x256xi1>
    %72 = vector.broadcast %cst_49 : f32 to vector<8x256xf32>
    %73 = arith.select %71, %69, %72 : vector<8x256xi1>, vector<8x256xf32>
    %c16_i32_50 = arith.constant 16 : i32
    %74 = tpu.dynamic_rotate %34 by %c16_i32_50 dim 1 : vector<8x256xf32>, i32 -> vector<8x256xf32>
    %cst_51 = arith.constant 0.000000e+00 : f32
    %75 = vector.shape_cast %44 : vector<1x256xi1> to vector<1x256xi1>
    %76 = vector.broadcast %75 : vector<1x256xi1> to vector<8x256xi1>
    %77 = vector.broadcast %cst_51 : f32 to vector<8x256xf32>
    %78 = arith.select %76, %74, %77 : vector<8x256xi1>, vector<8x256xf32>
    %c15_i32_52 = arith.constant 15 : i32
    %79 = tpu.dynamic_rotate %34 by %c15_i32_52 dim 1 : vector<8x256xf32>, i32 -> vector<8x256xf32>
    %cst_53 = arith.constant 0.000000e+00 : f32
    %80 = vector.shape_cast %49 : vector<1x256xi1> to vector<1x256xi1>
    %81 = vector.broadcast %80 : vector<1x256xi1> to vector<8x256xi1>
    %82 = vector.broadcast %cst_53 : f32 to vector<8x256xf32>
    %83 = arith.select %81, %79, %82 : vector<8x256xi1>, vector<8x256xf32>
    %c1_i32_54 = arith.constant 1 : i32
    %84 = tpu.dynamic_rotate %34 by %c1_i32_54 dim 1 : vector<8x256xf32>, i32 -> vector<8x256xf32>
    %cst_55 = arith.constant 0.000000e+00 : f32
    %85 = vector.shape_cast %51 : vector<1x256xi1> to vector<1x256xi1>
    %86 = vector.broadcast %85 : vector<1x256xi1> to vector<8x256xi1>
    %87 = vector.broadcast %cst_55 : f32 to vector<8x256xf32>
    %88 = arith.select %86, %84, %87 : vector<8x256xi1>, vector<8x256xf32>
    %c255_i32 = arith.constant 255 : i32
    %89 = tpu.dynamic_rotate %34 by %c255_i32 dim 1 : vector<8x256xf32>, i32 -> vector<8x256xf32>
    %cst_56 = arith.constant 0.000000e+00 : f32
    %90 = vector.shape_cast %53 : vector<1x256xi1> to vector<1x256xi1>
    %91 = vector.broadcast %90 : vector<1x256xi1> to vector<8x256xi1>
    %92 = vector.broadcast %cst_56 : f32 to vector<8x256xf32>
    %93 = arith.select %91, %89, %92 : vector<8x256xi1>, vector<8x256xf32>
    %c241_i32 = arith.constant 241 : i32
    %94 = tpu.dynamic_rotate %34 by %c241_i32 dim 1 : vector<8x256xf32>, i32 -> vector<8x256xf32>
    %cst_57 = arith.constant 0.000000e+00 : f32
    %95 = vector.shape_cast %58 : vector<1x256xi1> to vector<1x256xi1>
    %96 = vector.broadcast %95 : vector<1x256xi1> to vector<8x256xi1>
    %97 = vector.broadcast %cst_57 : f32 to vector<8x256xf32>
    %98 = arith.select %96, %94, %97 : vector<8x256xi1>, vector<8x256xf32>
    %c240_i32_58 = arith.constant 240 : i32
    %99 = tpu.dynamic_rotate %34 by %c240_i32_58 dim 1 : vector<8x256xf32>, i32 -> vector<8x256xf32>
    %cst_59 = arith.constant 0.000000e+00 : f32
    %100 = vector.shape_cast %60 : vector<1x256xi1> to vector<1x256xi1>
    %101 = vector.broadcast %100 : vector<1x256xi1> to vector<8x256xi1>
    %102 = vector.broadcast %cst_59 : f32 to vector<8x256xf32>
    %103 = arith.select %101, %99, %102 : vector<8x256xi1>, vector<8x256xf32>
    %c239_i32 = arith.constant 239 : i32
    %104 = tpu.dynamic_rotate %34 by %c239_i32 dim 1 : vector<8x256xf32>, i32 -> vector<8x256xf32>
    %cst_60 = arith.constant 0.000000e+00 : f32
    %105 = vector.shape_cast %65 : vector<1x256xi1> to vector<1x256xi1>
    %106 = vector.broadcast %105 : vector<1x256xi1> to vector<8x256xi1>
    %107 = vector.broadcast %cst_60 : f32 to vector<8x256xf32>
    %108 = arith.select %106, %104, %107 : vector<8x256xi1>, vector<8x256xf32>
    %109 = tpu.concatenate %73, %78, %83, %88, %34, %93, %98, %103, %108 in 0 : vector<8x256xf32>, vector<8x256xf32>, vector<8x256xf32>, vector<8x256xf32>, vector<8x256xf32>, vector<8x256xf32>, vector<8x256xf32>, vector<8x256xf32>, vector<8x256xf32> -> vector<72x256xf32>
    %cst_61 = arith.constant dense<0.000000e+00> : vector<8x256xf32>
    %110 = tpu.matmul %66, %109, %cst_61 {dimension_numbers = #tpu.dot_dimension_numbers<[1], [0], [0], [1], [0, 0, 1, 1], [], []>} : vector<8x72xf32>, vector<72x256xf32>, vector<8x256xf32> -> vector<8x256xf32>
    %111 = vector.shape_cast %110 : vector<8x256xf32> to vector<1x8x256xf32>
    %cst_62 = arith.constant dense<0.000000e+00> : vector<1xf32>
    %112 = vector.multi_reduction <add>, %111, %cst_62 [1, 2] : vector<1x8x256xf32> to vector<1xf32>
    %113 = vector.shape_cast %112 : vector<1xf32> to vector<1x1x1xf32>
    %114 = vector.extract %113[0, 0, 0] : f32 from vector<1x1x1xf32>
    %cst_63 = arith.constant 4.8828125E-4 : f32
    %115 = arith.mulf %114, %cst_63 : f32
    %116 = arith.mulf %110, %110 : vector<8x256xf32>
    %117 = vector.shape_cast %116 : vector<8x256xf32> to vector<1x8x256xf32>
    %cst_64 = arith.constant dense<0.000000e+00> : vector<1xf32>
    %118 = vector.multi_reduction <add>, %117, %cst_64 [1, 2] : vector<1x8x256xf32> to vector<1xf32>
    %119 = vector.shape_cast %118 : vector<1xf32> to vector<1x1x1xf32>
    %120 = vector.extract %119[0, 0, 0] : f32 from vector<1x1x1xf32>
    %cst_65 = arith.constant 4.8828125E-4 : f32
    %121 = arith.mulf %120, %cst_65 : f32
    %122 = arith.mulf %115, %115 : f32
    %123 = arith.subf %121, %122 : f32
    %cst_66 = arith.constant 9.99999974E-6 : f32
    %124 = arith.addf %123, %cst_66 : f32
    %125 = math.rsqrt %124 : f32
    %126 = vector.broadcast %125 : f32 to vector<8x1xf32>
    %127 = arith.mulf %67, %126 : vector<8x1xf32>
    %128 = vector.broadcast %115 : f32 to vector<8x1xf32>
    %129 = arith.mulf %128, %127 : vector<8x1xf32>
    %130 = arith.subf %68, %129 : vector<8x1xf32>
    %131 = vector.broadcast %127 : vector<8x1xf32> to vector<8x256xf32>
    %132 = arith.mulf %110, %131 : vector<8x256xf32>
    %133 = vector.broadcast %130 : vector<8x1xf32> to vector<8x256xf32>
    %134 = arith.addf %132, %133 : vector<8x256xf32>
    %cst_67 = arith.constant 5.000000e-01 : f32
    %135 = vector.broadcast %cst_67 : f32 to vector<8x256xf32>
    %136 = arith.mulf %135, %134 : vector<8x256xf32>
    %cst_68 = arith.constant 0.707106769 : f32
    %137 = vector.broadcast %cst_68 : f32 to vector<8x256xf32>
    %138 = arith.mulf %134, %137 : vector<8x256xf32>
    %139 = math.erf %138 : vector<8x256xf32>
    %cst_69 = arith.constant 1.000000e+00 : f32
    %140 = vector.broadcast %cst_69 : f32 to vector<8x256xf32>
    %141 = arith.addf %140, %139 : vector<8x256xf32>
    %142 = arith.mulf %136, %141 : vector<8x256xf32>
    %c0_70 = arith.constant 0 : index
    %c0_71 = arith.constant 0 : index
    %143 = vector.load %arg9[%c0_70, %c0_71] : memref<8x72xf32, #tpu.memory_space<vmem>>, vector<8x72xf32>
    %c0_72 = arith.constant 0 : index
    %c0_73 = arith.constant 0 : index
    %144 = vector.load %arg10[%c0_72, %c0_73] : memref<8x1xf32, #tpu.memory_space<vmem>>, vector<8x1xf32>
    %c0_74 = arith.constant 0 : index
    %c0_75 = arith.constant 0 : index
    %145 = vector.load %arg11[%c0_74, %c0_75] : memref<8x1xf32, #tpu.memory_space<vmem>>, vector<8x1xf32>
    %c17_i32_76 = arith.constant 17 : i32
    %146 = tpu.dynamic_rotate %142 by %c17_i32_76 dim 1 : vector<8x256xf32>, i32 -> vector<8x256xf32>
    %cst_77 = arith.constant 0.000000e+00 : f32
    %147 = vector.shape_cast %42 : vector<1x256xi1> to vector<1x256xi1>
    %148 = vector.broadcast %147 : vector<1x256xi1> to vector<8x256xi1>
    %149 = vector.broadcast %cst_77 : f32 to vector<8x256xf32>
    %150 = arith.select %148, %146, %149 : vector<8x256xi1>, vector<8x256xf32>
    %c16_i32_78 = arith.constant 16 : i32
    %151 = tpu.dynamic_rotate %142 by %c16_i32_78 dim 1 : vector<8x256xf32>, i32 -> vector<8x256xf32>
    %cst_79 = arith.constant 0.000000e+00 : f32
    %152 = vector.shape_cast %44 : vector<1x256xi1> to vector<1x256xi1>
    %153 = vector.broadcast %152 : vector<1x256xi1> to vector<8x256xi1>
    %154 = vector.broadcast %cst_79 : f32 to vector<8x256xf32>
    %155 = arith.select %153, %151, %154 : vector<8x256xi1>, vector<8x256xf32>
    %c15_i32_80 = arith.constant 15 : i32
    %156 = tpu.dynamic_rotate %142 by %c15_i32_80 dim 1 : vector<8x256xf32>, i32 -> vector<8x256xf32>
    %cst_81 = arith.constant 0.000000e+00 : f32
    %157 = vector.shape_cast %49 : vector<1x256xi1> to vector<1x256xi1>
    %158 = vector.broadcast %157 : vector<1x256xi1> to vector<8x256xi1>
    %159 = vector.broadcast %cst_81 : f32 to vector<8x256xf32>
    %160 = arith.select %158, %156, %159 : vector<8x256xi1>, vector<8x256xf32>
    %c1_i32_82 = arith.constant 1 : i32
    %161 = tpu.dynamic_rotate %142 by %c1_i32_82 dim 1 : vector<8x256xf32>, i32 -> vector<8x256xf32>
    %cst_83 = arith.constant 0.000000e+00 : f32
    %162 = vector.shape_cast %51 : vector<1x256xi1> to vector<1x256xi1>
    %163 = vector.broadcast %162 : vector<1x256xi1> to vector<8x256xi1>
    %164 = vector.broadcast %cst_83 : f32 to vector<8x256xf32>
    %165 = arith.select %163, %161, %164 : vector<8x256xi1>, vector<8x256xf32>
    %c255_i32_84 = arith.constant 255 : i32
    %166 = tpu.dynamic_rotate %142 by %c255_i32_84 dim 1 : vector<8x256xf32>, i32 -> vector<8x256xf32>
    %cst_85 = arith.constant 0.000000e+00 : f32
    %167 = vector.shape_cast %53 : vector<1x256xi1> to vector<1x256xi1>
    %168 = vector.broadcast %167 : vector<1x256xi1> to vector<8x256xi1>
    %169 = vector.broadcast %cst_85 : f32 to vector<8x256xf32>
    %170 = arith.select %168, %166, %169 : vector<8x256xi1>, vector<8x256xf32>
    %c241_i32_86 = arith.constant 241 : i32
    %171 = tpu.dynamic_rotate %142 by %c241_i32_86 dim 1 : vector<8x256xf32>, i32 -> vector<8x256xf32>
    %cst_87 = arith.constant 0.000000e+00 : f32
    %172 = vector.shape_cast %58 : vector<1x256xi1> to vector<1x256xi1>
    %173 = vector.broadcast %172 : vector<1x256xi1> to vector<8x256xi1>
    %174 = vector.broadcast %cst_87 : f32 to vector<8x256xf32>
    %175 = arith.select %173, %171, %174 : vector<8x256xi1>, vector<8x256xf32>
    %c240_i32_88 = arith.constant 240 : i32
    %176 = tpu.dynamic_rotate %142 by %c240_i32_88 dim 1 : vector<8x256xf32>, i32 -> vector<8x256xf32>
    %cst_89 = arith.constant 0.000000e+00 : f32
    %177 = vector.shape_cast %60 : vector<1x256xi1> to vector<1x256xi1>
    %178 = vector.broadcast %177 : vector<1x256xi1> to vector<8x256xi1>
    %179 = vector.broadcast %cst_89 : f32 to vector<8x256xf32>
    %180 = arith.select %178, %176, %179 : vector<8x256xi1>, vector<8x256xf32>
    %c239_i32_90 = arith.constant 239 : i32
    %181 = tpu.dynamic_rotate %142 by %c239_i32_90 dim 1 : vector<8x256xf32>, i32 -> vector<8x256xf32>
    %cst_91 = arith.constant 0.000000e+00 : f32
    %182 = vector.shape_cast %65 : vector<1x256xi1> to vector<1x256xi1>
    %183 = vector.broadcast %182 : vector<1x256xi1> to vector<8x256xi1>
    %184 = vector.broadcast %cst_91 : f32 to vector<8x256xf32>
    %185 = arith.select %183, %181, %184 : vector<8x256xi1>, vector<8x256xf32>
    %186 = tpu.concatenate %150, %155, %160, %165, %142, %170, %175, %180, %185 in 0 : vector<8x256xf32>, vector<8x256xf32>, vector<8x256xf32>, vector<8x256xf32>, vector<8x256xf32>, vector<8x256xf32>, vector<8x256xf32>, vector<8x256xf32>, vector<8x256xf32> -> vector<72x256xf32>
    %cst_92 = arith.constant dense<0.000000e+00> : vector<8x256xf32>
    %187 = tpu.matmul %143, %186, %cst_92 {dimension_numbers = #tpu.dot_dimension_numbers<[1], [0], [0], [1], [0, 0, 1, 1], [], []>} : vector<8x72xf32>, vector<72x256xf32>, vector<8x256xf32> -> vector<8x256xf32>
    %188 = vector.shape_cast %187 : vector<8x256xf32> to vector<1x8x256xf32>
    %cst_93 = arith.constant dense<0.000000e+00> : vector<1xf32>
    %189 = vector.multi_reduction <add>, %188, %cst_93 [1, 2] : vector<1x8x256xf32> to vector<1xf32>
    %190 = vector.shape_cast %189 : vector<1xf32> to vector<1x1x1xf32>
    %191 = vector.extract %190[0, 0, 0] : f32 from vector<1x1x1xf32>
    %cst_94 = arith.constant 4.8828125E-4 : f32
    %192 = arith.mulf %191, %cst_94 : f32
    %193 = arith.mulf %187, %187 : vector<8x256xf32>
    %194 = vector.shape_cast %193 : vector<8x256xf32> to vector<1x8x256xf32>
    %cst_95 = arith.constant dense<0.000000e+00> : vector<1xf32>
    %195 = vector.multi_reduction <add>, %194, %cst_95 [1, 2] : vector<1x8x256xf32> to vector<1xf32>
    %196 = vector.shape_cast %195 : vector<1xf32> to vector<1x1x1xf32>
    %197 = vector.extract %196[0, 0, 0] : f32 from vector<1x1x1xf32>
    %cst_96 = arith.constant 4.8828125E-4 : f32
    %198 = arith.mulf %197, %cst_96 : f32
    %199 = arith.mulf %192, %192 : f32
    %200 = arith.subf %198, %199 : f32
    %cst_97 = arith.constant 9.99999974E-6 : f32
    %201 = arith.addf %200, %cst_97 : f32
    %202 = math.rsqrt %201 : f32
    %203 = vector.broadcast %202 : f32 to vector<8x1xf32>
    %204 = arith.mulf %144, %203 : vector<8x1xf32>
    %205 = vector.broadcast %192 : f32 to vector<8x1xf32>
    %206 = arith.mulf %205, %204 : vector<8x1xf32>
    %207 = arith.subf %145, %206 : vector<8x1xf32>
    %208 = vector.broadcast %204 : vector<8x1xf32> to vector<8x256xf32>
    %209 = arith.mulf %187, %208 : vector<8x256xf32>
    %210 = vector.broadcast %207 : vector<8x1xf32> to vector<8x256xf32>
    %211 = arith.addf %209, %210 : vector<8x256xf32>
    %212 = arith.addf %34, %211 : vector<8x256xf32>
    %cst_98 = arith.constant 5.000000e-01 : f32
    %213 = vector.broadcast %cst_98 : f32 to vector<8x256xf32>
    %214 = arith.mulf %213, %212 : vector<8x256xf32>
    %cst_99 = arith.constant 0.707106769 : f32
    %215 = vector.broadcast %cst_99 : f32 to vector<8x256xf32>
    %216 = arith.mulf %212, %215 : vector<8x256xf32>
    %217 = math.erf %216 : vector<8x256xf32>
    %cst_100 = arith.constant 1.000000e+00 : f32
    %218 = vector.broadcast %cst_100 : f32 to vector<8x256xf32>
    %219 = arith.addf %218, %217 : vector<8x256xf32>
    %220 = arith.mulf %214, %219 : vector<8x256xf32>
    %c0_101 = arith.constant 0 : index
    %c0_102 = arith.constant 0 : index
    %221 = vector.load %arg12[%c0_101, %c0_102] : memref<8x72xf32, #tpu.memory_space<vmem>>, vector<8x72xf32>
    %c0_103 = arith.constant 0 : index
    %c0_104 = arith.constant 0 : index
    %222 = vector.load %arg13[%c0_103, %c0_104] : memref<8x1xf32, #tpu.memory_space<vmem>>, vector<8x1xf32>
    %c0_105 = arith.constant 0 : index
    %c0_106 = arith.constant 0 : index
    %223 = vector.load %arg14[%c0_105, %c0_106] : memref<8x1xf32, #tpu.memory_space<vmem>>, vector<8x1xf32>
    %c17_i32_107 = arith.constant 17 : i32
    %224 = tpu.dynamic_rotate %220 by %c17_i32_107 dim 1 : vector<8x256xf32>, i32 -> vector<8x256xf32>
    %cst_108 = arith.constant 0.000000e+00 : f32
    %225 = vector.shape_cast %42 : vector<1x256xi1> to vector<1x256xi1>
    %226 = vector.broadcast %225 : vector<1x256xi1> to vector<8x256xi1>
    %227 = vector.broadcast %cst_108 : f32 to vector<8x256xf32>
    %228 = arith.select %226, %224, %227 : vector<8x256xi1>, vector<8x256xf32>
    %c16_i32_109 = arith.constant 16 : i32
    %229 = tpu.dynamic_rotate %220 by %c16_i32_109 dim 1 : vector<8x256xf32>, i32 -> vector<8x256xf32>
    %cst_110 = arith.constant 0.000000e+00 : f32
    %230 = vector.shape_cast %44 : vector<1x256xi1> to vector<1x256xi1>
    %231 = vector.broadcast %230 : vector<1x256xi1> to vector<8x256xi1>
    %232 = vector.broadcast %cst_110 : f32 to vector<8x256xf32>
    %233 = arith.select %231, %229, %232 : vector<8x256xi1>, vector<8x256xf32>
    %c15_i32_111 = arith.constant 15 : i32
    %234 = tpu.dynamic_rotate %220 by %c15_i32_111 dim 1 : vector<8x256xf32>, i32 -> vector<8x256xf32>
    %cst_112 = arith.constant 0.000000e+00 : f32
    %235 = vector.shape_cast %49 : vector<1x256xi1> to vector<1x256xi1>
    %236 = vector.broadcast %235 : vector<1x256xi1> to vector<8x256xi1>
    %237 = vector.broadcast %cst_112 : f32 to vector<8x256xf32>
    %238 = arith.select %236, %234, %237 : vector<8x256xi1>, vector<8x256xf32>
    %c1_i32_113 = arith.constant 1 : i32
    %239 = tpu.dynamic_rotate %220 by %c1_i32_113 dim 1 : vector<8x256xf32>, i32 -> vector<8x256xf32>
    %cst_114 = arith.constant 0.000000e+00 : f32
    %240 = vector.shape_cast %51 : vector<1x256xi1> to vector<1x256xi1>
    %241 = vector.broadcast %240 : vector<1x256xi1> to vector<8x256xi1>
    %242 = vector.broadcast %cst_114 : f32 to vector<8x256xf32>
    %243 = arith.select %241, %239, %242 : vector<8x256xi1>, vector<8x256xf32>
    %c255_i32_115 = arith.constant 255 : i32
    %244 = tpu.dynamic_rotate %220 by %c255_i32_115 dim 1 : vector<8x256xf32>, i32 -> vector<8x256xf32>
    %cst_116 = arith.constant 0.000000e+00 : f32
    %245 = vector.shape_cast %53 : vector<1x256xi1> to vector<1x256xi1>
    %246 = vector.broadcast %245 : vector<1x256xi1> to vector<8x256xi1>
    %247 = vector.broadcast %cst_116 : f32 to vector<8x256xf32>
    %248 = arith.select %246, %244, %247 : vector<8x256xi1>, vector<8x256xf32>
    %c241_i32_117 = arith.constant 241 : i32
    %249 = tpu.dynamic_rotate %220 by %c241_i32_117 dim 1 : vector<8x256xf32>, i32 -> vector<8x256xf32>
    %cst_118 = arith.constant 0.000000e+00 : f32
    %250 = vector.shape_cast %58 : vector<1x256xi1> to vector<1x256xi1>
    %251 = vector.broadcast %250 : vector<1x256xi1> to vector<8x256xi1>
    %252 = vector.broadcast %cst_118 : f32 to vector<8x256xf32>
    %253 = arith.select %251, %249, %252 : vector<8x256xi1>, vector<8x256xf32>
    %c240_i32_119 = arith.constant 240 : i32
    %254 = tpu.dynamic_rotate %220 by %c240_i32_119 dim 1 : vector<8x256xf32>, i32 -> vector<8x256xf32>
    %cst_120 = arith.constant 0.000000e+00 : f32
    %255 = vector.shape_cast %60 : vector<1x256xi1> to vector<1x256xi1>
    %256 = vector.broadcast %255 : vector<1x256xi1> to vector<8x256xi1>
    %257 = vector.broadcast %cst_120 : f32 to vector<8x256xf32>
    %258 = arith.select %256, %254, %257 : vector<8x256xi1>, vector<8x256xf32>
    %c239_i32_121 = arith.constant 239 : i32
    %259 = tpu.dynamic_rotate %220 by %c239_i32_121 dim 1 : vector<8x256xf32>, i32 -> vector<8x256xf32>
    %cst_122 = arith.constant 0.000000e+00 : f32
    %260 = vector.shape_cast %65 : vector<1x256xi1> to vector<1x256xi1>
    %261 = vector.broadcast %260 : vector<1x256xi1> to vector<8x256xi1>
    %262 = vector.broadcast %cst_122 : f32 to vector<8x256xf32>
    %263 = arith.select %261, %259, %262 : vector<8x256xi1>, vector<8x256xf32>
    %264 = tpu.concatenate %228, %233, %238, %243, %220, %248, %253, %258, %263 in 0 : vector<8x256xf32>, vector<8x256xf32>, vector<8x256xf32>, vector<8x256xf32>, vector<8x256xf32>, vector<8x256xf32>, vector<8x256xf32>, vector<8x256xf32>, vector<8x256xf32> -> vector<72x256xf32>
    %cst_123 = arith.constant dense<0.000000e+00> : vector<8x256xf32>
    %265 = tpu.matmul %221, %264, %cst_123 {dimension_numbers = #tpu.dot_dimension_numbers<[1], [0], [0], [1], [0, 0, 1, 1], [], []>} : vector<8x72xf32>, vector<72x256xf32>, vector<8x256xf32> -> vector<8x256xf32>
    %266 = vector.shape_cast %265 : vector<8x256xf32> to vector<1x8x256xf32>
    %cst_124 = arith.constant dense<0.000000e+00> : vector<1xf32>
    %267 = vector.multi_reduction <add>, %266, %cst_124 [1, 2] : vector<1x8x256xf32> to vector<1xf32>
    %268 = vector.shape_cast %267 : vector<1xf32> to vector<1x1x1xf32>
    %269 = vector.extract %268[0, 0, 0] : f32 from vector<1x1x1xf32>
    %cst_125 = arith.constant 9.765625E-4 : f32
    %270 = arith.mulf %269, %cst_125 : f32
    %271 = arith.mulf %265, %265 : vector<8x256xf32>
    %272 = vector.shape_cast %271 : vector<8x256xf32> to vector<1x8x256xf32>
    %cst_126 = arith.constant dense<0.000000e+00> : vector<1xf32>
    %273 = vector.multi_reduction <add>, %272, %cst_126 [1, 2] : vector<1x8x256xf32> to vector<1xf32>
    %274 = vector.shape_cast %273 : vector<1xf32> to vector<1x1x1xf32>
    %275 = vector.extract %274[0, 0, 0] : f32 from vector<1x1x1xf32>
    %cst_127 = arith.constant 9.765625E-4 : f32
    %276 = arith.mulf %275, %cst_127 : f32
    %277 = arith.mulf %270, %270 : f32
    %278 = arith.subf %276, %277 : f32
    %cst_128 = arith.constant 9.99999974E-6 : f32
    %279 = arith.addf %278, %cst_128 : f32
    %280 = math.rsqrt %279 : f32
    %281 = vector.broadcast %280 : f32 to vector<8x1xf32>
    %282 = arith.mulf %222, %281 : vector<8x1xf32>
    %283 = vector.broadcast %270 : f32 to vector<8x1xf32>
    %284 = arith.mulf %283, %282 : vector<8x1xf32>
    %285 = arith.subf %223, %284 : vector<8x1xf32>
    %286 = vector.broadcast %282 : vector<8x1xf32> to vector<8x256xf32>
    %287 = arith.mulf %265, %286 : vector<8x256xf32>
    %288 = vector.broadcast %285 : vector<8x1xf32> to vector<8x256xf32>
    %289 = arith.addf %287, %288 : vector<8x256xf32>
    %cst_129 = arith.constant 5.000000e-01 : f32
    %290 = vector.broadcast %cst_129 : f32 to vector<8x256xf32>
    %291 = arith.mulf %290, %289 : vector<8x256xf32>
    %cst_130 = arith.constant 0.707106769 : f32
    %292 = vector.broadcast %cst_130 : f32 to vector<8x256xf32>
    %293 = arith.mulf %289, %292 : vector<8x256xf32>
    %294 = math.erf %293 : vector<8x256xf32>
    %cst_131 = arith.constant 1.000000e+00 : f32
    %295 = vector.broadcast %cst_131 : f32 to vector<8x256xf32>
    %296 = arith.addf %295, %294 : vector<8x256xf32>
    %297 = arith.mulf %291, %296 : vector<8x256xf32>
    %c0_132 = arith.constant 0 : index
    %c0_133 = arith.constant 0 : index
    %298 = vector.load %arg15[%c0_132, %c0_133] : memref<4x72xf32, #tpu.memory_space<vmem>>, vector<4x72xf32>
    %c0_134 = arith.constant 0 : index
    %c0_135 = arith.constant 0 : index
    %299 = vector.load %arg16[%c0_134, %c0_135] : memref<4x1xf32, #tpu.memory_space<vmem>>, vector<4x1xf32>
    %c0_136 = arith.constant 0 : index
    %c0_137 = arith.constant 0 : index
    %300 = vector.load %arg17[%c0_136, %c0_137] : memref<4x1xf32, #tpu.memory_space<vmem>>, vector<4x1xf32>
    %c17_i32_138 = arith.constant 17 : i32
    %301 = tpu.dynamic_rotate %297 by %c17_i32_138 dim 1 : vector<8x256xf32>, i32 -> vector<8x256xf32>
    %cst_139 = arith.constant 0.000000e+00 : f32
    %302 = vector.shape_cast %42 : vector<1x256xi1> to vector<1x256xi1>
    %303 = vector.broadcast %302 : vector<1x256xi1> to vector<8x256xi1>
    %304 = vector.broadcast %cst_139 : f32 to vector<8x256xf32>
    %305 = arith.select %303, %301, %304 : vector<8x256xi1>, vector<8x256xf32>
    %c16_i32_140 = arith.constant 16 : i32
    %306 = tpu.dynamic_rotate %297 by %c16_i32_140 dim 1 : vector<8x256xf32>, i32 -> vector<8x256xf32>
    %cst_141 = arith.constant 0.000000e+00 : f32
    %307 = vector.shape_cast %44 : vector<1x256xi1> to vector<1x256xi1>
    %308 = vector.broadcast %307 : vector<1x256xi1> to vector<8x256xi1>
    %309 = vector.broadcast %cst_141 : f32 to vector<8x256xf32>
    %310 = arith.select %308, %306, %309 : vector<8x256xi1>, vector<8x256xf32>
    %c15_i32_142 = arith.constant 15 : i32
    %311 = tpu.dynamic_rotate %297 by %c15_i32_142 dim 1 : vector<8x256xf32>, i32 -> vector<8x256xf32>
    %cst_143 = arith.constant 0.000000e+00 : f32
    %312 = vector.shape_cast %49 : vector<1x256xi1> to vector<1x256xi1>
    %313 = vector.broadcast %312 : vector<1x256xi1> to vector<8x256xi1>
    %314 = vector.broadcast %cst_143 : f32 to vector<8x256xf32>
    %315 = arith.select %313, %311, %314 : vector<8x256xi1>, vector<8x256xf32>
    %c1_i32_144 = arith.constant 1 : i32
    %316 = tpu.dynamic_rotate %297 by %c1_i32_144 dim 1 : vector<8x256xf32>, i32 -> vector<8x256xf32>
    %cst_145 = arith.constant 0.000000e+00 : f32
    %317 = vector.shape_cast %51 : vector<1x256xi1> to vector<1x256xi1>
    %318 = vector.broadcast %317 : vector<1x256xi1> to vector<8x256xi1>
    %319 = vector.broadcast %cst_145 : f32 to vector<8x256xf32>
    %320 = arith.select %318, %316, %319 : vector<8x256xi1>, vector<8x256xf32>
    %c255_i32_146 = arith.constant 255 : i32
    %321 = tpu.dynamic_rotate %297 by %c255_i32_146 dim 1 : vector<8x256xf32>, i32 -> vector<8x256xf32>
    %cst_147 = arith.constant 0.000000e+00 : f32
    %322 = vector.shape_cast %53 : vector<1x256xi1> to vector<1x256xi1>
    %323 = vector.broadcast %322 : vector<1x256xi1> to vector<8x256xi1>
    %324 = vector.broadcast %cst_147 : f32 to vector<8x256xf32>
    %325 = arith.select %323, %321, %324 : vector<8x256xi1>, vector<8x256xf32>
    %c241_i32_148 = arith.constant 241 : i32
    %326 = tpu.dynamic_rotate %297 by %c241_i32_148 dim 1 : vector<8x256xf32>, i32 -> vector<8x256xf32>
    %cst_149 = arith.constant 0.000000e+00 : f32
    %327 = vector.shape_cast %58 : vector<1x256xi1> to vector<1x256xi1>
    %328 = vector.broadcast %327 : vector<1x256xi1> to vector<8x256xi1>
    %329 = vector.broadcast %cst_149 : f32 to vector<8x256xf32>
    %330 = arith.select %328, %326, %329 : vector<8x256xi1>, vector<8x256xf32>
    %c240_i32_150 = arith.constant 240 : i32
    %331 = tpu.dynamic_rotate %297 by %c240_i32_150 dim 1 : vector<8x256xf32>, i32 -> vector<8x256xf32>
    %cst_151 = arith.constant 0.000000e+00 : f32
    %332 = vector.shape_cast %60 : vector<1x256xi1> to vector<1x256xi1>
    %333 = vector.broadcast %332 : vector<1x256xi1> to vector<8x256xi1>
    %334 = vector.broadcast %cst_151 : f32 to vector<8x256xf32>
    %335 = arith.select %333, %331, %334 : vector<8x256xi1>, vector<8x256xf32>
    %c239_i32_152 = arith.constant 239 : i32
    %336 = tpu.dynamic_rotate %297 by %c239_i32_152 dim 1 : vector<8x256xf32>, i32 -> vector<8x256xf32>
    %cst_153 = arith.constant 0.000000e+00 : f32
    %337 = vector.shape_cast %65 : vector<1x256xi1> to vector<1x256xi1>
    %338 = vector.broadcast %337 : vector<1x256xi1> to vector<8x256xi1>
    %339 = vector.broadcast %cst_153 : f32 to vector<8x256xf32>
    %340 = arith.select %338, %336, %339 : vector<8x256xi1>, vector<8x256xf32>
    %341 = tpu.concatenate %305, %310, %315, %320, %297, %325, %330, %335, %340 in 0 : vector<8x256xf32>, vector<8x256xf32>, vector<8x256xf32>, vector<8x256xf32>, vector<8x256xf32>, vector<8x256xf32>, vector<8x256xf32>, vector<8x256xf32>, vector<8x256xf32> -> vector<72x256xf32>
    %cst_154 = arith.constant dense<0.000000e+00> : vector<4x256xf32>
    %342 = tpu.matmul %298, %341, %cst_154 {dimension_numbers = #tpu.dot_dimension_numbers<[1], [0], [0], [1], [0, 0, 1, 1], [], []>} : vector<4x72xf32>, vector<72x256xf32>, vector<4x256xf32> -> vector<4x256xf32>
    %343 = vector.shape_cast %342 : vector<4x256xf32> to vector<1x4x256xf32>
    %cst_155 = arith.constant dense<0.000000e+00> : vector<1xf32>
    %344 = vector.multi_reduction <add>, %343, %cst_155 [1, 2] : vector<1x4x256xf32> to vector<1xf32>
    %345 = vector.shape_cast %344 : vector<1xf32> to vector<1x1x1xf32>
    %346 = vector.extract %345[0, 0, 0] : f32 from vector<1x1x1xf32>
    %cst_156 = arith.constant 9.765625E-4 : f32
    %347 = arith.mulf %346, %cst_156 : f32
    %348 = arith.mulf %342, %342 : vector<4x256xf32>
    %349 = vector.shape_cast %348 : vector<4x256xf32> to vector<1x4x256xf32>
    %cst_157 = arith.constant dense<0.000000e+00> : vector<1xf32>
    %350 = vector.multi_reduction <add>, %349, %cst_157 [1, 2] : vector<1x4x256xf32> to vector<1xf32>
    %351 = vector.shape_cast %350 : vector<1xf32> to vector<1x1x1xf32>
    %352 = vector.extract %351[0, 0, 0] : f32 from vector<1x1x1xf32>
    %cst_158 = arith.constant 9.765625E-4 : f32
    %353 = arith.mulf %352, %cst_158 : f32
    %354 = arith.mulf %347, %347 : f32
    %355 = arith.subf %353, %354 : f32
    %cst_159 = arith.constant 9.99999974E-6 : f32
    %356 = arith.addf %355, %cst_159 : f32
    %357 = math.rsqrt %356 : f32
    %358 = vector.broadcast %357 : f32 to vector<4x1xf32>
    %359 = arith.mulf %299, %358 : vector<4x1xf32>
    %360 = vector.broadcast %347 : f32 to vector<4x1xf32>
    %361 = arith.mulf %360, %359 : vector<4x1xf32>
    %362 = arith.subf %300, %361 : vector<4x1xf32>
    %363 = vector.broadcast %359 : vector<4x1xf32> to vector<4x256xf32>
    %364 = arith.mulf %342, %363 : vector<4x256xf32>
    %365 = vector.broadcast %362 : vector<4x1xf32> to vector<4x256xf32>
    %366 = arith.addf %364, %365 : vector<4x256xf32>
    %c0_160 = arith.constant 0 : index
    %c0_161 = arith.constant 0 : index
    %c0_162 = arith.constant 0 : index
    %367 = vector.load %arg18[%c0_160, %c0_161, %c0_162] : memref<1x4x1xf32, #tpu.memory_space<vmem>>, vector<1x4x1xf32>
    %368 = vector.shape_cast %367 : vector<1x4x1xf32> to vector<4x1xf32>
    %369 = vector.broadcast %368 : vector<4x1xf32> to vector<4x256xf32>
    %370 = arith.addf %366, %369 : vector<4x256xf32>
    %c0_163 = arith.constant 0 : index
    %c0_164 = arith.constant 0 : index
    %c0_165 = arith.constant 0 : index
    %371 = vector.load %arg19[%c0_163, %c0_164, %c0_165] : memref<1x4x256xf32, #tpu.memory_space<vmem>>, vector<1x4x256xf32>
    %372 = vector.shape_cast %371 : vector<1x4x256xf32> to vector<4x256xf32>
    %373 = vector.shape_cast %370 : vector<4x256xf32> to vector<1x4x256xf32>
    tpu.vector_store %arg19[%c0_163, %c0_164, %c0_165], %373 {strides = array<i32>} : memref<1x4x256xf32, #tpu.memory_space<vmem>>, vector<1x4x256xf32>,
    return
  }
  func.func @transform_0(%arg0: i32) -> (i32, i32, i32) {
    %c0_i32 = arith.constant 0 : i32
    %c0_i32_0 = arith.constant 0 : i32
    %c0_i32_1 = arith.constant 0 : i32
    return %arg0, %c0_i32, %c0_i32_0 : i32, i32, i32
  }
  func.func @transform_1(%arg0: i32) -> (i32, i32, i32) {
    %c0_i32 = arith.constant 0 : i32
    %c0_i32_0 = arith.constant 0 : i32
    %c0_i32_1 = arith.constant 0 : i32
    %c0_i32_2 = arith.constant 0 : i32
    return %c0_i32, %c0_i32_0, %c0_i32_1 : i32, i32, i32
  }
  func.func @transform_2(%arg0: i32) -> (i32, i32) {
    %c0_i32 = arith.constant 0 : i32
    %c0_i32_0 = arith.constant 0 : i32
    %c0_i32_1 = arith.constant 0 : i32
    return %c0_i32, %c0_i32_0 : i32, i32
  }
  func.func @transform_3(%arg0: i32) -> (i32, i32, i32) {
    %c0_i32 = arith.constant 0 : i32
    %c0_i32_0 = arith.constant 0 : i32
    %c0_i32_1 = arith.constant 0 : i32
    %c0_i32_2 = arith.constant 0 : i32
    return %c0_i32, %c0_i32_0, %c0_i32_1 : i32, i32, i32
  }
  func.func @transform_4(%arg0: i32) -> (i32, i32, i32) {
    %c0_i32 = arith.constant 0 : i32
    %c0_i32_0 = arith.constant 0 : i32
    %c0_i32_1 = arith.constant 0 : i32
    return %arg0, %c0_i32, %c0_i32_0 : i32, i32, i32
  }
  func.func @transform_5(%arg0: i32) -> (i32, i32) {
    %c0_i32 = arith.constant 0 : i32
    %c0_i32_0 = arith.constant 0 : i32
    %c0_i32_1 = arith.constant 0 : i32
    return %c0_i32, %c0_i32_0 : i32, i32
  }
  func.func @transform_6(%arg0: i32) -> (i32, i32) {
    %c0_i32 = arith.constant 0 : i32
    %c0_i32_0 = arith.constant 0 : i32
    %c0_i32_1 = arith.constant 0 : i32
    return %c0_i32, %c0_i32_0 : i32, i32
  }
  func.func @transform_7(%arg0: i32) -> (i32, i32) {
    %c0_i32 = arith.constant 0 : i32
    %c0_i32_0 = arith.constant 0 : i32
    %c0_i32_1 = arith.constant 0 : i32
    return %c0_i32, %c0_i32_0 : i32, i32
  }
  func.func @transform_8(%arg0: i32) -> (i32, i32) {
    %c0_i32 = arith.constant 0 : i32
    %c0_i32_0 = arith.constant 0 : i32
    %c0_i32_1 = arith.constant 0 : i32
    return %c0_i32, %c0_i32_0 : i32, i32
  }
  func.func @transform_9(%arg0: i32) -> (i32, i32) {
    %c0_i32 = arith.constant 0 : i32
    %c0_i32_0 = arith.constant 0 : i32
    %c0_i32_1 = arith.constant 0 : i32
    return %c0_i32, %c0_i32_0 : i32, i32
  }
  func.func @transform_10(%arg0: i32) -> (i32, i32) {
    %c0_i32 = arith.constant 0 : i32
    %c0_i32_0 = arith.constant 0 : i32
    %c0_i32_1 = arith.constant 0 : i32
    return %c0_i32, %c0_i32_0 : i32, i32
  }
  func.func @transform_11(%arg0: i32) -> (i32, i32) {
    %c0_i32 = arith.constant 0 : i32
    %c0_i32_0 = arith.constant 0 : i32
    %c0_i32_1 = arith.constant 0 : i32
    return %c0_i32, %c0_i32_0 : i32, i32
  }
  func.func @transform_12(%arg0: i32) -> (i32, i32) {
    %c0_i32 = arith.constant 0 : i32
    %c0_i32_0 = arith.constant 0 : i32
    %c0_i32_1 = arith.constant 0 : i32
    return %c0_i32, %c0_i32_0 : i32, i32
  }
  func.func @transform_13(%arg0: i32) -> (i32, i32) {
    %c0_i32 = arith.constant 0 : i32
    %c0_i32_0 = arith.constant 0 : i32
    %c0_i32_1 = arith.constant 0 : i32
    return %c0_i32, %c0_i32_0 : i32, i32
  }
  func.func @transform_14(%arg0: i32) -> (i32, i32) {
    %c0_i32 = arith.constant 0 : i32
    %c0_i32_0 = arith.constant 0 : i32
    %c0_i32_1 = arith.constant 0 : i32
    return %c0_i32, %c0_i32_0 : i32, i32
  }
  func.func @transform_15(%arg0: i32) -> (i32, i32) {
    %c0_i32 = arith.constant 0 : i32
    %c0_i32_0 = arith.constant 0 : i32
    %c0_i32_1 = arith.constant 0 : i32
    return %c0_i32, %c0_i32_0 : i32, i32
  }
  func.func @transform_16(%arg0: i32) -> (i32, i32) {
    %c0_i32 = arith.constant 0 : i32
    %c0_i32_0 = arith.constant 0 : i32
    %c0_i32_1 = arith.constant 0 : i32
    return %c0_i32, %c0_i32_0 : i32, i32
  }
  func.func @transform_17(%arg0: i32) -> (i32, i32, i32) {
    %c0_i32 = arith.constant 0 : i32
    %c0_i32_0 = arith.constant 0 : i32
    %c0_i32_1 = arith.constant 0 : i32
    return %arg0, %c0_i32, %c0_i32_0 : i32, i32, i32
  }
  func.func @transform_18(%arg0: i32) -> (i32, i32, i32) {
    %c0_i32 = arith.constant 0 : i32
    %c0_i32_0 = arith.constant 0 : i32
    %c0_i32_1 = arith.constant 0 : i32
    return %arg0, %c0_i32, %c0_i32_0 : i32, i32, i32
  }
}

</mosaic_0001>

<llo_original>
// kernel: up_forward.1
$region0: #{up_forward.1}
  #allocation0 [shape = 'u32[]', space=smem, size = 0x4, offset = 0x4, fixed_abs, tag = 'smem constant byte address 0x4 - core index']
  #allocation1 [shape = 'u32[144,128]{1,0:T(1,128)}', space=vmem, size = 0x12000, scoped, tag = 'internal scratch']
  %s0 = inlined_call_operand.vmem [shape: f32[2,4,64], index: 0, kind: input, shape index: {}]
  %s1 = inlined_call_operand.vmem [shape: f32[4,4,4], index: 1, kind: input, shape index: {}]
  %s2 = inlined_call_operand.vmem [shape: f32[4,1], index: 2, kind: input, shape index: {}]
  %s3 = inlined_call_operand.hbm [shape: f32[4,64,256], index: 3, kind: input, shape index: {}]
  %s4 = inlined_call_operand.vmem [shape: f32[2,4,256], index: 4, kind: input, shape index: {}]
  %s5 = inlined_call_operand.vmem [shape: f32[8,72], index: 5, kind: input, shape index: {}]
  %s6 = inlined_call_operand.vmem [shape: f32[8,1], index: 6, kind: input, shape index: {}]
  %s7 = inlined_call_operand.vmem [shape: f32[8,1], index: 7, kind: input, shape index: {}]
  %s8 = inlined_call_operand.vmem [shape: f32[8,72], index: 8, kind: input, shape index: {}]
  %s9 = inlined_call_operand.vmem [shape: f32[8,1], index: 9, kind: input, shape index: {}]
  %s10 = inlined_call_operand.vmem [shape: f32[8,1], index: 10, kind: input, shape index: {}]
  %s11 = inlined_call_operand.vmem [shape: f32[8,72], index: 11, kind: input, shape index: {}]
  %s12 = inlined_call_operand.vmem [shape: f32[8,1], index: 12, kind: input, shape index: {}]
  %s13 = inlined_call_operand.vmem [shape: f32[8,1], index: 13, kind: input, shape index: {}]
  %s14 = inlined_call_operand.vmem [shape: f32[4,72], index: 14, kind: input, shape index: {}]
  %s15 = inlined_call_operand.vmem [shape: f32[4,1], index: 15, kind: input, shape index: {}]
  %s16 = inlined_call_operand.vmem [shape: f32[4,1], index: 16, kind: input, shape index: {}]
  %s17 = inlined_call_operand.vmem [shape: f32[2,4,1], index: 17, kind: input, shape index: {}]
  %s18 = inlined_call_operand.vmem [shape: f32[2,4,256], index: 18, kind: output, shape index: {}]
  %s19 = sld [smem:[#allocation0]]
  $region109: #{up_forward.1} parent=0
    _
  %s21 = ssub.s32 1, %s19
  %s22 = scalar_select 0, %s21, %s19
  $region1: #{up_forward.1} parent=0
    #allocation2 [shape = 'u8[262144]{0}', space=vmem, size = 0x40000, scoped, tag = 'input window, operand 3, single buffered']
    #allocation3 [shape = 's32[2]{0}', space=sflag, size = 0x8, scoped, tag = 'scoped memory for up_forward.1']
    %23 = vsyncpa [#allocation3], 0
    loop: start=0, step=1, limit=4
    $region2: #{up_forward.1} parent=1 // loop_pre_header
      _
    $region3: #{up_forward.1} parent=1 // loop_header
      %s25 = sphi 0, %s29
      %p26 = scmp.ge.s32.totalorder %s25, 4
      %s35 = sphi 0, %s37
      %s38 = sphi 0, %s35
      %s39 = sphi 0, %s38
      %s55 = sphi 0, %s39
      %s59 = sphi 0, %s59
      %s61 = sphi 0, %s59
      %s62 = sphi 0, %s61
      %s76 = sphi 0, %s62
      %s80 = sphi 0, %s80
      %s82 = sphi 0, %s80
      %s83 = sphi 0, %s82
      %s97 = sphi 0, %s83
      %s101 = sphi 0, %s101
      %s103 = sphi 0, %s101
      %s104 = sphi 0, %s103
      %s118 = sphi 0, %s104
      %s124 = sphi 0, %s126
      %s127 = sphi 0, %s124
      %s128 = sphi 0, %s127
      %s144 = sphi 0, %s128
      %s148 = sphi 0, %s148
      %s150 = sphi 0, %s148
      %s151 = sphi 0, %s150
      %s165 = sphi 0, %s151
      %s169 = sphi 0, %s169
      %s171 = sphi 0, %s169
      %s172 = sphi 0, %s171
      %s186 = sphi 0, %s172
      %s190 = sphi 0, %s190
      %s192 = sphi 0, %s190
      %s193 = sphi 0, %s192
      %s207 = sphi 0, %s193
      %s211 = sphi 0, %s211
      %s213 = sphi 0, %s211
      %s214 = sphi 0, %s213
      %s228 = sphi 0, %s214
      %s232 = sphi 0, %s232
      %s234 = sphi 0, %s232
      %s235 = sphi 0, %s234
      %s249 = sphi 0, %s235
      %s253 = sphi 0, %s253
      %s255 = sphi 0, %s253
      %s256 = sphi 0, %s255
      %s270 = sphi 0, %s256
      %s274 = sphi 0, %s274
      %s276 = sphi 0, %s274
      %s277 = sphi 0, %s276
      %s291 = sphi 0, %s277
      %s295 = sphi 0, %s295
      %s297 = sphi 0, %s295
      %s298 = sphi 0, %s297
      %s312 = sphi 0, %s298
      %s316 = sphi 0, %s316
      %s318 = sphi 0, %s316
      %s319 = sphi 0, %s318
      %s333 = sphi 0, %s319
      %s337 = sphi 0, %s337
      %s339 = sphi 0, %s337
      %s340 = sphi 0, %s339
      %s354 = sphi 0, %s340
      %s358 = sphi 0, %s358
      %s360 = sphi 0, %s358
      %s361 = sphi 0, %s360
      %s375 = sphi 0, %s361
      %s379 = sphi 0, %s379
      %s381 = sphi 0, %s379
      %s382 = sphi 0, %s381
      %s396 = sphi 0, %s382
      %s402 = sphi 0, %s404
      %s405 = sphi 0, %s402
      %s406 = sphi 0, %s405
      %s422 = sphi 0, %s406
      %s428 = sphi 0, %s430
      %s431 = sphi 0, %s428
      %s432 = sphi 0, %s431
      %s448 = sphi 0, %s432
    $region4: #{up_forward.1} parent=1 // loop_header_branch
      %28 = sbr.rel (%p26) target = $region8
    $region5: #{up_forward.1} parent=1 // loop_body
      %s30 = ssub.s32 %s25, 1
      %s31 = ssub.s32 %s25, 2
      %s32 = sadd.s32 %s25, 1
      %s33 = ssub.s32 %s25, %s32
      %p34 = scmp.eq.s32.totalorder %s33, 0
      %s36 = sadd.s32 %s35, 1
      %s37 = scalar_select %p34, %s35, %s36
      %p40 = pneg %p34
      %p41 = scmp.eq.s32.totalorder %s25, 1
      %p42 = por %p40, %p41
      %p43 = scmp.ne.s32.totalorder %s35, %s38
      %p44 = scmp.eq.s32.totalorder %s25, 0
      %p45 = por %p43, %p44
      %p46 = scmp.ne.s32.totalorder %s35, %s38
      %p47 = scmp.eq.s32.totalorder %s30, 1
      %p48 = por %p46, %p47
      %p49 = scmp.ne.s32.totalorder %s38, %s39
      %p50 = scmp.eq.s32.totalorder %s30, 0
      %p51 = por %p49, %p50
      %p52 = scmp.ne.s32.totalorder %s38, %s39
      %p53 = scmp.eq.s32.totalorder %s31, 1
      %p54 = por %p52, %p53
      %p56 = scmp.ne.s32.totalorder %s39, %s55
      %p57 = scmp.eq.s32.totalorder %s31, 0
      %p58 = por %p56, %p57
      %s60 = sadd.s32 %s59, 1
      %p63 = scmp.eq.s32.totalorder %s25, 1
      %p64 = scmp.ne.s32.totalorder %s59, %s61
      %p65 = scmp.eq.s32.totalorder %s25, 0
      %p66 = por %p64, %p65
      %p67 = scmp.ne.s32.totalorder %s59, %s61
      %p68 = scmp.eq.s32.totalorder %s30, 1
      %p69 = por %p67, %p68
      %p70 = scmp.ne.s32.totalorder %s61, %s62
      %p71 = scmp.eq.s32.totalorder %s30, 0
      %p72 = por %p70, %p71
      %p73 = scmp.ne.s32.totalorder %s61, %s62
      %p74 = scmp.eq.s32.totalorder %s31, 1
      %p75 = por %p73, %p74
      %p77 = scmp.ne.s32.totalorder %s62, %s76
      %p78 = scmp.eq.s32.totalorder %s31, 0
      %p79 = por %p77, %p78
      %s81 = sadd.s32 %s80, 1
      %p84 = scmp.eq.s32.totalorder %s25, 1
      %p85 = scmp.ne.s32.totalorder %s80, %s82
      %p86 = scmp.eq.s32.totalorder %s25, 0
      %p87 = por %p85, %p86
      %p88 = scmp.ne.s32.totalorder %s80, %s82
      %p89 = scmp.eq.s32.totalorder %s30, 1
      %p90 = por %p88, %p89
      %p91 = scmp.ne.s32.totalorder %s82, %s83
      %p92 = scmp.eq.s32.totalorder %s30, 0
      %p93 = por %p91, %p92
      %p94 = scmp.ne.s32.totalorder %s82, %s83
      %p95 = scmp.eq.s32.totalorder %s31, 1
      %p96 = por %p94, %p95
      %p98 = scmp.ne.s32.totalorder %s83, %s97
      %p99 = scmp.eq.s32.totalorder %s31, 0
      %p100 = por %p98, %p99
      %s102 = sadd.s32 %s101, 1
      %p105 = scmp.eq.s32.totalorder %s25, 1
      %p106 = scmp.ne.s32.totalorder %s101, %s103
      %p107 = scmp.eq.s32.totalorder %s25, 0
      %p108 = por %p106, %p107
      %p109 = scmp.ne.s32.totalorder %s101, %s103
      %p110 = scmp.eq.s32.totalorder %s30, 1
      %p111 = por %p109, %p110
      %p112 = scmp.ne.s32.totalorder %s103, %s104
      %p113 = scmp.eq.s32.totalorder %s30, 0
      %p114 = por %p112, %p113
      %p115 = scmp.ne.s32.totalorder %s103, %s104
      %p116 = scmp.eq.s32.totalorder %s31, 1
      %p117 = por %p115, %p116
      %p119 = scmp.ne.s32.totalorder %s104, %s118
      %p120 = scmp.eq.s32.totalorder %s31, 0
      %p121 = por %p119, %p120
      %s122 = ssub.s32 %s25, %s32
      %p123 = scmp.eq.s32.totalorder %s122, 0
      %s125 = sadd.s32 %s124, 1
      %s126 = scalar_select %p123, %s124, %s125
      %p129 = pneg %p123
      %p130 = scmp.eq.s32.totalorder %s25, 1
      %p131 = por %p129, %p130
      %p132 = scmp.ne.s32.totalorder %s124, %s127
      %p133 = scmp.eq.s32.totalorder %s25, 0
      %p134 = por %p132, %p133
      %p135 = scmp.ne.s32.totalorder %s124, %s127
      %p136 = scmp.eq.s32.totalorder %s30, 1
      %p137 = por %p135, %p136
      %p138 = scmp.ne.s32.totalorder %s127, %s128
      %p139 = scmp.eq.s32.totalorder %s30, 0
      %p140 = por %p138, %p139
      %p141 = scmp.ne.s32.totalorder %s127, %s128
      %p142 = scmp.eq.s32.totalorder %s31, 1
      %p143 = por %p141, %p142
      %p145 = scmp.ne.s32.totalorder %s128, %s144
      %p146 = scmp.eq.s32.totalorder %s31, 0
      %p147 = por %p145, %p146
      %s149 = sadd.s32 %s148, 1
      %p152 = scmp.eq.s32.totalorder %s25, 1
      %p153 = scmp.ne.s32.totalorder %s148, %s150
      %p154 = scmp.eq.s32.totalorder %s25, 0
      %p155 = por %p153, %p154
      %p156 = scmp.ne.s32.totalorder %s148, %s150
      %p157 = scmp.eq.s32.totalorder %s30, 1
      %p158 = por %p156, %p157
      %p159 = scmp.ne.s32.totalorder %s150, %s151
      %p160 = scmp.eq.s32.totalorder %s30, 0
      %p161 = por %p159, %p160
      %p162 = scmp.ne.s32.totalorder %s150, %s151
      %p163 = scmp.eq.s32.totalorder %s31, 1
      %p164 = por %p162, %p163
      %p166 = scmp.ne.s32.totalorder %s151, %s165
      %p167 = scmp.eq.s32.totalorder %s31, 0
      %p168 = por %p166, %p167
      %s170 = sadd.s32 %s169, 1
      %p173 = scmp.eq.s32.totalorder %s25, 1
      %p174 = scmp.ne.s32.totalorder %s169, %s171
      %p175 = scmp.eq.s32.totalorder %s25, 0
      %p176 = por %p174, %p175
      %p177 = scmp.ne.s32.totalorder %s169, %s171
      %p178 = scmp.eq.s32.totalorder %s30, 1
      %p179 = por %p177, %p178
      %p180 = scmp.ne.s32.totalorder %s171, %s172
      %p181 = scmp.eq.s32.totalorder %s30, 0
      %p182 = por %p180, %p181
      %p183 = scmp.ne.s32.totalorder %s171, %s172
      %p184 = scmp.eq.s32.totalorder %s31, 1
      %p185 = por %p183, %p184
      %p187 = scmp.ne.s32.totalorder %s172, %s186
      %p188 = scmp.eq.s32.totalorder %s31, 0
      %p189 = por %p187, %p188
      %s191 = sadd.s32 %s190, 1
      %p194 = scmp.eq.s32.totalorder %s25, 1
      %p195 = scmp.ne.s32.totalorder %s190, %s192
      %p196 = scmp.eq.s32.totalorder %s25, 0
      %p197 = por %p195, %p196
      %p198 = scmp.ne.s32.totalorder %s190, %s192
      %p199 = scmp.eq.s32.totalorder %s30, 1
      %p200 = por %p198, %p199
      %p201 = scmp.ne.s32.totalorder %s192, %s193
      %p202 = scmp.eq.s32.totalorder %s30, 0
      %p203 = por %p201, %p202
      %p204 = scmp.ne.s32.totalorder %s192, %s193
      %p205 = scmp.eq.s32.totalorder %s31, 1
      %p206 = por %p204, %p205
      %p208 = scmp.ne.s32.totalorder %s193, %s207
      %p209 = scmp.eq.s32.totalorder %s31, 0
      %p210 = por %p208, %p209
      %s212 = sadd.s32 %s211, 1
      %p215 = scmp.eq.s32.totalorder %s25, 1
      %p216 = scmp.ne.s32.totalorder %s211, %s213
      %p217 = scmp.eq.s32.totalorder %s25, 0
      %p218 = por %p216, %p217
      %p219 = scmp.ne.s32.totalorder %s211, %s213
      %p220 = scmp.eq.s32.totalorder %s30, 1
      %p221 = por %p219, %p220
      %p222 = scmp.ne.s32.totalorder %s213, %s214
      %p223 = scmp.eq.s32.totalorder %s30, 0
      %p224 = por %p222, %p223
      %p225 = scmp.ne.s32.totalorder %s213, %s214
      %p226 = scmp.eq.s32.totalorder %s31, 1
      %p227 = por %p225, %p226
      %p229 = scmp.ne.s32.totalorder %s214, %s228
      %p230 = scmp.eq.s32.totalorder %s31, 0
      %p231 = por %p229, %p230
      %s233 = sadd.s32 %s232, 1
      %p236 = scmp.eq.s32.totalorder %s25, 1
      %p237 = scmp.ne.s32.totalorder %s232, %s234
      %p238 = scmp.eq.s32.totalorder %s25, 0
      %p239 = por %p237, %p238
      %p240 = scmp.ne.s32.totalorder %s232, %s234
      %p241 = scmp.eq.s32.totalorder %s30, 1
      %p242 = por %p240, %p241
      %p243 = scmp.ne.s32.totalorder %s234, %s235
      %p244 = scmp.eq.s32.totalorder %s30, 0
      %p245 = por %p243, %p244
      %p246 = scmp.ne.s32.totalorder %s234, %s235
      %p247 = scmp.eq.s32.totalorder %s31, 1
      %p248 = por %p246, %p247
      %p250 = scmp.ne.s32.totalorder %s235, %s249
      %p251 = scmp.eq.s32.totalorder %s31, 0
      %p252 = por %p250, %p251
      %s254 = sadd.s32 %s253, 1
      %p257 = scmp.eq.s32.totalorder %s25, 1
      %p258 = scmp.ne.s32.totalorder %s253, %s255
      %p259 = scmp.eq.s32.totalorder %s25, 0
      %p260 = por %p258, %p259
      %p261 = scmp.ne.s32.totalorder %s253, %s255
      %p262 = scmp.eq.s32.totalorder %s30, 1
      %p263 = por %p261, %p262
      %p264 = scmp.ne.s32.totalorder %s255, %s256
      %p265 = scmp.eq.s32.totalorder %s30, 0
      %p266 = por %p264, %p265
      %p267 = scmp.ne.s32.totalorder %s255, %s256
      %p268 = scmp.eq.s32.totalorder %s31, 1
      %p269 = por %p267, %p268
      %p271 = scmp.ne.s32.totalorder %s256, %s270
      %p272 = scmp.eq.s32.totalorder %s31, 0
      %p273 = por %p271, %p272
      %s275 = sadd.s32 %s274, 1
      %p278 = scmp.eq.s32.totalorder %s25, 1
      %p279 = scmp.ne.s32.totalorder %s274, %s276
      %p280 = scmp.eq.s32.totalorder %s25, 0
      %p281 = por %p279, %p280
      %p282 = scmp.ne.s32.totalorder %s274, %s276
      %p283 = scmp.eq.s32.totalorder %s30, 1
      %p284 = por %p282, %p283
      %p285 = scmp.ne.s32.totalorder %s276, %s277
      %p286 = scmp.eq.s32.totalorder %s30, 0
      %p287 = por %p285, %p286
      %p288 = scmp.ne.s32.totalorder %s276, %s277
      %p289 = scmp.eq.s32.totalorder %s31, 1
      %p290 = por %p288, %p289
      %p292 = scmp.ne.s32.totalorder %s277, %s291
      %p293 = scmp.eq.s32.totalorder %s31, 0
      %p294 = por %p292, %p293
      %s296 = sadd.s32 %s295, 1
      %p299 = scmp.eq.s32.totalorder %s25, 1
      %p300 = scmp.ne.s32.totalorder %s295, %s297
      %p301 = scmp.eq.s32.totalorder %s25, 0
      %p302 = por %p300, %p301
      %p303 = scmp.ne.s32.totalorder %s295, %s297
      %p304 = scmp.eq.s32.totalorder %s30, 1
      %p305 = por %p303, %p304
      %p306 = scmp.ne.s32.totalorder %s297, %s298
      %p307 = scmp.eq.s32.totalorder %s30, 0
      %p308 = por %p306, %p307
      %p309 = scmp.ne.s32.totalorder %s297, %s298
      %p310 = scmp.eq.s32.totalorder %s31, 1
      %p311 = por %p309, %p310
      %p313 = scmp.ne.s32.totalorder %s298, %s312
      %p314 = scmp.eq.s32.totalorder %s31, 0
      %p315 = por %p313, %p314
      %s317 = sadd.s32 %s316, 1
      %p320 = scmp.eq.s32.totalorder %s25, 1
      %p321 = scmp.ne.s32.totalorder %s316, %s318
      %p322 = scmp.eq.s32.totalorder %s25, 0
      %p323 = por %p321, %p322
      %p324 = scmp.ne.s32.totalorder %s316, %s318
      %p325 = scmp.eq.s32.totalorder %s30, 1
      %p326 = por %p324, %p325
      %p327 = scmp.ne.s32.totalorder %s318, %s319
      %p328 = scmp.eq.s32.totalorder %s30, 0
      %p329 = por %p327, %p328
      %p330 = scmp.ne.s32.totalorder %s318, %s319
      %p331 = scmp.eq.s32.totalorder %s31, 1
      %p332 = por %p330, %p331
      %p334 = scmp.ne.s32.totalorder %s319, %s333
      %p335 = scmp.eq.s32.totalorder %s31, 0
      %p336 = por %p334, %p335
      %s338 = sadd.s32 %s337, 1
      %p341 = scmp.eq.s32.totalorder %s25, 1
      %p342 = scmp.ne.s32.totalorder %s337, %s339
      %p343 = scmp.eq.s32.totalorder %s25, 0
      %p344 = por %p342, %p343
      %p345 = scmp.ne.s32.totalorder %s337, %s339
      %p346 = scmp.eq.s32.totalorder %s30, 1
      %p347 = por %p345, %p346
      %p348 = scmp.ne.s32.totalorder %s339, %s340
      %p349 = scmp.eq.s32.totalorder %s30, 0
      %p350 = por %p348, %p349
      %p351 = scmp.ne.s32.totalorder %s339, %s340
      %p352 = scmp.eq.s32.totalorder %s31, 1
      %p353 = por %p351, %p352
      %p355 = scmp.ne.s32.totalorder %s340, %s354
      %p356 = scmp.eq.s32.totalorder %s31, 0
      %p357 = por %p355, %p356
      %s359 = sadd.s32 %s358, 1
      %p362 = scmp.eq.s32.totalorder %s25, 1
      %p363 = scmp.ne.s32.totalorder %s358, %s360
      %p364 = scmp.eq.s32.totalorder %s25, 0
      %p365 = por %p363, %p364
      %p366 = scmp.ne.s32.totalorder %s358, %s360
      %p367 = scmp.eq.s32.totalorder %s30, 1
      %p368 = por %p366, %p367
      %p369 = scmp.ne.s32.totalorder %s360, %s361
      %p370 = scmp.eq.s32.totalorder %s30, 0
      %p371 = por %p369, %p370
      %p372 = scmp.ne.s32.totalorder %s360, %s361
      %p373 = scmp.eq.s32.totalorder %s31, 1
      %p374 = por %p372, %p373
      %p376 = scmp.ne.s32.totalorder %s361, %s375
      %p377 = scmp.eq.s32.totalorder %s31, 0
      %p378 = por %p376, %p377
      %s380 = sadd.s32 %s379, 1
      %p383 = scmp.eq.s32.totalorder %s25, 1
      %p384 = scmp.ne.s32.totalorder %s379, %s381
      %p385 = scmp.eq.s32.totalorder %s25, 0
      %p386 = por %p384, %p385
      %p387 = scmp.ne.s32.totalorder %s379, %s381
      %p388 = scmp.eq.s32.totalorder %s30, 1
      %p389 = por %p387, %p388
      %p390 = scmp.ne.s32.totalorder %s381, %s382
      %p391 = scmp.eq.s32.totalorder %s30, 0
      %p392 = por %p390, %p391
      %p393 = scmp.ne.s32.totalorder %s381, %s382
      %p394 = scmp.eq.s32.totalorder %s31, 1
      %p395 = por %p393, %p394
      %p397 = scmp.ne.s32.totalorder %s382, %s396
      %p398 = scmp.eq.s32.totalorder %s31, 0
      %p399 = por %p397, %p398
      %s400 = ssub.s32 %s25, %s32
      %p401 = scmp.eq.s32.totalorder %s400, 0
      %s403 = sadd.s32 %s402, 1
      %s404 = scalar_select %p401, %s402, %s403
      %p407 = pneg %p401
      %p408 = scmp.eq.s32.totalorder %s25, 1
      %p409 = por %p407, %p408
      %p410 = scmp.ne.s32.totalorder %s402, %s405
      %p411 = scmp.eq.s32.totalorder %s25, 0
      %p412 = por %p410, %p411
      %p413 = scmp.ne.s32.totalorder %s402, %s405
      %p414 = scmp.eq.s32.totalorder %s30, 1
      %p415 = por %p413, %p414
      %p416 = scmp.ne.s32.totalorder %s405, %s406
      %p417 = scmp.eq.s32.totalorder %s30, 0
      %p418 = por %p416, %p417
      %p419 = scmp.ne.s32.totalorder %s405, %s406
      %p420 = scmp.eq.s32.totalorder %s31, 1
      %p421 = por %p419, %p420
      %p423 = scmp.ne.s32.totalorder %s406, %s422
      %p424 = scmp.eq.s32.totalorder %s31, 0
      %p425 = por %p423, %p424
      %s426 = ssub.s32 %s25, %s32
      %p427 = scmp.eq.s32.totalorder %s426, 0
      %s429 = sadd.s32 %s428, 1
      %s430 = scalar_select %p427, %s428, %s429
      %p433 = pneg %p427
      %p434 = scmp.eq.s32.totalorder %s25, 1
      %p435 = por %p433, %p434
      %p436 = scmp.ne.s32.totalorder %s428, %s431
      %p437 = scmp.eq.s32.totalorder %s25, 0
      %p438 = por %p436, %p437
      %p439 = scmp.ne.s32.totalorder %s428, %s431
      %p440 = scmp.eq.s32.totalorder %s30, 1
      %p441 = por %p439, %p440
      %p442 = scmp.ne.s32.totalorder %s431, %s432
      %p443 = scmp.eq.s32.totalorder %s30, 0
      %p444 = por %p442, %p443
      %p445 = scmp.ne.s32.totalorder %s431, %s432
      %p446 = scmp.eq.s32.totalorder %s31, 1
      %p447 = por %p445, %p446
      %p449 = scmp.ne.s32.totalorder %s432, %s448
      %p450 = scmp.eq.s32.totalorder %s31, 0
      %p451 = por %p449, %p450
      %p452 = scmp.le.s32.totalorder 1, %s25
      %p453 = scmp.lt.s32.totalorder %s25, 3
      %p454 = pnand %p452, %p453
      %p455 = pneg %p454
      // Predicated region
      $region9: #{up_forward.1} parent=5 // pred_check
        _
      $region10: #{up_forward.1} parent=5 // pred_check_branch
        %457 = sbr.rel (%p454) target = $region12
      $region11: #{up_forward.1} parent=5 // pred_region
        %s458 = ssub.s32 %s25, 1
        // Predicated region
        $region13: #{up_forward.1} parent=11 // pred_check
          %p459 = pneg %p72
        $region14: #{up_forward.1} parent=11 // pred_check_branch
          %461 = sbr.rel (%p459) target = $region16
        $region15: #{up_forward.1} parent=11 // pred_region
          _
        $region16: #{up_forward.1} parent=11 // pred_fallthru
          _
        // Predicated region
        $region17: #{up_forward.1} parent=11 // pred_check
          %p462 = pneg %p93
        $region18: #{up_forward.1} parent=11 // pred_check_branch
          %464 = sbr.rel (%p462) target = $region20
        $region19: #{up_forward.1} parent=11 // pred_region
          _
        $region20: #{up_forward.1} parent=11 // pred_fallthru
          _
        // Predicated region
        $region21: #{up_forward.1} parent=11 // pred_check
          %p465 = pneg %p114
        $region22: #{up_forward.1} parent=11 // pred_check_branch
          %467 = sbr.rel (%p465) target = $region24
        $region23: #{up_forward.1} parent=11 // pred_region
          %s469 = ssub.s32 8192, 8192
          %470 = vsyncadd [#allocation3], %s469
          %s471 = sshll.u32 [#allocation2], 4
          %s472 = int_to_ptr.vmem [resolvable:$true] %s471
          %477 = dma.hbm_to_vmem [thread:$0]  %s3, 8192, %s472, [#allocation3], 256, 256, 16
        $region24: #{up_forward.1} parent=11 // pred_fallthru
          _
        // Predicated region
        $region25: #{up_forward.1} parent=11 // pred_check
          %p478 = pneg %p161
        $region26: #{up_forward.1} parent=11 // pred_check_branch
          %480 = sbr.rel (%p478) target = $region28
        $region27: #{up_forward.1} parent=11 // pred_region
          _
        $region28: #{up_forward.1} parent=11 // pred_fallthru
          _
        // Predicated region
        $region29: #{up_forward.1} parent=11 // pred_check
          %p481 = pneg %p182
        $region30: #{up_forward.1} parent=11 // pred_check_branch
          %483 = sbr.rel (%p481) target = $region32
        $region31: #{up_forward.1} parent=11 // pred_region
          _
        $region32: #{up_forward.1} parent=11 // pred_fallthru
          _
        // Predicated region
        $region33: #{up_forward.1} parent=11 // pred_check
          %p484 = pneg %p203
        $region34: #{up_forward.1} parent=11 // pred_check_branch
          %486 = sbr.rel (%p484) target = $region36
        $region35: #{up_forward.1} parent=11 // pred_region
          _
        $region36: #{up_forward.1} parent=11 // pred_fallthru
          _
        // Predicated region
        $region37: #{up_forward.1} parent=11 // pred_check
          %p487 = pneg %p224
        $region38: #{up_forward.1} parent=11 // pred_check_branch
          %489 = sbr.rel (%p487) target = $region40
        $region39: #{up_forward.1} parent=11 // pred_region
          _
        $region40: #{up_forward.1} parent=11 // pred_fallthru
          _
        // Predicated region
        $region41: #{up_forward.1} parent=11 // pred_check
          %p490 = pneg %p245
        $region42: #{up_forward.1} parent=11 // pred_check_branch
          %492 = sbr.rel (%p490) target = $region44
        $region43: #{up_forward.1} parent=11 // pred_region
          _
        $region44: #{up_forward.1} parent=11 // pred_fallthru
          _
        // Predicated region
        $region45: #{up_forward.1} parent=11 // pred_check
          %p493 = pneg %p266
        $region46: #{up_forward.1} parent=11 // pred_check_branch
          %495 = sbr.rel (%p493) target = $region48
        $region47: #{up_forward.1} parent=11 // pred_region
          _
        $region48: #{up_forward.1} parent=11 // pred_fallthru
          _
        // Predicated region
        $region49: #{up_forward.1} parent=11 // pred_check
          %p496 = pneg %p287
        $region50: #{up_forward.1} parent=11 // pred_check_branch
          %498 = sbr.rel (%p496) target = $region52
        $region51: #{up_forward.1} parent=11 // pred_region
          _
        $region52: #{up_forward.1} parent=11 // pred_fallthru
          _
        // Predicated region
        $region53: #{up_forward.1} parent=11 // pred_check
          %p499 = pneg %p308
        $region54: #{up_forward.1} parent=11 // pred_check_branch
          %501 = sbr.rel (%p499) target = $region56
        $region55: #{up_forward.1} parent=11 // pred_region
          _
        $region56: #{up_forward.1} parent=11 // pred_fallthru
          _
        // Predicated region
        $region57: #{up_forward.1} parent=11 // pred_check
          %p502 = pneg %p329
        $region58: #{up_forward.1} parent=11 // pred_check_branch
          %504 = sbr.rel (%p502) target = $region60
        $region59: #{up_forward.1} parent=11 // pred_region
          _
        $region60: #{up_forward.1} parent=11 // pred_fallthru
          _
        // Predicated region
        $region61: #{up_forward.1} parent=11 // pred_check
          %p505 = pneg %p350
        $region62: #{up_forward.1} parent=11 // pred_check_branch
          %507 = sbr.rel (%p505) target = $region64
        $region63: #{up_forward.1} parent=11 // pred_region
          _
        $region64: #{up_forward.1} parent=11 // pred_fallthru
          _
        // Predicated region
        $region65: #{up_forward.1} parent=11 // pred_check
          %p508 = pneg %p371
        $region66: #{up_forward.1} parent=11 // pred_check_branch
          %510 = sbr.rel (%p508) target = $region68
        $region67: #{up_forward.1} parent=11 // pred_region
          _
        $region68: #{up_forward.1} parent=11 // pred_fallthru
          _
        // Predicated region
        $region69: #{up_forward.1} parent=11 // pred_check
          %p511 = pneg %p392
        $region70: #{up_forward.1} parent=11 // pred_check_branch
          %513 = sbr.rel (%p511) target = $region72
        $region71: #{up_forward.1} parent=11 // pred_region
          _
        $region72: #{up_forward.1} parent=11 // pred_fallthru
          _
      $region12: #{up_forward.1} parent=5 // pred_fallthru
        _
      %p514 = scmp.lt.s32.totalorder %s25, 2
      // Predicated region
      $region73: #{up_forward.1} parent=5 // pred_check
        %p515 = pneg %p514
      $region74: #{up_forward.1} parent=5 // pred_check_branch
        %517 = sbr.rel (%p515) target = $region76
      $region75: #{up_forward.1} parent=5 // pred_region
        // Predicated region
        $region77: #{up_forward.1} parent=75 // pred_check
          %p518 = pneg %p45
        $region78: #{up_forward.1} parent=75 // pred_check_branch
          %520 = sbr.rel (%p518) target = $region80
        $region79: #{up_forward.1} parent=75 // pred_region
          %p521 = scmp.lt.s32.totalorder %s25, 1
          %s522 = scalar_select %p521, %s25, 1
          %s523 = smul.addr %s522, 4
          %s524 = scalar_lea.vmem %s0, %s523
        $region80: #{up_forward.1} parent=75 // pred_fallthru
          _
        // Predicated region
        $region81: #{up_forward.1} parent=75 // pred_check
          %p525 = pneg %p134
        $region82: #{up_forward.1} parent=75 // pred_check_branch
          %527 = sbr.rel (%p525) target = $region84
        $region83: #{up_forward.1} parent=75 // pred_region
          %p528 = scmp.lt.s32.totalorder %s25, 1
          %s529 = scalar_select %p528, %s25, 1
          %s530 = smul.addr %s529, 2
          %s531 = smul.addr %s530, 4
          %s532 = scalar_lea.vmem %s4, %s531
        $region84: #{up_forward.1} parent=75 // pred_fallthru
          _
        // Predicated region
        $region85: #{up_forward.1} parent=75 // pred_check
          %p533 = pneg %p412
        $region86: #{up_forward.1} parent=75 // pred_check_branch
          %535 = sbr.rel (%p533) target = $region88
        $region87: #{up_forward.1} parent=75 // pred_region
          %p536 = scmp.lt.s32.totalorder %s25, 1
          %s537 = scalar_select %p536, %s25, 1
          %s538 = smul.addr %s537, 4
          %s539 = scalar_lea.vmem %s17, %s538
        $region88: #{up_forward.1} parent=75 // pred_fallthru
          _
      $region76: #{up_forward.1} parent=5 // pred_fallthru
        _
      %p540 = scmp.le.s32.totalorder 1, %s25
      %p541 = scmp.lt.s32.totalorder %s25, 3
      %p542 = pnand %p540, %p541
      %p543 = pneg %p542
      // Predicated region
      $region89: #{up_forward.1} parent=5 // pred_check
        _
      $region90: #{up_forward.1} parent=5 // pred_check_branch
        %545 = sbr.rel (%p542) target = $region92
      $region91: #{up_forward.1} parent=5 // pred_region
        %s546 = ssub.s32 %s25, 1
        // Predicated region
        $region93: #{up_forward.1} parent=91 // pred_check
          %p547 = pneg %p114
        $region94: #{up_forward.1} parent=91 // pred_check_branch
          %549 = sbr.rel (%p547) target = $region96
        $region95: #{up_forward.1} parent=91 // pred_region
          %550 = dma.done [#allocation3], 8192
        $region96: #{up_forward.1} parent=91 // pred_fallthru
          _
        %p551 = scmp.lt.s32.totalorder %s30, 1
        %s552 = scalar_select %p551, %s30, 1
        %s553 = smul.addr %s552, 4
        %s554 = scalar_lea.vmem %s0, %s553
        %p555 = pneg %p51
        %p556 = pneg %p48
        %p557 = pneg %p72
        %p558 = pneg %p69
        %p559 = pneg %p93
        %p560 = pneg %p90
        %p561 = pneg %p114
        %p562 = pneg %p111
        %p563 = scmp.lt.s32.totalorder %s30, 1
        %s564 = scalar_select %p563, %s30, 1
        %s565 = smul.addr %s564, 2
        %s566 = smul.addr %s565, 4
        %s567 = scalar_lea.vmem %s4, %s566
        %p568 = pneg %p140
        %p569 = pneg %p137
        %p570 = pneg %p161
        %p571 = pneg %p158
        %p572 = pneg %p182
        %p573 = pneg %p179
        %p574 = pneg %p203
        %p575 = pneg %p200
        %p576 = pneg %p224
        %p577 = pneg %p221
        %p578 = pneg %p245
        %p579 = pneg %p242
        %p580 = pneg %p266
        %p581 = pneg %p263
        %p582 = pneg %p287
        %p583 = pneg %p284
        %p584 = pneg %p308
        %p585 = pneg %p305
        %p586 = pneg %p329
        %p587 = pneg %p326
        %p588 = pneg %p350
        %p589 = pneg %p347
        %p590 = pneg %p371
        %p591 = pneg %p368
        %p592 = pneg %p392
        %p593 = pneg %p389
        %p594 = scmp.lt.s32.totalorder %s30, 1
        %s595 = scalar_select %p594, %s30, 1
        %s596 = smul.addr %s595, 4
        %s597 = scalar_lea.vmem %s17, %s596
        %p598 = pneg %p418
        %p599 = pneg %p415
        %p600 = pneg %p444
        %p601 = pneg %p441
        %p602 = scmp.lt.s32.totalorder %s30, 1
        %s603 = scalar_select %p602, %s30, 1
        %s604 = smul.addr %s603, 2
        %s605 = smul.addr %s604, 4
        %s606 = scalar_lea.vmem %s18, %s605
        %p607 = scmp.lt.s32.totalorder %s30, 1
        %s608 = scalar_select %p607, %s30, 1
        %s609 = smul.addr %s608, 4
        %s610 = scalar_lea.vmem %s0, %s609
        %p611 = scmp.lt.s32.totalorder %s30, 1
        %s612 = scalar_select %p611, %s30, 1
        %s613 = smul.addr %s612, 2
        %s614 = smul.addr %s613, 4
        %s615 = scalar_lea.vmem %s4, %s614
        %p616 = scmp.lt.s32.totalorder %s30, 1
        %s617 = scalar_select %p616, %s30, 1
        %s618 = smul.addr %s617, 4
        %s619 = scalar_lea.vmem %s17, %s618
        %p620 = scmp.lt.s32.totalorder %s30, 1
        %s621 = scalar_select %p620, %s30, 1
        %s622 = smul.addr %s621, 2
        %s623 = smul.addr %s622, 4
        %s624 = scalar_lea.vmem %s18, %s623
        %v625 = vld [vmem:[%s615] sm:$0xff]
        %v626 = vld [vmem:[%s610] sm:$0xf]
        %v627 = vld [vmem:[%s1] sm:$0xf]
        %vm628 = vcmask 31744
        %v630 = vsel %vm628, %v627, 0
        %vm632 = vcmask 1043456
        %v634 = vsel %vm632, %v626, 0
        %636 = vmatprep.subr.mxu0 0.0
        %637 = vmatpush1.msra.mxu0 %v634
        %638 = vmatprep.subr.mxu0 0.0
        %639 = vmatpush1.msra.mxu0 0.0
        %640 = vmatprep.subr.mxu0 0.0
        %641 = vmatpush1.msra.mxu0 0.0
        %642 = vmatprep.subr.mxu0 0.0
        %643 = vmatpush1.msra.mxu0 0.0
        %644 = vmatprep.subr.mxu0 0.0
        %645 = vmatpush1.msra.mxu0 0.0
        %646 = vmatprep.subr.mxu0 0.0
        %647 = vmatpush1.msra.mxu0 0.0
        %648 = vmatprep.subr.mxu0 0.0
        %649 = vmatpush1.msra.mxu0 0.0
        %650 = vmatprep.subr.mxu0 0.0
        %651 = vmatpush1.msra.mxu0 0.0
        %652 = vmatprep.subr.mxu0 0.0
        %653 = vmatpush1.msra.mxu0 0.0
        %654 = vmatprep.subr.mxu0 0.0
        %655 = vmatpush1.msra.mxu0 0.0
        %656 = vmatprep.subr.mxu0 0.0
        %657 = vmatpush1.msra.mxu0 0.0
        %658 = vmatprep.subr.mxu0 0.0
        %659 = vmatpush1.msra.mxu0 0.0
        %660 = vmatprep.subr.mxu0 0.0
        %661 = vmatpush1.msra.mxu0 0.0
        %662 = vmatprep.subr.mxu0 0.0
        %663 = vmatpush1.msra.mxu0 0.0
        %664 = vmatprep.subr.mxu0 0.0
        %665 = vmatpush1.msra.mxu0 0.0
        %666 = vmatprep.subr.mxu0 0.0
        %667 = vmatpush1.msra.mxu0 0.0
        %668 = vmatprep.subr.mxu0 0.0
        %669 = vmatpush1.msra.mxu0 0.0
        %670 = vmatprep.subr.mxu0 0.0
        %671 = vmatpush1.msra.mxu0 0.0
        %672 = vmatprep.subr.mxu0 0.0
        %673 = vmatpush1.msra.mxu0 0.0
        %674 = vmatprep.subr.mxu0 0.0
        %675 = vmatpush1.msra.mxu0 0.0
        %676 = vmatprep.subr.mxu0 0.0
        %677 = vmatpush1.msra.mxu0 0.0
        %678 = vmatprep.subr.mxu0 0.0
        %679 = vmatpush1.msra.mxu0 0.0
        %680 = vmatprep.subr.mxu0 0.0
        %681 = vmatpush1.msra.mxu0 0.0
        %682 = vmatprep.subr.mxu0 0.0
        %683 = vmatpush1.msra.mxu0 0.0
        %684 = vmatprep.subr.mxu0 0.0
        %685 = vmatpush1.msra.mxu0 0.0
        %686 = vmatprep.subr.mxu0 0.0
        %687 = vmatpush1.msra.mxu0 0.0
        %688 = vmatprep.subr.mxu0 0.0
        %689 = vmatpush1.msra.mxu0 0.0
        %690 = vmatprep.subr.mxu0 0.0
        %691 = vmatpush1.msra.mxu0 0.0
        %692 = vmatprep.subr.mxu0 0.0
        %693 = vmatpush1.msra.mxu0 0.0
        %694 = vmatprep.subr.mxu0 0.0
        %695 = vmatpush1.msra.mxu0 0.0
        %696 = vmatprep.subr.mxu0 0.0
        %697 = vmatpush1.msra.mxu0 0.0
        %698 = vmatprep.subr.mxu0 0.0
        %699 = vmatpush1.msra.mxu0 0.0
        %700 = vmatprep.mubr.f32.mxu0 0.0
        %701 = vmatmul.mubr.f32.gmra.mrb[0].mxu0 %v630
        %v702 = vpop.f32.mrb[0].mxu0
        %v703 = vadd.f32 0.0, %v702
        %v704 = vpop.f32.mrb[0].mxu0
        %705 = vdwg.mxu0
        %v706 = vld [vmem:[#allocation2] sm:$0xff]
        %v707 = vld [vmem:[#allocation2 + $0x8] sm:$0xff]
        %v708 = vld [vmem:[#allocation2 + $0x10] sm:$0xff]
        %v709 = vld [vmem:[#allocation2 + $0x18] sm:$0xff]
        %v710 = vld [vmem:[#allocation2 + $0x20] sm:$0xff]
        %v711 = vld [vmem:[#allocation2 + $0x28] sm:$0xff]
        %v712 = vld [vmem:[#allocation2 + $0x30] sm:$0xff]
        %v713 = vld [vmem:[#allocation2 + $0x38] sm:$0xff]
        %v714 = vld [vmem:[#allocation2 + $0x40] sm:$0xff]
        %v715 = vld [vmem:[#allocation2 + $0x48] sm:$0xff]
        %v716 = vld [vmem:[#allocation2 + $0x50] sm:$0xff]
        %v717 = vld [vmem:[#allocation2 + $0x58] sm:$0xff]
        %v718 = vld [vmem:[#allocation2 + $0x60] sm:$0xff]
        %v719 = vld [vmem:[#allocation2 + $0x68] sm:$0xff]
        %v720 = vld [vmem:[#allocation2 + $0x70] sm:$0xff]
        %v721 = vld [vmem:[#allocation2 + $0x78] sm:$0xff]
        %s722 = scalar_lea.vmem %s1, 4
        %v723 = vld [vmem:[%s722] sm:$0xf]
        %v725 = vsel %vm628, %v723, 0
        %727 = vmatprep.subr.mxu0 0.0
        %728 = vmatpush1.msra.mxu0 %v634
        %729 = vmatprep.subr.mxu0 0.0
        %730 = vmatpush1.msra.mxu0 0.0
        %731 = vmatprep.subr.mxu0 0.0
        %732 = vmatpush1.msra.mxu0 0.0
        %733 = vmatprep.subr.mxu0 0.0
        %734 = vmatpush1.msra.mxu0 0.0
        %735 = vmatprep.subr.mxu0 0.0
        %736 = vmatpush1.msra.mxu0 0.0
        %737 = vmatprep.subr.mxu0 0.0
        %738 = vmatpush1.msra.mxu0 0.0
        %739 = vmatprep.subr.mxu0 0.0
        %740 = vmatpush1.msra.mxu0 0.0
        %741 = vmatprep.subr.mxu0 0.0
        %742 = vmatpush1.msra.mxu0 0.0
        %743 = vmatprep.subr.mxu0 0.0
        %744 = vmatpush1.msra.mxu0 0.0
        %745 = vmatprep.subr.mxu0 0.0
        %746 = vmatpush1.msra.mxu0 0.0
        %747 = vmatprep.subr.mxu0 0.0
        %748 = vmatpush1.msra.mxu0 0.0
        %749 = vmatprep.subr.mxu0 0.0
        %750 = vmatpush1.msra.mxu0 0.0
        %751 = vmatprep.subr.mxu0 0.0
        %752 = vmatpush1.msra.mxu0 0.0
        %753 = vmatprep.subr.mxu0 0.0
        %754 = vmatpush1.msra.mxu0 0.0
        %755 = vmatprep.subr.mxu0 0.0
        %756 = vmatpush1.msra.mxu0 0.0
        %757 = vmatprep.subr.mxu0 0.0
        %758 = vmatpush1.msra.mxu0 0.0
        %759 = vmatprep.subr.mxu0 0.0
        %760 = vmatpush1.msra.mxu0 0.0
        %761 = vmatprep.subr.mxu0 0.0
        %762 = vmatpush1.msra.mxu0 0.0
        %763 = vmatprep.subr.mxu0 0.0
        %764 = vmatpush1.msra.mxu0 0.0
        %765 = vmatprep.subr.mxu0 0.0
        %766 = vmatpush1.msra.mxu0 0.0
        %767 = vmatprep.subr.mxu0 0.0
        %768 = vmatpush1.msra.mxu0 0.0
        %769 = vmatprep.subr.mxu0 0.0
        %770 = vmatpush1.msra.mxu0 0.0
        %771 = vmatprep.subr.mxu0 0.0
        %772 = vmatpush1.msra.mxu0 0.0
        %773 = vmatprep.subr.mxu0 0.0
        %774 = vmatpush1.msra.mxu0 0.0
        %775 = vmatprep.subr.mxu0 0.0
        %776 = vmatpush1.msra.mxu0 0.0
        %777 = vmatprep.subr.mxu0 0.0
        %778 = vmatpush1.msra.mxu0 0.0
        %779 = vmatprep.subr.mxu0 0.0
        %780 = vmatpush1.msra.mxu0 0.0
        %781 = vmatprep.subr.mxu0 0.0
        %782 = vmatpush1.msra.mxu0 0.0
        %783 = vmatprep.subr.mxu0 0.0
        %784 = vmatpush1.msra.mxu0 0.0
        %785 = vmatprep.subr.mxu0 0.0
        %786 = vmatpush1.msra.mxu0 0.0
        %787 = vmatprep.subr.mxu0 0.0
        %788 = vmatpush1.msra.mxu0 0.0
        %789 = vmatprep.subr.mxu0 0.0
        %790 = vmatpush1.msra.mxu0 0.0
        %791 = vmatprep.mubr.f32.mxu0 0.0
        %792 = vmatmul.mubr.f32.gmra.mrb[0].mxu0 %v725
        %v793 = vpop.f32.mrb[0].mxu0
        %v794 = vadd.f32 0.0, %v793
        %v795 = vpop.f32.mrb[0].mxu0
        %796 = vdwg.mxu0
        %s797 = scalar_lea.vmem [#allocation2], 128
        %v798 = vld [vmem:[%s797] sm:$0xff]
        %v799 = vld [vmem:[%s797 + $0x8] sm:$0xff]
        %v800 = vld [vmem:[%s797 + $0x10] sm:$0xff]
        %v801 = vld [vmem:[%s797 + $0x18] sm:$0xff]
        %v802 = vld [vmem:[%s797 + $0x20] sm:$0xff]
        %v803 = vld [vmem:[%s797 + $0x28] sm:$0xff]
        %v804 = vld [vmem:[%s797 + $0x30] sm:$0xff]
        %v805 = vld [vmem:[%s797 + $0x38] sm:$0xff]
        %v806 = vld [vmem:[%s797 + $0x40] sm:$0xff]
        %v807 = vld [vmem:[%s797 + $0x48] sm:$0xff]
        %v808 = vld [vmem:[%s797 + $0x50] sm:$0xff]
        %v809 = vld [vmem:[%s797 + $0x58] sm:$0xff]
        %v810 = vld [vmem:[%s797 + $0x60] sm:$0xff]
        %v811 = vld [vmem:[%s797 + $0x68] sm:$0xff]
        %v812 = vld [vmem:[%s797 + $0x70] sm:$0xff]
        %v813 = vld [vmem:[%s797 + $0x78] sm:$0xff]
        %vm814 = vcmask 523264
        %v816 = vsel %vm814, %v794, 0
        %818 = vmatprep.subr.mxu0 %v799
        %819 = vmatpush1.msra.mxu0 %v798
        %820 = vmatprep.subr.mxu0 %v801
        %821 = vmatpush1.msra.mxu0 %v800
        %822 = vmatprep.subr.mxu0 %v803
        %823 = vmatpush1.msra.mxu0 %v802
        %824 = vmatprep.subr.mxu0 %v805
        %825 = vmatpush1.msra.mxu0 %v804
        %826 = vmatprep.subr.mxu0 %v807
        %827 = vmatpush1.msra.mxu0 %v806
        %828 = vmatprep.subr.mxu0 %v809
        %829 = vmatpush1.msra.mxu0 %v808
        %830 = vmatprep.subr.mxu0 %v811
        %831 = vmatpush1.msra.mxu0 %v810
        %832 = vmatprep.subr.mxu0 %v813
        %833 = vmatpush1.msra.mxu0 %v812
        %834 = vmatprep.subr.mxu0 0.0
        %835 = vmatpush1.msra.mxu0 0.0
        %836 = vmatprep.subr.mxu0 0.0
        %837 = vmatpush1.msra.mxu0 0.0
        %838 = vmatprep.subr.mxu0 0.0
        %839 = vmatpush1.msra.mxu0 0.0
        %840 = vmatprep.subr.mxu0 0.0
        %841 = vmatpush1.msra.mxu0 0.0
        %842 = vmatprep.subr.mxu0 0.0
        %843 = vmatpush1.msra.mxu0 0.0
        %844 = vmatprep.subr.mxu0 0.0
        %845 = vmatpush1.msra.mxu0 0.0
        %846 = vmatprep.subr.mxu0 0.0
        %847 = vmatpush1.msra.mxu0 0.0
        %848 = vmatprep.subr.mxu0 0.0
        %849 = vmatpush1.msra.mxu0 0.0
        %850 = vmatprep.subr.mxu0 0.0
        %851 = vmatpush1.msra.mxu0 0.0
        %852 = vmatprep.subr.mxu0 0.0
        %853 = vmatpush1.msra.mxu0 0.0
        %854 = vmatprep.subr.mxu0 0.0
        %855 = vmatpush1.msra.mxu0 0.0
        %856 = vmatprep.subr.mxu0 0.0
        %857 = vmatpush1.msra.mxu0 0.0
        %858 = vmatprep.subr.mxu0 0.0
        %859 = vmatpush1.msra.mxu0 0.0
        %860 = vmatprep.subr.mxu0 0.0
        %861 = vmatpush1.msra.mxu0 0.0
        %862 = vmatprep.subr.mxu0 0.0
        %863 = vmatpush1.msra.mxu0 0.0
        %864 = vmatprep.subr.mxu0 0.0
        %865 = vmatpush1.msra.mxu0 0.0
        %866 = vmatprep.subr.mxu0 0.0
        %867 = vmatpush1.msra.mxu0 0.0
        %868 = vmatprep.subr.mxu0 0.0
        %869 = vmatpush1.msra.mxu0 0.0
        %870 = vmatprep.subr.mxu0 0.0
        %871 = vmatpush1.msra.mxu0 0.0
        %872 = vmatprep.subr.mxu0 0.0
        %873 = vmatpush1.msra.mxu0 0.0
        %874 = vmatprep.subr.mxu0 0.0
        %875 = vmatpush1.msra.mxu0 0.0
        %876 = vmatprep.subr.mxu0 0.0
        %877 = vmatpush1.msra.mxu0 0.0
        %878 = vmatprep.subr.mxu0 0.0
        %879 = vmatpush1.msra.mxu0 0.0
        %880 = vmatprep.subr.mxu0 0.0
        %881 = vmatpush1.msra.mxu0 0.0
        %882 = vmatprep.mubr.f32.mxu0 0.0
        %883 = vmatmul.mubr.f32.gmra.mrb[0].mxu0 %v816
        %v884 = vpop.f32.mrb[0].mxu0
        %v885 = vadd.f32 0.0, %v884
        %v886 = vpop.f32.mrb[0].mxu0
        %v887 = vadd.f32 0.0, %v886
        %888 = vdwg.mxu0
        %v890 = vsel %vm814, %v703, 0
        %892 = vmatprep.subr.mxu0 %v707
        %893 = vmatpush1.msra.mxu0 %v706
        %894 = vmatprep.subr.mxu0 %v709
        %895 = vmatpush1.msra.mxu0 %v708
        %896 = vmatprep.subr.mxu0 %v711
        %897 = vmatpush1.msra.mxu0 %v710
        %898 = vmatprep.subr.mxu0 %v713
        %899 = vmatpush1.msra.mxu0 %v712
        %900 = vmatprep.subr.mxu0 %v715
        %901 = vmatpush1.msra.mxu0 %v714
        %902 = vmatprep.subr.mxu0 %v717
        %903 = vmatpush1.msra.mxu0 %v716
        %904 = vmatprep.subr.mxu0 %v719
        %905 = vmatpush1.msra.mxu0 %v718
        %906 = vmatprep.subr.mxu0 %v721
        %907 = vmatpush1.msra.mxu0 %v720
        %908 = vmatprep.subr.mxu0 0.0
        %909 = vmatpush1.msra.mxu0 0.0
        %910 = vmatprep.subr.mxu0 0.0
        %911 = vmatpush1.msra.mxu0 0.0
        %912 = vmatprep.subr.mxu0 0.0
        %913 = vmatpush1.msra.mxu0 0.0
        %914 = vmatprep.subr.mxu0 0.0
        %915 = vmatpush1.msra.mxu0 0.0
        %916 = vmatprep.subr.mxu0 0.0
        %917 = vmatpush1.msra.mxu0 0.0
        %918 = vmatprep.subr.mxu0 0.0
        %919 = vmatpush1.msra.mxu0 0.0
        %920 = vmatprep.subr.mxu0 0.0
        %921 = vmatpush1.msra.mxu0 0.0
        %922 = vmatprep.subr.mxu0 0.0
        %923 = vmatpush1.msra.mxu0 0.0
        %924 = vmatprep.subr.mxu0 0.0
        %925 = vmatpush1.msra.mxu0 0.0
        %926 = vmatprep.subr.mxu0 0.0
        %927 = vmatpush1.msra.mxu0 0.0
        %928 = vmatprep.subr.mxu0 0.0
        %929 = vmatpush1.msra.mxu0 0.0
        %930 = vmatprep.subr.mxu0 0.0
        %931 = vmatpush1.msra.mxu0 0.0
        %932 = vmatprep.subr.mxu0 0.0
        %933 = vmatpush1.msra.mxu0 0.0
        %934 = vmatprep.subr.mxu0 0.0
        %935 = vmatpush1.msra.mxu0 0.0
        %936 = vmatprep.subr.mxu0 0.0
        %937 = vmatpush1.msra.mxu0 0.0
        %938 = vmatprep.subr.mxu0 0.0
        %939 = vmatpush1.msra.mxu0 0.0
        %940 = vmatprep.subr.mxu0 0.0
        %941 = vmatpush1.msra.mxu0 0.0
        %942 = vmatprep.subr.mxu0 0.0
        %943 = vmatpush1.msra.mxu0 0.0
        %944 = vmatprep.subr.mxu0 0.0
        %945 = vmatpush1.msra.mxu0 0.0
        %946 = vmatprep.subr.mxu0 0.0
        %947 = vmatpush1.msra.mxu0 0.0
        %948 = vmatprep.subr.mxu0 0.0
        %949 = vmatpush1.msra.mxu0 0.0
        %950 = vmatprep.subr.mxu0 0.0
        %951 = vmatpush1.msra.mxu0 0.0
        %952 = vmatprep.subr.mxu0 0.0
        %953 = vmatpush1.msra.mxu0 0.0
        %954 = vmatprep.subr.mxu0 0.0
        %955 = vmatpush1.msra.mxu0 0.0
        %956 = vmatprep.mubr.f32.mxu0 0.0
        %957 = vmatmul.mubr.f32.gmra.mrb[0].mxu0 %v890
        %v958 = vpop.f32.mrb[0].mxu0
        %v959 = vadd.f32 %v885, %v958
        %v960 = vpop.f32.mrb[0].mxu0
        %v961 = vadd.f32 %v887, %v960
        %962 = vdwg.mxu0
        %s963 = scalar_lea.vmem %s1, 8
        %v964 = vld [vmem:[%s963] sm:$0xf]
        %v966 = vsel %vm628, %v964, 0
        %968 = vmatprep.subr.mxu0 0.0
        %969 = vmatpush1.msra.mxu0 %v634
        %970 = vmatprep.subr.mxu0 0.0
        %971 = vmatpush1.msra.mxu0 0.0
        %972 = vmatprep.subr.mxu0 0.0
        %973 = vmatpush1.msra.mxu0 0.0
        %974 = vmatprep.subr.mxu0 0.0
        %975 = vmatpush1.msra.mxu0 0.0
        %976 = vmatprep.subr.mxu0 0.0
        %977 = vmatpush1.msra.mxu0 0.0
        %978 = vmatprep.subr.mxu0 0.0
        %979 = vmatpush1.msra.mxu0 0.0
        %980 = vmatprep.subr.mxu0 0.0
        %981 = vmatpush1.msra.mxu0 0.0
        %982 = vmatprep.subr.mxu0 0.0
        %983 = vmatpush1.msra.mxu0 0.0
        %984 = vmatprep.subr.mxu0 0.0
        %985 = vmatpush1.msra.mxu0 0.0
        %986 = vmatprep.subr.mxu0 0.0
        %987 = vmatpush1.msra.mxu0 0.0
        %988 = vmatprep.subr.mxu0 0.0
        %989 = vmatpush1.msra.mxu0 0.0
        %990 = vmatprep.subr.mxu0 0.0
        %991 = vmatpush1.msra.mxu0 0.0
        %992 = vmatprep.subr.mxu0 0.0
        %993 = vmatpush1.msra.mxu0 0.0
        %994 = vmatprep.subr.mxu0 0.0
        %995 = vmatpush1.msra.mxu0 0.0
        %996 = vmatprep.subr.mxu0 0.0
        %997 = vmatpush1.msra.mxu0 0.0
        %998 = vmatprep.subr.mxu0 0.0
        %999 = vmatpush1.msra.mxu0 0.0
        %1000 = vmatprep.subr.mxu0 0.0
        %1001 = vmatpush1.msra.mxu0 0.0
        %1002 = vmatprep.subr.mxu0 0.0
        %1003 = vmatpush1.msra.mxu0 0.0
        %1004 = vmatprep.subr.mxu0 0.0
        %1005 = vmatpush1.msra.mxu0 0.0
        %1006 = vmatprep.subr.mxu0 0.0
        %1007 = vmatpush1.msra.mxu0 0.0
        %1008 = vmatprep.subr.mxu0 0.0
        %1009 = vmatpush1.msra.mxu0 0.0
        %1010 = vmatprep.subr.mxu0 0.0
        %1011 = vmatpush1.msra.mxu0 0.0
        %1012 = vmatprep.subr.mxu0 0.0
        %1013 = vmatpush1.msra.mxu0 0.0
        %1014 = vmatprep.subr.mxu0 0.0
        %1015 = vmatpush1.msra.mxu0 0.0
        %1016 = vmatprep.subr.mxu0 0.0
        %1017 = vmatpush1.msra.mxu0 0.0
        %1018 = vmatprep.subr.mxu0 0.0
        %1019 = vmatpush1.msra.mxu0 0.0
        %1020 = vmatprep.subr.mxu0 0.0
        %1021 = vmatpush1.msra.mxu0 0.0
        %1022 = vmatprep.subr.mxu0 0.0
        %1023 = vmatpush1.msra.mxu0 0.0
        %1024 = vmatprep.subr.mxu0 0.0
        %1025 = vmatpush1.msra.mxu0 0.0
        %1026 = vmatprep.subr.mxu0 0.0
        %1027 = vmatpush1.msra.mxu0 0.0
        %1028 = vmatprep.subr.mxu0 0.0
        %1029 = vmatpush1.msra.mxu0 0.0
        %1030 = vmatprep.subr.mxu0 0.0
        %1031 = vmatpush1.msra.mxu0 0.0
        %1032 = vmatprep.mubr.f32.mxu0 0.0
        %1033 = vmatmul.mubr.f32.gmra.mrb[0].mxu0 %v966
        %v1034 = vpop.f32.mrb[0].mxu0
        %v1035 = vadd.f32 0.0, %v1034
        %v1036 = vpop.f32.mrb[0].mxu0
        %1037 = vdwg.mxu0
        %s1038 = scalar_lea.vmem [#allocation2], 256
        %v1039 = vld [vmem:[%s1038] sm:$0xff]
        %v1040 = vld [vmem:[%s1038 + $0x8] sm:$0xff]
        %v1041 = vld [vmem:[%s1038 + $0x10] sm:$0xff]
        %v1042 = vld [vmem:[%s1038 + $0x18] sm:$0xff]
        %v1043 = vld [vmem:[%s1038 + $0x20] sm:$0xff]
        %v1044 = vld [vmem:[%s1038 + $0x28] sm:$0xff]
        %v1045 = vld [vmem:[%s1038 + $0x30] sm:$0xff]
        %v1046 = vld [vmem:[%s1038 + $0x38] sm:$0xff]
        %v1047 = vld [vmem:[%s1038 + $0x40] sm:$0xff]
        %v1048 = vld [vmem:[%s1038 + $0x48] sm:$0xff]
        %v1049 = vld [vmem:[%s1038 + $0x50] sm:$0xff]
        %v1050 = vld [vmem:[%s1038 + $0x58] sm:$0xff]
        %v1051 = vld [vmem:[%s1038 + $0x60] sm:$0xff]
        %v1052 = vld [vmem:[%s1038 + $0x68] sm:$0xff]
        %v1053 = vld [vmem:[%s1038 + $0x70] sm:$0xff]
        %v1054 = vld [vmem:[%s1038 + $0x78] sm:$0xff]
        %v1056 = vsel %vm814, %v1035, 0
        %1058 = vmatprep.subr.mxu0 %v1040
        %1059 = vmatpush1.msra.mxu0 %v1039
        %1060 = vmatprep.subr.mxu0 %v1042
        %1061 = vmatpush1.msra.mxu0 %v1041
        %1062 = vmatprep.subr.mxu0 %v1044
        %1063 = vmatpush1.msra.mxu0 %v1043
        %1064 = vmatprep.subr.mxu0 %v1046
        %1065 = vmatpush1.msra.mxu0 %v1045
        %1066 = vmatprep.subr.mxu0 %v1048
        %1067 = vmatpush1.msra.mxu0 %v1047
        %1068 = vmatprep.subr.mxu0 %v1050
        %1069 = vmatpush1.msra.mxu0 %v1049
        %1070 = vmatprep.subr.mxu0 %v1052
        %1071 = vmatpush1.msra.mxu0 %v1051
        %1072 = vmatprep.subr.mxu0 %v1054
        %1073 = vmatpush1.msra.mxu0 %v1053
        %1074 = vmatprep.subr.mxu0 0.0
        %1075 = vmatpush1.msra.mxu0 0.0
        %1076 = vmatprep.subr.mxu0 0.0
        %1077 = vmatpush1.msra.mxu0 0.0
        %1078 = vmatprep.subr.mxu0 0.0
        %1079 = vmatpush1.msra.mxu0 0.0
        %1080 = vmatprep.subr.mxu0 0.0
        %1081 = vmatpush1.msra.mxu0 0.0
        %1082 = vmatprep.subr.mxu0 0.0
        %1083 = vmatpush1.msra.mxu0 0.0
        %1084 = vmatprep.subr.mxu0 0.0
        %1085 = vmatpush1.msra.mxu0 0.0
        %1086 = vmatprep.subr.mxu0 0.0
        %1087 = vmatpush1.msra.mxu0 0.0
        %1088 = vmatprep.subr.mxu0 0.0
        %1089 = vmatpush1.msra.mxu0 0.0
        %1090 = vmatprep.subr.mxu0 0.0
        %1091 = vmatpush1.msra.mxu0 0.0
        %1092 = vmatprep.subr.mxu0 0.0
        %1093 = vmatpush1.msra.mxu0 0.0
        %1094 = vmatprep.subr.mxu0 0.0
        %1095 = vmatpush1.msra.mxu0 0.0
        %1096 = vmatprep.subr.mxu0 0.0
        %1097 = vmatpush1.msra.mxu0 0.0
        %1098 = vmatprep.subr.mxu0 0.0
        %1099 = vmatpush1.msra.mxu0 0.0
        %1100 = vmatprep.subr.mxu0 0.0
        %1101 = vmatpush1.msra.mxu0 0.0
        %1102 = vmatprep.subr.mxu0 0.0
        %1103 = vmatpush1.msra.mxu0 0.0
        %1104 = vmatprep.subr.mxu0 0.0
        %1105 = vmatpush1.msra.mxu0 0.0
        %1106 = vmatprep.subr.mxu0 0.0
        %1107 = vmatpush1.msra.mxu0 0.0
        %1108 = vmatprep.subr.mxu0 0.0
        %1109 = vmatpush1.msra.mxu0 0.0
        %1110 = vmatprep.subr.mxu0 0.0
        %1111 = vmatpush1.msra.mxu0 0.0
        %1112 = vmatprep.subr.mxu0 0.0
        %1113 = vmatpush1.msra.mxu0 0.0
        %1114 = vmatprep.subr.mxu0 0.0
        %1115 = vmatpush1.msra.mxu0 0.0
        %1116 = vmatprep.subr.mxu0 0.0
        %1117 = vmatpush1.msra.mxu0 0.0
        %1118 = vmatprep.subr.mxu0 0.0
        %1119 = vmatpush1.msra.mxu0 0.0
        %1120 = vmatprep.subr.mxu0 0.0
        %1121 = vmatpush1.msra.mxu0 0.0
        %1122 = vmatprep.mubr.f32.mxu0 0.0
        %1123 = vmatmul.mubr.f32.gmra.mrb[0].mxu0 %v1056
        %v1124 = vpop.f32.mrb[0].mxu0
        %v1125 = vadd.f32 0.0, %v1124
        %v1126 = vpop.f32.mrb[0].mxu0
        %v1127 = vadd.f32 0.0, %v1126
        %1128 = vdwg.mxu0
        %v1129 = vadd.f32 %v959, %v1125
        %v1130 = vadd.f32 %v961, %v1127
        %s1131 = scalar_lea.vmem %s1, 12
        %v1132 = vld [vmem:[%s1131] sm:$0xf]
        %v1134 = vsel %vm628, %v1132, 0
        %1136 = vmatprep.subr.mxu0 0.0
        %1137 = vmatpush1.msra.mxu0 %v634
        %1138 = vmatprep.subr.mxu0 0.0
        %1139 = vmatpush1.msra.mxu0 0.0
        %1140 = vmatprep.subr.mxu0 0.0
        %1141 = vmatpush1.msra.mxu0 0.0
        %1142 = vmatprep.subr.mxu0 0.0
        %1143 = vmatpush1.msra.mxu0 0.0
        %1144 = vmatprep.subr.mxu0 0.0
        %1145 = vmatpush1.msra.mxu0 0.0
        %1146 = vmatprep.subr.mxu0 0.0
        %1147 = vmatpush1.msra.mxu0 0.0
        %1148 = vmatprep.subr.mxu0 0.0
        %1149 = vmatpush1.msra.mxu0 0.0
        %1150 = vmatprep.subr.mxu0 0.0
        %1151 = vmatpush1.msra.mxu0 0.0
        %1152 = vmatprep.subr.mxu0 0.0
        %1153 = vmatpush1.msra.mxu0 0.0
        %1154 = vmatprep.subr.mxu0 0.0
        %1155 = vmatpush1.msra.mxu0 0.0
        %1156 = vmatprep.subr.mxu0 0.0
        %1157 = vmatpush1.msra.mxu0 0.0
        %1158 = vmatprep.subr.mxu0 0.0
        %1159 = vmatpush1.msra.mxu0 0.0
        %1160 = vmatprep.subr.mxu0 0.0
        %1161 = vmatpush1.msra.mxu0 0.0
        %1162 = vmatprep.subr.mxu0 0.0
        %1163 = vmatpush1.msra.mxu0 0.0
        %1164 = vmatprep.subr.mxu0 0.0
        %1165 = vmatpush1.msra.mxu0 0.0
        %1166 = vmatprep.subr.mxu0 0.0
        %1167 = vmatpush1.msra.mxu0 0.0
        %1168 = vmatprep.subr.mxu0 0.0
        %1169 = vmatpush1.msra.mxu0 0.0
        %1170 = vmatprep.subr.mxu0 0.0
        %1171 = vmatpush1.msra.mxu0 0.0
        %1172 = vmatprep.subr.mxu0 0.0
        %1173 = vmatpush1.msra.mxu0 0.0
        %1174 = vmatprep.subr.mxu0 0.0
        %1175 = vmatpush1.msra.mxu0 0.0
        %1176 = vmatprep.subr.mxu0 0.0
        %1177 = vmatpush1.msra.mxu0 0.0
        %1178 = vmatprep.subr.mxu0 0.0
        %1179 = vmatpush1.msra.mxu0 0.0
        %1180 = vmatprep.subr.mxu0 0.0
        %1181 = vmatpush1.msra.mxu0 0.0
        %1182 = vmatprep.subr.mxu0 0.0
        %1183 = vmatpush1.msra.mxu0 0.0
        %1184 = vmatprep.subr.mxu0 0.0
        %1185 = vmatpush1.msra.mxu0 0.0
        %1186 = vmatprep.subr.mxu0 0.0
        %1187 = vmatpush1.msra.mxu0 0.0
        %1188 = vmatprep.subr.mxu0 0.0
        %1189 = vmatpush1.msra.mxu0 0.0
        %1190 = vmatprep.subr.mxu0 0.0
        %1191 = vmatpush1.msra.mxu0 0.0
        %1192 = vmatprep.subr.mxu0 0.0
        %1193 = vmatpush1.msra.mxu0 0.0
        %1194 = vmatprep.subr.mxu0 0.0
        %1195 = vmatpush1.msra.mxu0 0.0
        %1196 = vmatprep.subr.mxu0 0.0
        %1197 = vmatpush1.msra.mxu0 0.0
        %1198 = vmatprep.subr.mxu0 0.0
        %1199 = vmatpush1.msra.mxu0 0.0
        %1200 = vmatprep.mubr.f32.mxu0 0.0
        %1201 = vmatmul.mubr.f32.gmra.mrb[0].mxu0 %v1134
        %v1202 = vpop.f32.mrb[0].mxu0
        %v1203 = vadd.f32 0.0, %v1202
        %v1204 = vpop.f32.mrb[0].mxu0
        %1205 = vdwg.mxu0
        %s1206 = scalar_lea.vmem [#allocation2], 384
        %v1207 = vld [vmem:[%s1206] sm:$0xff]
        %v1208 = vld [vmem:[%s1206 + $0x8] sm:$0xff]
        %v1209 = vld [vmem:[%s1206 + $0x10] sm:$0xff]
        %v1210 = vld [vmem:[%s1206 + $0x18] sm:$0xff]
        %v1211 = vld [vmem:[%s1206 + $0x20] sm:$0xff]
        %v1212 = vld [vmem:[%s1206 + $0x28] sm:$0xff]
        %v1213 = vld [vmem:[%s1206 + $0x30] sm:$0xff]
        %v1214 = vld [vmem:[%s1206 + $0x38] sm:$0xff]
        %v1215 = vld [vmem:[%s1206 + $0x40] sm:$0xff]
        %v1216 = vld [vmem:[%s1206 + $0x48] sm:$0xff]
        %v1217 = vld [vmem:[%s1206 + $0x50] sm:$0xff]
        %v1218 = vld [vmem:[%s1206 + $0x58] sm:$0xff]
        %v1219 = vld [vmem:[%s1206 + $0x60] sm:$0xff]
        %v1220 = vld [vmem:[%s1206 + $0x68] sm:$0xff]
        %v1221 = vld [vmem:[%s1206 + $0x70] sm:$0xff]
        %v1222 = vld [vmem:[%s1206 + $0x78] sm:$0xff]
        %v1224 = vsel %vm814, %v1203, 0
        %1226 = vmatprep.subr.mxu0 %v1208
        %1227 = vmatpush1.msra.mxu0 %v1207
        %1228 = vmatprep.subr.mxu0 %v1210
        %1229 = vmatpush1.msra.mxu0 %v1209
        %1230 = vmatprep.subr.mxu0 %v1212
        %1231 = vmatpush1.msra.mxu0 %v1211
        %1232 = vmatprep.subr.mxu0 %v1214
        %1233 = vmatpush1.msra.mxu0 %v1213
        %1234 = vmatprep.subr.mxu0 %v1216
        %1235 = vmatpush1.msra.mxu0 %v1215
        %1236 = vmatprep.subr.mxu0 %v1218
        %1237 = vmatpush1.msra.mxu0 %v1217
        %1238 = vmatprep.subr.mxu0 %v1220
        %1239 = vmatpush1.msra.mxu0 %v1219
        %1240 = vmatprep.subr.mxu0 %v1222
        %1241 = vmatpush1.msra.mxu0 %v1221
        %1242 = vmatprep.subr.mxu0 0.0
        %1243 = vmatpush1.msra.mxu0 0.0
        %1244 = vmatprep.subr.mxu0 0.0
        %1245 = vmatpush1.msra.mxu0 0.0
        %1246 = vmatprep.subr.mxu0 0.0
        %1247 = vmatpush1.msra.mxu0 0.0
        %1248 = vmatprep.subr.mxu0 0.0
        %1249 = vmatpush1.msra.mxu0 0.0
        %1250 = vmatprep.subr.mxu0 0.0
        %1251 = vmatpush1.msra.mxu0 0.0
        %1252 = vmatprep.subr.mxu0 0.0
        %1253 = vmatpush1.msra.mxu0 0.0
        %1254 = vmatprep.subr.mxu0 0.0
        %1255 = vmatpush1.msra.mxu0 0.0
        %1256 = vmatprep.subr.mxu0 0.0
        %1257 = vmatpush1.msra.mxu0 0.0
        %1258 = vmatprep.subr.mxu0 0.0
        %1259 = vmatpush1.msra.mxu0 0.0
        %1260 = vmatprep.subr.mxu0 0.0
        %1261 = vmatpush1.msra.mxu0 0.0
        %1262 = vmatprep.subr.mxu0 0.0
        %1263 = vmatpush1.msra.mxu0 0.0
        %1264 = vmatprep.subr.mxu0 0.0
        %1265 = vmatpush1.msra.mxu0 0.0
        %1266 = vmatprep.subr.mxu0 0.0
        %1267 = vmatpush1.msra.mxu0 0.0
        %1268 = vmatprep.subr.mxu0 0.0
        %1269 = vmatpush1.msra.mxu0 0.0
        %1270 = vmatprep.subr.mxu0 0.0
        %1271 = vmatpush1.msra.mxu0 0.0
        %1272 = vmatprep.subr.mxu0 0.0
        %1273 = vmatpush1.msra.mxu0 0.0
        %1274 = vmatprep.subr.mxu0 0.0
        %1275 = vmatpush1.msra.mxu0 0.0
        %1276 = vmatprep.subr.mxu0 0.0
        %1277 = vmatpush1.msra.mxu0 0.0
        %1278 = vmatprep.subr.mxu0 0.0
        %1279 = vmatpush1.msra.mxu0 0.0
        %1280 = vmatprep.subr.mxu0 0.0
        %1281 = vmatpush1.msra.mxu0 0.0
        %1282 = vmatprep.subr.mxu0 0.0
        %1283 = vmatpush1.msra.mxu0 0.0
        %1284 = vmatprep.subr.mxu0 0.0
        %1285 = vmatpush1.msra.mxu0 0.0
        %1286 = vmatprep.subr.mxu0 0.0
        %1287 = vmatpush1.msra.mxu0 0.0
        %1288 = vmatprep.subr.mxu0 0.0
        %1289 = vmatpush1.msra.mxu0 0.0
        %1290 = vmatprep.mubr.f32.mxu0 0.0
        %1291 = vmatmul.mubr.f32.gmra.mrb[0].mxu0 %v1224
        %v1292 = vpop.f32.mrb[0].mxu0
        %v1293 = vadd.f32 0.0, %v1292
        %v1294 = vpop.f32.mrb[0].mxu0
        %v1295 = vadd.f32 0.0, %v1294
        %1296 = vdwg.mxu0
        %v1297 = vadd.f32 %v1129, %v1293
        %v1298 = vadd.f32 %v1130, %v1295
        %v1299 = vld [vmem:[%s2] sm:$0xf]
        %1301 = vset.pattern.permute.xlu0 0
        %1302 = vperm.xlu0 %1301, %v1299
        %v1303 = vpop.permute.xlu0 %1302
        %v1305 = vadd.f32 %v1297, %v1303
        %v1306 = vadd.f32 %v1298, %v1303
        %v1308 = vcombine.high %v625, %v625
        %v1312 = vrot.slane %v1305, 4
        %v1313 = vrot.slane %v1306, 4
        %v1316 = vsel %vm632, %v625, %v1312
        %v1317 = vsel %vm632, %v1308, %v1313
        %v1318 = vlaneseq
        %v1319 = vand.u32 %v1318, 127
        %v1320 = vadd.s32 %v1319, 128
        %v1321 = vand.u32 %v1319, 15
        %v1322 = vand.u32 %v1320, 15
        %vm1323 = vcmp.ge.s32.totalorder %v1319, 16
        %vm1324 = vcmp.ge.s32.totalorder %v1320, 16
        %vm1325 = vcmp.ge.s32.totalorder %v1321, 1
        %vm1326 = vcmp.ge.s32.totalorder %v1322, 1
        %vm1327 = vmand %vm1323, %vm1325
        %vm1328 = vmand %vm1324, %vm1326
        %vm1329 = vcmp.le.s32.totalorder %v1321, 14
        %vm1330 = vcmp.le.s32.totalorder %v1322, 14
        %vm1331 = vmand %vm1323, %vm1329
        %vm1332 = vmand %vm1324, %vm1330
        %vm1333 = vcmp.lt.s32.totalorder %v1319, 240
        %vm1334 = vcmp.lt.s32.totalorder %v1320, 240
        %vm1335 = vmand %vm1333, %vm1325
        %vm1336 = vmand %vm1334, %vm1326
        %vm1337 = vmand %vm1333, %vm1329
        %vm1338 = vmand %vm1334, %vm1330
        %v1339 = vld [vmem:[%s5] sm:$0xff]
        %v1340 = vld [vmem:[%s6] sm:$0xff]
        %v1341 = vld [vmem:[%s7] sm:$0xff]
        %1342 = vrot.lane.b32.xlu0 %v1316, 17
        %v1343 = vpop.permute.xlu0 %1342
        %1344 = vrot.lane.b32.xlu0 %v1317, 17
        %v1345 = vpop.permute.xlu0 %1344
        %vm1346 = vcmp.lt.s32.totalorder %v1319, 17
        %v1347 = vsel %vm1346, %v1343, %v1345
        %v1348 = vsel %vm1346, %v1345, %v1343
        %v1349 = vsel %vm1327, 1, 0
        %v1350 = vsel %vm1328, 1, 0
        %vm1351 = vcmp.eq.s32.totalorder %v1349, 1
        %vm1352 = vcmp.eq.s32.totalorder %v1350, 1
        %v1353 = vsel %vm1351, %v1348, 0.0
        %v1354 = vsel %vm1352, %v1347, 0.0
        %1355 = vrot.lane.b32.xlu0 %v1316, 16
        %v1356 = vpop.permute.xlu0 %1355
        %1357 = vrot.lane.b32.xlu0 %v1317, 16
        %v1358 = vpop.permute.xlu0 %1357
        %vm1359 = vcmp.lt.s32.totalorder %v1319, 16
        %v1360 = vsel %vm1359, %v1356, %v1358
        %v1361 = vsel %vm1359, %v1358, %v1356
        %v1362 = vsel %vm1323, 1, 0
        %v1363 = vsel %vm1324, 1, 0
        %vm1364 = vcmp.eq.s32.totalorder %v1362, 1
        %vm1365 = vcmp.eq.s32.totalorder %v1363, 1
        %v1366 = vsel %vm1364, %v1361, 0.0
        %v1367 = vsel %vm1365, %v1360, 0.0
        %1368 = vrot.lane.b32.xlu0 %v1316, 15
        %v1369 = vpop.permute.xlu0 %1368
        %1370 = vrot.lane.b32.xlu0 %v1317, 15
        %v1371 = vpop.permute.xlu0 %1370
        %vm1372 = vcmp.lt.s32.totalorder %v1319, 15
        %v1373 = vsel %vm1372, %v1369, %v1371
        %v1374 = vsel %vm1372, %v1371, %v1369
        %v1375 = vsel %vm1331, 1, 0
        %v1376 = vsel %vm1332, 1, 0
        %vm1377 = vcmp.eq.s32.totalorder %v1375, 1
        %vm1378 = vcmp.eq.s32.totalorder %v1376, 1
        %v1379 = vsel %vm1377, %v1374, 0.0
        %v1380 = vsel %vm1378, %v1373, 0.0
        %1381 = vrot.lane.b32.xlu0 %v1316, 1
        %v1382 = vpop.permute.xlu0 %1381
        %1383 = vrot.lane.b32.xlu0 %v1317, 1
        %v1384 = vpop.permute.xlu0 %1383
        %vm1385 = vcmp.lt.s32.totalorder %v1319, 1
        %v1386 = vsel %vm1385, %v1382, %v1384
        %v1387 = vsel %vm1385, %v1384, %v1382
        %v1388 = vsel %vm1325, 1, 0
        %v1389 = vsel %vm1326, 1, 0
        %vm1390 = vcmp.eq.s32.totalorder %v1388, 1
        %vm1391 = vcmp.eq.s32.totalorder %v1389, 1
        %v1392 = vsel %vm1390, %v1387, 0.0
        %v1393 = vsel %vm1391, %v1386, 0.0
        %1394 = vrot.lane.b32.xlu0 %v1316, 127
        %v1395 = vpop.permute.xlu0 %1394
        %1396 = vrot.lane.b32.xlu0 %v1317, 127
        %v1397 = vpop.permute.xlu0 %1396
        %vm1398 = vcmp.lt.s32.totalorder %v1319, 127
        %v1399 = vsel %vm1398, %v1395, %v1397
        %v1400 = vsel %vm1398, %v1397, %v1395
        %v1401 = vsel %vm1329, 1, 0
        %v1402 = vsel %vm1330, 1, 0
        %vm1403 = vcmp.eq.s32.totalorder %v1401, 1
        %vm1404 = vcmp.eq.s32.totalorder %v1402, 1
        %v1405 = vsel %vm1403, %v1399, 0.0
        %v1406 = vsel %vm1404, %v1400, 0.0
        %1407 = vrot.lane.b32.xlu0 %v1316, 113
        %v1408 = vpop.permute.xlu0 %1407
        %1409 = vrot.lane.b32.xlu0 %v1317, 113
        %v1410 = vpop.permute.xlu0 %1409
        %vm1411 = vcmp.lt.s32.totalorder %v1319, 113
        %v1412 = vsel %vm1411, %v1408, %v1410
        %v1413 = vsel %vm1411, %v1410, %v1408
        %v1414 = vsel %vm1335, 1, 0
        %v1415 = vsel %vm1336, 1, 0
        %vm1416 = vcmp.eq.s32.totalorder %v1414, 1
        %vm1417 = vcmp.eq.s32.totalorder %v1415, 1
        %v1418 = vsel %vm1416, %v1412, 0.0
        %v1419 = vsel %vm1417, %v1413, 0.0
        %1420 = vrot.lane.b32.xlu0 %v1316, 112
        %v1421 = vpop.permute.xlu0 %1420
        %1422 = vrot.lane.b32.xlu0 %v1317, 112
        %v1423 = vpop.permute.xlu0 %1422
        %vm1424 = vcmp.lt.s32.totalorder %v1319, 112
        %v1425 = vsel %vm1424, %v1421, %v1423
        %v1426 = vsel %vm1424, %v1423, %v1421
        %v1427 = vsel %vm1333, 1, 0
        %v1428 = vsel %vm1334, 1, 0
        %vm1429 = vcmp.eq.s32.totalorder %v1427, 1
        %vm1430 = vcmp.eq.s32.totalorder %v1428, 1
        %v1431 = vsel %vm1429, %v1425, 0.0
        %v1432 = vsel %vm1430, %v1426, 0.0
        %1433 = vrot.lane.b32.xlu0 %v1316, 111
        %v1434 = vpop.permute.xlu0 %1433
        %1435 = vrot.lane.b32.xlu0 %v1317, 111
        %v1436 = vpop.permute.xlu0 %1435
        %vm1437 = vcmp.lt.s32.totalorder %v1319, 111
        %v1438 = vsel %vm1437, %v1434, %v1436
        %v1439 = vsel %vm1437, %v1436, %v1434
        %v1440 = vsel %vm1337, 1, 0
        %v1441 = vsel %vm1338, 1, 0
        %vm1442 = vcmp.eq.s32.totalorder %v1440, 1
        %vm1443 = vcmp.eq.s32.totalorder %v1441, 1
        %v1444 = vsel %vm1442, %v1438, 0.0
        %v1445 = vsel %vm1443, %v1439, 0.0
        %vm1446 = vcmask 588800
        %v1448 = vsel %vm1446, %v1339, 0
        %1450 = vmatprep.subr.mxu0 %v1354
        %1451 = vmatpush1.msra.mxu0 %v1353
        %1452 = vmatprep.subr.mxu0 %v1367
        %1453 = vmatpush1.msra.mxu0 %v1366
        %1454 = vmatprep.subr.mxu0 %v1380
        %1455 = vmatpush1.msra.mxu0 %v1379
        %1456 = vmatprep.subr.mxu0 %v1393
        %1457 = vmatpush1.msra.mxu0 %v1392
        %1458 = vmatprep.subr.mxu0 %v1317
        %1459 = vmatpush1.msra.mxu0 %v1316
        %1460 = vmatprep.subr.mxu0 %v1406
        %1461 = vmatpush1.msra.mxu0 %v1405
        %1462 = vmatprep.subr.mxu0 %v1419
        %1463 = vmatpush1.msra.mxu0 %v1418
        %1464 = vmatprep.subr.mxu0 %v1432
        %1465 = vmatpush1.msra.mxu0 %v1431
        %1466 = vmatprep.subr.mxu0 %v1445
        %1467 = vmatpush1.msra.mxu0 %v1444
        %1468 = vmatprep.subr.mxu0 0.0
        %1469 = vmatpush1.msra.mxu0 0.0
        %1470 = vmatprep.subr.mxu0 0.0
        %1471 = vmatpush1.msra.mxu0 0.0
        %1472 = vmatprep.subr.mxu0 0.0
        %1473 = vmatpush1.msra.mxu0 0.0
        %1474 = vmatprep.subr.mxu0 0.0
        %1475 = vmatpush1.msra.mxu0 0.0
        %1476 = vmatprep.subr.mxu0 0.0
        %1477 = vmatpush1.msra.mxu0 0.0
        %1478 = vmatprep.subr.mxu0 0.0
        %1479 = vmatpush1.msra.mxu0 0.0
        %1480 = vmatprep.subr.mxu0 0.0
        %1481 = vmatpush1.msra.mxu0 0.0
        %1482 = vmatprep.subr.mxu0 0.0
        %1483 = vmatpush1.msra.mxu0 0.0
        %1484 = vmatprep.subr.mxu0 0.0
        %1485 = vmatpush1.msra.mxu0 0.0
        %1486 = vmatprep.subr.mxu0 0.0
        %1487 = vmatpush1.msra.mxu0 0.0
        %1488 = vmatprep.subr.mxu0 0.0
        %1489 = vmatpush1.msra.mxu0 0.0
        %1490 = vmatprep.subr.mxu0 0.0
        %1491 = vmatpush1.msra.mxu0 0.0
        %1492 = vmatprep.subr.mxu0 0.0
        %1493 = vmatpush1.msra.mxu0 0.0
        %1494 = vmatprep.subr.mxu0 0.0
        %1495 = vmatpush1.msra.mxu0 0.0
        %1496 = vmatprep.subr.mxu0 0.0
        %1497 = vmatpush1.msra.mxu0 0.0
        %1498 = vmatprep.subr.mxu0 0.0
        %1499 = vmatpush1.msra.mxu0 0.0
        %1500 = vmatprep.subr.mxu0 0.0
        %1501 = vmatpush1.msra.mxu0 0.0
        %1502 = vmatprep.subr.mxu0 0.0
        %1503 = vmatpush1.msra.mxu0 0.0
        %1504 = vmatprep.subr.mxu0 0.0
        %1505 = vmatpush1.msra.mxu0 0.0
        %1506 = vmatprep.subr.mxu0 0.0
        %1507 = vmatpush1.msra.mxu0 0.0
        %1508 = vmatprep.subr.mxu0 0.0
        %1509 = vmatpush1.msra.mxu0 0.0
        %1510 = vmatprep.subr.mxu0 0.0
        %1511 = vmatpush1.msra.mxu0 0.0
        %1512 = vmatprep.subr.mxu0 0.0
        %1513 = vmatpush1.msra.mxu0 0.0
        %1514 = vmatprep.mubr.f32.mxu0 0.0
        %1515 = vmatmul.mubr.f32.gmra.mrb[0].mxu0 %v1448
        %v1516 = vpop.f32.mrb[0].mxu0
        %v1517 = vadd.f32 0.0, %v1516
        %v1518 = vpop.f32.mrb[0].mxu0
        %v1519 = vadd.f32 0.0, %v1518
        %1520 = vdwg.mxu0
        %v1521 = vadd.f32 %v1517, %v1519
        %1522 = vadd.xlane.f32.xlu0 %v1521
        %v1523 = vpop.xlane.xlu0 %1522
        %v1524 = vrot.slane %v1523, 4
        %v1525 = vadd.f32 %v1523, %v1524
        %v1526 = vrot.slane %v1525, 2
        %v1527 = vadd.f32 %v1525, %v1526
        %v1528 = vrot.slane %v1527, 1
        %v1529 = vadd.f32 %v1527, %v1528
        %s1530 = vtos %v1529
        %s1531 = smul.f32 %s1530, 0.00048828125
        %v1532 = vmul.f32 %v1517, %v1517
        %v1533 = vmul.f32 %v1519, %v1519
        %v1534 = vadd.f32 %v1532, %v1533
        %1535 = vadd.xlane.f32.xlu0 %v1534
        %v1536 = vpop.xlane.xlu0 %1535
        %v1537 = vrot.slane %v1536, 4
        %v1538 = vadd.f32 %v1536, %v1537
        %v1539 = vrot.slane %v1538, 2
        %v1540 = vadd.f32 %v1538, %v1539
        %v1541 = vrot.slane %v1540, 1
        %v1542 = vadd.f32 %v1540, %v1541
        %s1543 = vtos %v1542
        %s1544 = smul.f32 %s1543, 0.00048828125
        %s1545 = smul.f32 %s1531, %s1531
        %s1546 = ssub.f32 %s1544, %s1545
        %s1547 = sadd.f32 %s1546, 1e-05
        %v1548 = vstv %s1547
        %v1549 = vrsqrt.pop %v1548
        %s1550 = vtos %v1549
        %v1551 = vstv %s1550
        %v1552 = vmul.f32 %v1340, %v1551
        %v1553 = vstv %s1531
        %v1554 = vmul.f32 %v1553, %v1552
        %v1555 = vsub.f32 %v1341, %v1554
        %1557 = vset.pattern.permute.xlu0 0
        %1558 = vperm.xlu0 %1557, %v1552
        %v1559 = vpop.permute.xlu0 %1558
        %v1561 = vmul.f32 %v1517, %v1559
        %v1562 = vmul.f32 %v1519, %v1559
        %1564 = vset.pattern.permute.xlu0 0
        %1565 = vperm.xlu0 %1564, %v1555
        %v1566 = vpop.permute.xlu0 %1565
        %v1568 = vadd.f32 %v1561, %v1566
        %v1569 = vadd.f32 %v1562, %v1566
        %v1570 = vmul.f32 %v1568, 0.5
        %v1571 = vmul.f32 %v1569, 0.5
        %v1572 = vmul.f32 %v1568, 0.70710677
        %v1573 = vmul.f32 %v1569, 0.70710677
        %v1574 = verf.f32.pop %v1572
        %v1575 = verf.f32.pop %v1573
        %v1576 = vadd.f32 %v1574, 1.0
        %v1577 = vadd.f32 %v1575, 1.0
        %v1578 = vmul.f32 %v1570, %v1576
        %v1579 = vmul.f32 %v1571, %v1577
        %v1580 = vld [vmem:[%s8] sm:$0xff]
        %v1581 = vld [vmem:[%s9] sm:$0xff]
        %v1582 = vld [vmem:[%s10] sm:$0xff]
        %1583 = vrot.lane.b32.xlu0 %v1578, 17
        %v1584 = vpop.permute.xlu0 %1583
        %1585 = vrot.lane.b32.xlu0 %v1579, 17
        %v1586 = vpop.permute.xlu0 %1585
        %v1587 = vsel %vm1346, %v1584, %v1586
        %v1588 = vsel %vm1346, %v1586, %v1584
        %v1589 = vsel %vm1351, %v1588, 0.0
        %v1590 = vsel %vm1352, %v1587, 0.0
        %1591 = vrot.lane.b32.xlu0 %v1578, 16
        %v1592 = vpop.permute.xlu0 %1591
        %1593 = vrot.lane.b32.xlu0 %v1579, 16
        %v1594 = vpop.permute.xlu0 %1593
        %v1595 = vsel %vm1359, %v1592, %v1594
        %v1596 = vsel %vm1359, %v1594, %v1592
        %v1597 = vsel %vm1364, %v1596, 0.0
        %v1598 = vsel %vm1365, %v1595, 0.0
        %1599 = vrot.lane.b32.xlu0 %v1578, 15
        %v1600 = vpop.permute.xlu0 %1599
        %1601 = vrot.lane.b32.xlu0 %v1579, 15
        %v1602 = vpop.permute.xlu0 %1601
        %v1603 = vsel %vm1372, %v1600, %v1602
        %v1604 = vsel %vm1372, %v1602, %v1600
        %v1605 = vsel %vm1377, %v1604, 0.0
        %v1606 = vsel %vm1378, %v1603, 0.0
        %1607 = vrot.lane.b32.xlu0 %v1578, 1
        %v1608 = vpop.permute.xlu0 %1607
        %1609 = vrot.lane.b32.xlu0 %v1579, 1
        %v1610 = vpop.permute.xlu0 %1609
        %v1611 = vsel %vm1385, %v1608, %v1610
        %v1612 = vsel %vm1385, %v1610, %v1608
        %v1613 = vsel %vm1390, %v1612, 0.0
        %v1614 = vsel %vm1391, %v1611, 0.0
        %1615 = vrot.lane.b32.xlu0 %v1578, 127
        %v1616 = vpop.permute.xlu0 %1615
        %1617 = vrot.lane.b32.xlu0 %v1579, 127
        %v1618 = vpop.permute.xlu0 %1617
        %v1619 = vsel %vm1398, %v1616, %v1618
        %v1620 = vsel %vm1398, %v1618, %v1616
        %v1621 = vsel %vm1403, %v1619, 0.0
        %v1622 = vsel %vm1404, %v1620, 0.0
        %1623 = vrot.lane.b32.xlu0 %v1578, 113
        %v1624 = vpop.permute.xlu0 %1623
        %1625 = vrot.lane.b32.xlu0 %v1579, 113
        %v1626 = vpop.permute.xlu0 %1625
        %v1627 = vsel %vm1411, %v1624, %v1626
        %v1628 = vsel %vm1411, %v1626, %v1624
        %v1629 = vsel %vm1416, %v1627, 0.0
        %v1630 = vsel %vm1417, %v1628, 0.0
        %1631 = vrot.lane.b32.xlu0 %v1578, 112
        %v1632 = vpop.permute.xlu0 %1631
        %1633 = vrot.lane.b32.xlu0 %v1579, 112
        %v1634 = vpop.permute.xlu0 %1633
        %v1635 = vsel %vm1424, %v1632, %v1634
        %v1636 = vsel %vm1424, %v1634, %v1632
        %v1637 = vsel %vm1429, %v1635, 0.0
        %v1638 = vsel %vm1430, %v1636, 0.0
        %1639 = vrot.lane.b32.xlu0 %v1578, 111
        %v1640 = vpop.permute.xlu0 %1639
        %1641 = vrot.lane.b32.xlu0 %v1579, 111
        %v1642 = vpop.permute.xlu0 %1641
        %v1643 = vsel %vm1437, %v1640, %v1642
        %v1644 = vsel %vm1437, %v1642, %v1640
        %v1645 = vsel %vm1442, %v1643, 0.0
        %v1646 = vsel %vm1443, %v1644, 0.0
        %v1648 = vsel %vm1446, %v1580, 0
        %1650 = vmatprep.subr.mxu0 %v1590
        %1651 = vmatpush1.msra.mxu0 %v1589
        %1652 = vmatprep.subr.mxu0 %v1598
        %1653 = vmatpush1.msra.mxu0 %v1597
        %1654 = vmatprep.subr.mxu0 %v1606
        %1655 = vmatpush1.msra.mxu0 %v1605
        %1656 = vmatprep.subr.mxu0 %v1614
        %1657 = vmatpush1.msra.mxu0 %v1613
        %1658 = vmatprep.subr.mxu0 %v1579
        %1659 = vmatpush1.msra.mxu0 %v1578
        %1660 = vmatprep.subr.mxu0 %v1622
        %1661 = vmatpush1.msra.mxu0 %v1621
        %1662 = vmatprep.subr.mxu0 %v1630
        %1663 = vmatpush1.msra.mxu0 %v1629
        %1664 = vmatprep.subr.mxu0 %v1638
        %1665 = vmatpush1.msra.mxu0 %v1637
        %1666 = vmatprep.subr.mxu0 %v1646
        %1667 = vmatpush1.msra.mxu0 %v1645
        %1668 = vmatprep.subr.mxu0 0.0
        %1669 = vmatpush1.msra.mxu0 0.0
        %1670 = vmatprep.subr.mxu0 0.0
        %1671 = vmatpush1.msra.mxu0 0.0
        %1672 = vmatprep.subr.mxu0 0.0
        %1673 = vmatpush1.msra.mxu0 0.0
        %1674 = vmatprep.subr.mxu0 0.0
        %1675 = vmatpush1.msra.mxu0 0.0
        %1676 = vmatprep.subr.mxu0 0.0
        %1677 = vmatpush1.msra.mxu0 0.0
        %1678 = vmatprep.subr.mxu0 0.0
        %1679 = vmatpush1.msra.mxu0 0.0
        %1680 = vmatprep.subr.mxu0 0.0
        %1681 = vmatpush1.msra.mxu0 0.0
        %1682 = vmatprep.subr.mxu0 0.0
        %1683 = vmatpush1.msra.mxu0 0.0
        %1684 = vmatprep.subr.mxu0 0.0
        %1685 = vmatpush1.msra.mxu0 0.0
        %1686 = vmatprep.subr.mxu0 0.0
        %1687 = vmatpush1.msra.mxu0 0.0
        %1688 = vmatprep.subr.mxu0 0.0
        %1689 = vmatpush1.msra.mxu0 0.0
        %1690 = vmatprep.subr.mxu0 0.0
        %1691 = vmatpush1.msra.mxu0 0.0
        %1692 = vmatprep.subr.mxu0 0.0
        %1693 = vmatpush1.msra.mxu0 0.0
        %1694 = vmatprep.subr.mxu0 0.0
        %1695 = vmatpush1.msra.mxu0 0.0
        %1696 = vmatprep.subr.mxu0 0.0
        %1697 = vmatpush1.msra.mxu0 0.0
        %1698 = vmatprep.subr.mxu0 0.0
        %1699 = vmatpush1.msra.mxu0 0.0
        %1700 = vmatprep.subr.mxu0 0.0
        %1701 = vmatpush1.msra.mxu0 0.0
        %1702 = vmatprep.subr.mxu0 0.0
        %1703 = vmatpush1.msra.mxu0 0.0
        %1704 = vmatprep.subr.mxu0 0.0
        %1705 = vmatpush1.msra.mxu0 0.0
        %1706 = vmatprep.subr.mxu0 0.0
        %1707 = vmatpush1.msra.mxu0 0.0
        %1708 = vmatprep.subr.mxu0 0.0
        %1709 = vmatpush1.msra.mxu0 0.0
        %1710 = vmatprep.subr.mxu0 0.0
        %1711 = vmatpush1.msra.mxu0 0.0
        %1712 = vmatprep.subr.mxu0 0.0
        %1713 = vmatpush1.msra.mxu0 0.0
        %1714 = vmatprep.mubr.f32.mxu0 0.0
        %1715 = vmatmul.mubr.f32.gmra.mrb[0].mxu0 %v1648
        %v1716 = vpop.f32.mrb[0].mxu0
        %v1717 = vadd.f32 0.0, %v1716
        %v1718 = vpop.f32.mrb[0].mxu0
        %v1719 = vadd.f32 0.0, %v1718
        %1720 = vdwg.mxu0
        %v1721 = vadd.f32 %v1717, %v1719
        %1722 = vadd.xlane.f32.xlu0 %v1721
        %v1723 = vpop.xlane.xlu0 %1722
        %v1724 = vrot.slane %v1723, 4
        %v1725 = vadd.f32 %v1723, %v1724
        %v1726 = vrot.slane %v1725, 2
        %v1727 = vadd.f32 %v1725, %v1726
        %v1728 = vrot.slane %v1727, 1
        %v1729 = vadd.f32 %v1727, %v1728
        %s1730 = vtos %v1729
        %s1731 = smul.f32 %s1730, 0.00048828125
        %v1732 = vmul.f32 %v1717, %v1717
        %v1733 = vmul.f32 %v1719, %v1719
        %v1734 = vadd.f32 %v1732, %v1733
        %1735 = vadd.xlane.f32.xlu0 %v1734
        %v1736 = vpop.xlane.xlu0 %1735
        %v1737 = vrot.slane %v1736, 4
        %v1738 = vadd.f32 %v1736, %v1737
        %v1739 = vrot.slane %v1738, 2
        %v1740 = vadd.f32 %v1738, %v1739
        %v1741 = vrot.slane %v1740, 1
        %v1742 = vadd.f32 %v1740, %v1741
        %s1743 = vtos %v1742
        %s1744 = smul.f32 %s1743, 0.00048828125
        %s1745 = smul.f32 %s1731, %s1731
        %s1746 = ssub.f32 %s1744, %s1745
        %s1747 = sadd.f32 %s1746, 1e-05
        %v1748 = vstv %s1747
        %v1749 = vrsqrt.pop %v1748
        %s1750 = vtos %v1749
        %v1751 = vstv %s1750
        %v1752 = vmul.f32 %v1581, %v1751
        %v1753 = vstv %s1731
        %v1754 = vmul.f32 %v1753, %v1752
        %v1755 = vsub.f32 %v1582, %v1754
        %1757 = vset.pattern.permute.xlu0 0
        %1758 = vperm.xlu0 %1757, %v1752
        %v1759 = vpop.permute.xlu0 %1758
        %v1761 = vmul.f32 %v1717, %v1759
        %v1762 = vmul.f32 %v1719, %v1759
        %1764 = vset.pattern.permute.xlu0 0
        %1765 = vperm.xlu0 %1764, %v1755
        %v1766 = vpop.permute.xlu0 %1765
        %v1768 = vadd.f32 %v1761, %v1766
        %v1769 = vadd.f32 %v1762, %v1766
        %v1770 = vadd.f32 %v1316, %v1768
        %v1771 = vadd.f32 %v1317, %v1769
        %v1772 = vmul.f32 %v1770, 0.5
        %v1773 = vmul.f32 %v1771, 0.5
        %v1774 = vmul.f32 %v1770, 0.70710677
        %v1775 = vmul.f32 %v1771, 0.70710677
        %v1776 = verf.f32.pop %v1774
        %v1777 = verf.f32.pop %v1775
        %v1778 = vadd.f32 %v1776, 1.0
        %v1779 = vadd.f32 %v1777, 1.0
        %v1780 = vmul.f32 %v1772, %v1778
        %v1781 = vmul.f32 %v1773, %v1779
        %v1782 = vld [vmem:[%s11] sm:$0xff]
        %v1783 = vld [vmem:[%s12] sm:$0xff]
        %v1784 = vld [vmem:[%s13] sm:$0xff]
        %1785 = vrot.lane.b32.xlu0 %v1780, 17
        %v1786 = vpop.permute.xlu0 %1785
        %1787 = vrot.lane.b32.xlu0 %v1781, 17
        %v1788 = vpop.permute.xlu0 %1787
        %v1789 = vsel %vm1346, %v1786, %v1788
        %v1790 = vsel %vm1346, %v1788, %v1786
        %v1791 = vsel %vm1351, %v1790, 0.0
        %v1792 = vsel %vm1352, %v1789, 0.0
        %1793 = vrot.lane.b32.xlu0 %v1780, 16
        %v1794 = vpop.permute.xlu0 %1793
        %1795 = vrot.lane.b32.xlu0 %v1781, 16
        %v1796 = vpop.permute.xlu0 %1795
        %v1797 = vsel %vm1359, %v1794, %v1796
        %v1798 = vsel %vm1359, %v1796, %v1794
        %v1799 = vsel %vm1364, %v1798, 0.0
        %v1800 = vsel %vm1365, %v1797, 0.0
        %1801 = vrot.lane.b32.xlu0 %v1780, 15
        %v1802 = vpop.permute.xlu0 %1801
        %1803 = vrot.lane.b32.xlu0 %v1781, 15
        %v1804 = vpop.permute.xlu0 %1803
        %v1805 = vsel %vm1372, %v1802, %v1804
        %v1806 = vsel %vm1372, %v1804, %v1802
        %v1807 = vsel %vm1377, %v1806, 0.0
        %v1808 = vsel %vm1378, %v1805, 0.0
        %1809 = vrot.lane.b32.xlu0 %v1780, 1
        %v1810 = vpop.permute.xlu0 %1809
        %1811 = vrot.lane.b32.xlu0 %v1781, 1
        %v1812 = vpop.permute.xlu0 %1811
        %v1813 = vsel %vm1385, %v1810, %v1812
        %v1814 = vsel %vm1385, %v1812, %v1810
        %v1815 = vsel %vm1390, %v1814, 0.0
        %v1816 = vsel %vm1391, %v1813, 0.0
        %1817 = vrot.lane.b32.xlu0 %v1780, 127
        %v1818 = vpop.permute.xlu0 %1817
        %1819 = vrot.lane.b32.xlu0 %v1781, 127
        %v1820 = vpop.permute.xlu0 %1819
        %v1821 = vsel %vm1398, %v1818, %v1820
        %v1822 = vsel %vm1398, %v1820, %v1818
        %v1823 = vsel %vm1403, %v1821, 0.0
        %v1824 = vsel %vm1404, %v1822, 0.0
        %1825 = vrot.lane.b32.xlu0 %v1780, 113
        %v1826 = vpop.permute.xlu0 %1825
        %1827 = vrot.lane.b32.xlu0 %v1781, 113
        %v1828 = vpop.permute.xlu0 %1827
        %v1829 = vsel %vm1411, %v1826, %v1828
        %v1830 = vsel %vm1411, %v1828, %v1826
        %v1831 = vsel %vm1416, %v1829, 0.0
        %v1832 = vsel %vm1417, %v1830, 0.0
        %1833 = vrot.lane.b32.xlu0 %v1780, 112
        %v1834 = vpop.permute.xlu0 %1833
        %1835 = vrot.lane.b32.xlu0 %v1781, 112
        %v1836 = vpop.permute.xlu0 %1835
        %v1837 = vsel %vm1424, %v1834, %v1836
        %v1838 = vsel %vm1424, %v1836, %v1834
        %v1839 = vsel %vm1429, %v1837, 0.0
        %v1840 = vsel %vm1430, %v1838, 0.0
        %1841 = vrot.lane.b32.xlu0 %v1780, 111
        %v1842 = vpop.permute.xlu0 %1841
        %1843 = vrot.lane.b32.xlu0 %v1781, 111
        %v1844 = vpop.permute.xlu0 %1843
        %v1845 = vsel %vm1437, %v1842, %v1844
        %v1846 = vsel %vm1437, %v1844, %v1842
        %v1847 = vsel %vm1442, %v1845, 0.0
        %v1848 = vsel %vm1443, %v1846, 0.0
        %v1850 = vsel %vm1446, %v1782, 0
        %1852 = vmatprep.subr.mxu0 %v1792
        %1853 = vmatpush1.msra.mxu0 %v1791
        %1854 = vmatprep.subr.mxu0 %v1800
        %1855 = vmatpush1.msra.mxu0 %v1799
        %1856 = vmatprep.subr.mxu0 %v1808
        %1857 = vmatpush1.msra.mxu0 %v1807
        %1858 = vmatprep.subr.mxu0 %v1816
        %1859 = vmatpush1.msra.mxu0 %v1815
        %1860 = vmatprep.subr.mxu0 %v1781
        %1861 = vmatpush1.msra.mxu0 %v1780
        %1862 = vmatprep.subr.mxu0 %v1824
        %1863 = vmatpush1.msra.mxu0 %v1823
        %1864 = vmatprep.subr.mxu0 %v1832
        %1865 = vmatpush1.msra.mxu0 %v1831
        %1866 = vmatprep.subr.mxu0 %v1840
        %1867 = vmatpush1.msra.mxu0 %v1839
        %1868 = vmatprep.subr.mxu0 %v1848
        %1869 = vmatpush1.msra.mxu0 %v1847
        %1870 = vmatprep.subr.mxu0 0.0
        %1871 = vmatpush1.msra.mxu0 0.0
        %1872 = vmatprep.subr.mxu0 0.0
        %1873 = vmatpush1.msra.mxu0 0.0
        %1874 = vmatprep.subr.mxu0 0.0
        %1875 = vmatpush1.msra.mxu0 0.0
        %1876 = vmatprep.subr.mxu0 0.0
        %1877 = vmatpush1.msra.mxu0 0.0
        %1878 = vmatprep.subr.mxu0 0.0
        %1879 = vmatpush1.msra.mxu0 0.0
        %1880 = vmatprep.subr.mxu0 0.0
        %1881 = vmatpush1.msra.mxu0 0.0
        %1882 = vmatprep.subr.mxu0 0.0
        %1883 = vmatpush1.msra.mxu0 0.0
        %1884 = vmatprep.subr.mxu0 0.0
        %1885 = vmatpush1.msra.mxu0 0.0
        %1886 = vmatprep.subr.mxu0 0.0
        %1887 = vmatpush1.msra.mxu0 0.0
        %1888 = vmatprep.subr.mxu0 0.0
        %1889 = vmatpush1.msra.mxu0 0.0
        %1890 = vmatprep.subr.mxu0 0.0
        %1891 = vmatpush1.msra.mxu0 0.0
        %1892 = vmatprep.subr.mxu0 0.0
        %1893 = vmatpush1.msra.mxu0 0.0
        %1894 = vmatprep.subr.mxu0 0.0
        %1895 = vmatpush1.msra.mxu0 0.0
        %1896 = vmatprep.subr.mxu0 0.0
        %1897 = vmatpush1.msra.mxu0 0.0
        %1898 = vmatprep.subr.mxu0 0.0
        %1899 = vmatpush1.msra.mxu0 0.0
        %1900 = vmatprep.subr.mxu0 0.0
        %1901 = vmatpush1.msra.mxu0 0.0
        %1902 = vmatprep.subr.mxu0 0.0
        %1903 = vmatpush1.msra.mxu0 0.0
        %1904 = vmatprep.subr.mxu0 0.0
        %1905 = vmatpush1.msra.mxu0 0.0
        %1906 = vmatprep.subr.mxu0 0.0
        %1907 = vmatpush1.msra.mxu0 0.0
        %1908 = vmatprep.subr.mxu0 0.0
        %1909 = vmatpush1.msra.mxu0 0.0
        %1910 = vmatprep.subr.mxu0 0.0
        %1911 = vmatpush1.msra.mxu0 0.0
        %1912 = vmatprep.subr.mxu0 0.0
        %1913 = vmatpush1.msra.mxu0 0.0
        %1914 = vmatprep.subr.mxu0 0.0
        %1915 = vmatpush1.msra.mxu0 0.0
        %1916 = vmatprep.mubr.f32.mxu0 0.0
        %1917 = vmatmul.mubr.f32.gmra.mrb[0].mxu0 %v1850
        %v1918 = vpop.f32.mrb[0].mxu0
        %v1919 = vadd.f32 0.0, %v1918
        %v1920 = vpop.f32.mrb[0].mxu0
        %v1921 = vadd.f32 0.0, %v1920
        %1922 = vdwg.mxu0
        %v1923 = vadd.f32 %v1919, %v1921
        %1924 = vadd.xlane.f32.xlu0 %v1923
        %v1925 = vpop.xlane.xlu0 %1924
        %v1926 = vrot.slane %v1925, 4
        %v1927 = vadd.f32 %v1925, %v1926
        %v1928 = vrot.slane %v1927, 2
        %v1929 = vadd.f32 %v1927, %v1928
        %v1930 = vrot.slane %v1929, 1
        %v1931 = vadd.f32 %v1929, %v1930
        %s1932 = vtos %v1931
        %s1933 = smul.f32 %s1932, 0.0009765625
        %v1934 = vmul.f32 %v1919, %v1919
        %v1935 = vmul.f32 %v1921, %v1921
        %v1936 = vadd.f32 %v1934, %v1935
        %1937 = vadd.xlane.f32.xlu0 %v1936
        %v1938 = vpop.xlane.xlu0 %1937
        %v1939 = vrot.slane %v1938, 4
        %v1940 = vadd.f32 %v1938, %v1939
        %v1941 = vrot.slane %v1940, 2
        %v1942 = vadd.f32 %v1940, %v1941
        %v1943 = vrot.slane %v1942, 1
        %v1944 = vadd.f32 %v1942, %v1943
        %s1945 = vtos %v1944
        %s1946 = smul.f32 %s1945, 0.0009765625
        %s1947 = smul.f32 %s1933, %s1933
        %s1948 = ssub.f32 %s1946, %s1947
        %s1949 = sadd.f32 %s1948, 1e-05
        %v1950 = vstv %s1949
        %v1951 = vrsqrt.pop %v1950
        %s1952 = vtos %v1951
        %v1953 = vstv %s1952
        %v1954 = vmul.f32 %v1783, %v1953
        %v1955 = vstv %s1933
        %v1956 = vmul.f32 %v1955, %v1954
        %v1957 = vsub.f32 %v1784, %v1956
        %1959 = vset.pattern.permute.xlu0 0
        %1960 = vperm.xlu0 %1959, %v1954
        %v1961 = vpop.permute.xlu0 %1960
        %v1963 = vmul.f32 %v1919, %v1961
        %v1964 = vmul.f32 %v1921, %v1961
        %1966 = vset.pattern.permute.xlu0 0
        %1967 = vperm.xlu0 %1966, %v1957
        %v1968 = vpop.permute.xlu0 %1967
        %v1970 = vadd.f32 %v1963, %v1968
        %v1971 = vadd.f32 %v1964, %v1968
        %v1972 = vmul.f32 %v1970, 0.5
        %v1973 = vmul.f32 %v1971, 0.5
        %v1974 = vmul.f32 %v1970, 0.70710677
        %v1975 = vmul.f32 %v1971, 0.70710677
        %v1976 = verf.f32.pop %v1974
        %v1977 = verf.f32.pop %v1975
        %v1978 = vadd.f32 %v1976, 1.0
        %v1979 = vadd.f32 %v1977, 1.0
        %v1980 = vmul.f32 %v1972, %v1978
        %v1981 = vmul.f32 %v1973, %v1979
        %v1982 = vld [vmem:[%s14] sm:$0xf]
        %v1983 = vld [vmem:[%s15] sm:$0xf]
        %v1984 = vld [vmem:[%s16] sm:$0xf]
        %1985 = vrot.lane.b32.xlu0 %v1980, 17
        %v1986 = vpop.permute.xlu0 %1985
        %1987 = vrot.lane.b32.xlu0 %v1981, 17
        %v1988 = vpop.permute.xlu0 %1987
        %v1989 = vsel %vm1346, %v1986, %v1988
        %v1990 = vsel %vm1346, %v1988, %v1986
        %v1991 = vsel %vm1351, %v1990, 0.0
        %v1992 = vsel %vm1352, %v1989, 0.0
        %1993 = vrot.lane.b32.xlu0 %v1980, 16
        %v1994 = vpop.permute.xlu0 %1993
        %1995 = vrot.lane.b32.xlu0 %v1981, 16
        %v1996 = vpop.permute.xlu0 %1995
        %v1997 = vsel %vm1359, %v1994, %v1996
        %v1998 = vsel %vm1359, %v1996, %v1994
        %v1999 = vsel %vm1364, %v1998, 0.0
        %v2000 = vsel %vm1365, %v1997, 0.0
        %2001 = vrot.lane.b32.xlu0 %v1980, 15
        %v2002 = vpop.permute.xlu0 %2001
        %2003 = vrot.lane.b32.xlu0 %v1981, 15
        %v2004 = vpop.permute.xlu0 %2003
        %v2005 = vsel %vm1372, %v2002, %v2004
        %v2006 = vsel %vm1372, %v2004, %v2002
        %v2007 = vsel %vm1377, %v2006, 0.0
        %v2008 = vsel %vm1378, %v2005, 0.0
        %2009 = vrot.lane.b32.xlu0 %v1980, 1
        %v2010 = vpop.permute.xlu0 %2009
        %2011 = vrot.lane.b32.xlu0 %v1981, 1
        %v2012 = vpop.permute.xlu0 %2011
        %v2013 = vsel %vm1385, %v2010, %v2012
        %v2014 = vsel %vm1385, %v2012, %v2010
        %v2015 = vsel %vm1390, %v2014, 0.0
        %v2016 = vsel %vm1391, %v2013, 0.0
        %2017 = vrot.lane.b32.xlu0 %v1980, 127
        %v2018 = vpop.permute.xlu0 %2017
        %2019 = vrot.lane.b32.xlu0 %v1981, 127
        %v2020 = vpop.permute.xlu0 %2019
        %v2021 = vsel %vm1398, %v2018, %v2020
        %v2022 = vsel %vm1398, %v2020, %v2018
        %v2023 = vsel %vm1403, %v2021, 0.0
        %v2024 = vsel %vm1404, %v2022, 0.0
        %2025 = vrot.lane.b32.xlu0 %v1980, 113
        %v2026 = vpop.permute.xlu0 %2025
        %2027 = vrot.lane.b32.xlu0 %v1981, 113
        %v2028 = vpop.permute.xlu0 %2027
        %v2029 = vsel %vm1411, %v2026, %v2028
        %v2030 = vsel %vm1411, %v2028, %v2026
        %v2031 = vsel %vm1416, %v2029, 0.0
        %v2032 = vsel %vm1417, %v2030, 0.0
        %2033 = vrot.lane.b32.xlu0 %v1980, 112
        %v2034 = vpop.permute.xlu0 %2033
        %2035 = vrot.lane.b32.xlu0 %v1981, 112
        %v2036 = vpop.permute.xlu0 %2035
        %v2037 = vsel %vm1424, %v2034, %v2036
        %v2038 = vsel %vm1424, %v2036, %v2034
        %v2039 = vsel %vm1429, %v2037, 0.0
        %v2040 = vsel %vm1430, %v2038, 0.0
        %2041 = vrot.lane.b32.xlu0 %v1980, 111
        %v2042 = vpop.permute.xlu0 %2041
        %2043 = vrot.lane.b32.xlu0 %v1981, 111
        %v2044 = vpop.permute.xlu0 %2043
        %v2045 = vsel %vm1437, %v2042, %v2044
        %v2046 = vsel %vm1437, %v2044, %v2042
        %v2047 = vsel %vm1442, %v2045, 0.0
        %v2048 = vsel %vm1443, %v2046, 0.0
        %v2050 = vsel %vm1446, %v1982, 0
        %2052 = vmatprep.subr.mxu0 %v1992
        %2053 = vmatpush1.msra.mxu0 %v1991
        %2054 = vmatprep.subr.mxu0 %v2000
        %2055 = vmatpush1.msra.mxu0 %v1999
        %2056 = vmatprep.subr.mxu0 %v2008
        %2057 = vmatpush1.msra.mxu0 %v2007
        %2058 = vmatprep.subr.mxu0 %v2016
        %2059 = vmatpush1.msra.mxu0 %v2015
        %2060 = vmatprep.subr.mxu0 %v1981
        %2061 = vmatpush1.msra.mxu0 %v1980
        %2062 = vmatprep.subr.mxu0 %v2024
        %2063 = vmatpush1.msra.mxu0 %v2023
        %2064 = vmatprep.subr.mxu0 %v2032
        %2065 = vmatpush1.msra.mxu0 %v2031
        %2066 = vmatprep.subr.mxu0 %v2040
        %2067 = vmatpush1.msra.mxu0 %v2039
        %2068 = vmatprep.subr.mxu0 %v2048
        %2069 = vmatpush1.msra.mxu0 %v2047
        %2070 = vmatprep.subr.mxu0 0.0
        %2071 = vmatpush1.msra.mxu0 0.0
        %2072 = vmatprep.subr.mxu0 0.0
        %2073 = vmatpush1.msra.mxu0 0.0
        %2074 = vmatprep.subr.mxu0 0.0
        %2075 = vmatpush1.msra.mxu0 0.0
        %2076 = vmatprep.subr.mxu0 0.0
        %2077 = vmatpush1.msra.mxu0 0.0
        %2078 = vmatprep.subr.mxu0 0.0
        %2079 = vmatpush1.msra.mxu0 0.0
        %2080 = vmatprep.subr.mxu0 0.0
        %2081 = vmatpush1.msra.mxu0 0.0
        %2082 = vmatprep.subr.mxu0 0.0
        %2083 = vmatpush1.msra.mxu0 0.0
        %2084 = vmatprep.subr.mxu0 0.0
        %2085 = vmatpush1.msra.mxu0 0.0
        %2086 = vmatprep.subr.mxu0 0.0
        %2087 = vmatpush1.msra.mxu0 0.0
        %2088 = vmatprep.subr.mxu0 0.0
        %2089 = vmatpush1.msra.mxu0 0.0
        %2090 = vmatprep.subr.mxu0 0.0
        %2091 = vmatpush1.msra.mxu0 0.0
        %2092 = vmatprep.subr.mxu0 0.0
        %2093 = vmatpush1.msra.mxu0 0.0
        %2094 = vmatprep.subr.mxu0 0.0
        %2095 = vmatpush1.msra.mxu0 0.0
        %2096 = vmatprep.subr.mxu0 0.0
        %2097 = vmatpush1.msra.mxu0 0.0
        %2098 = vmatprep.subr.mxu0 0.0
        %2099 = vmatpush1.msra.mxu0 0.0
        %2100 = vmatprep.subr.mxu0 0.0
        %2101 = vmatpush1.msra.mxu0 0.0
        %2102 = vmatprep.subr.mxu0 0.0
        %2103 = vmatpush1.msra.mxu0 0.0
        %2104 = vmatprep.subr.mxu0 0.0
        %2105 = vmatpush1.msra.mxu0 0.0
        %2106 = vmatprep.subr.mxu0 0.0
        %2107 = vmatpush1.msra.mxu0 0.0
        %2108 = vmatprep.subr.mxu0 0.0
        %2109 = vmatpush1.msra.mxu0 0.0
        %2110 = vmatprep.subr.mxu0 0.0
        %2111 = vmatpush1.msra.mxu0 0.0
        %2112 = vmatprep.subr.mxu0 0.0
        %2113 = vmatpush1.msra.mxu0 0.0
        %2114 = vmatprep.subr.mxu0 0.0
        %2115 = vmatpush1.msra.mxu0 0.0
        %2116 = vmatprep.mubr.f32.mxu0 0.0
        %2117 = vmatmul.mubr.f32.gmra.mrb[0].mxu0 %v2050
        %v2118 = vpop.f32.mrb[0].mxu0
        %v2119 = vadd.f32 0.0, %v2118
        %v2120 = vpop.f32.mrb[0].mxu0
        %v2121 = vadd.f32 0.0, %v2120
        %2122 = vdwg.mxu0
        %v2123 = vsel %vm632, %v2119, 0.0
        %v2124 = vsel %vm632, %v2121, 0.0
        %v2125 = vadd.f32 %v2123, %v2124
        %2126 = vadd.xlane.f32.xlu0 %v2125
        %v2127 = vpop.xlane.xlu0 %2126
        %v2128 = vrot.slane %v2127, 4
        %v2129 = vadd.f32 %v2127, %v2128
        %v2130 = vrot.slane %v2129, 2
        %v2131 = vadd.f32 %v2129, %v2130
        %v2132 = vrot.slane %v2131, 1
        %v2133 = vadd.f32 %v2131, %v2132
        %s2134 = vtos %v2133
        %s2135 = smul.f32 %s2134, 0.0009765625
        %v2136 = vmul.f32 %v2119, %v2119
        %v2137 = vmul.f32 %v2121, %v2121
        %v2138 = vsel %vm632, %v2136, 0.0
        %v2139 = vsel %vm632, %v2137, 0.0
        %v2140 = vadd.f32 %v2138, %v2139
        %2141 = vadd.xlane.f32.xlu0 %v2140
        %v2142 = vpop.xlane.xlu0 %2141
        %v2143 = vrot.slane %v2142, 4
        %v2144 = vadd.f32 %v2142, %v2143
        %v2145 = vrot.slane %v2144, 2
        %v2146 = vadd.f32 %v2144, %v2145
        %v2147 = vrot.slane %v2146, 1
        %v2148 = vadd.f32 %v2146, %v2147
        %s2149 = vtos %v2148
        %s2150 = smul.f32 %s2149, 0.0009765625
        %s2151 = smul.f32 %s2135, %s2135
        %s2152 = ssub.f32 %s2150, %s2151
        %s2153 = sadd.f32 %s2152, 1e-05
        %v2154 = vstv %s2153
        %v2155 = vrsqrt.pop %v2154
        %s2156 = vtos %v2155
        %v2157 = vstv %s2156
        %v2158 = vmul.f32 %v1983, %v2157
        %v2159 = vstv %s2135
        %v2160 = vmul.f32 %v2159, %v2158
        %v2161 = vsub.f32 %v1984, %v2160
        %2163 = vset.pattern.permute.xlu0 0
        %2164 = vperm.xlu0 %2163, %v2158
        %v2165 = vpop.permute.xlu0 %2164
        %v2167 = vmul.f32 %v2119, %v2165
        %v2168 = vmul.f32 %v2121, %v2165
        %2170 = vset.pattern.permute.xlu0 0
        %2171 = vperm.xlu0 %2170, %v2161
        %v2172 = vpop.permute.xlu0 %2171
        %v2174 = vadd.f32 %v2167, %v2172
        %v2175 = vadd.f32 %v2168, %v2172
        %v2176 = vld [vmem:[%s619] sm:$0xf]
        %2178 = vset.pattern.permute.xlu0 0
        %2179 = vperm.xlu0 %2178, %v2176
        %v2180 = vpop.permute.xlu0 %2179
        %v2182 = vadd.f32 %v2174, %v2180
        %v2183 = vadd.f32 %v2175, %v2180
        %v2186 = vcombine.low %v2182, %v2183
        %2188 = vst [vmem:[%s624] sm:$0xff] %v2186
        %p2189 = scmp.lt.s32.totalorder %s30, 1
        %s2190 = scalar_select %p2189, %s30, 1
        %s2191 = smul.addr %s2190, 2
        %s2192 = smul.addr %s2191, 4
        %s2193 = scalar_lea.vmem %s18, %s2192
        // Predicated region
        $region97: #{up_forward.1} parent=91 // pred_check
          %p2194 = pneg %p441
        $region98: #{up_forward.1} parent=91 // pred_check_branch
          %2196 = sbr.rel (%p2194) target = $region100
        $region99: #{up_forward.1} parent=91 // pred_region
          _
        $region100: #{up_forward.1} parent=91 // pred_fallthru
          _
      $region92: #{up_forward.1} parent=5 // pred_fallthru
        _
      %p2197 = scmp.le.s32.totalorder 2, %s25
      // Predicated region
      $region101: #{up_forward.1} parent=5 // pred_check
        %p2198 = pneg %p2197
      $region102: #{up_forward.1} parent=5 // pred_check_branch
        %2200 = sbr.rel (%p2198) target = $region104
      $region103: #{up_forward.1} parent=5 // pred_region
        %s2201 = ssub.s32 %s25, 2
        // Predicated region
        $region105: #{up_forward.1} parent=103 // pred_check
          %p2202 = pneg %p447
        $region106: #{up_forward.1} parent=103 // pred_check_branch
          %2204 = sbr.rel (%p2202) target = $region108
        $region107: #{up_forward.1} parent=103 // pred_region
          %p2205 = scmp.lt.s32.totalorder %s31, 1
          %s2206 = scalar_select %p2205, %s31, 1
          %s2207 = smul.addr %s2206, 2
          %s2208 = smul.addr %s2207, 4
          %s2209 = scalar_lea.vmem %s18, %s2208
        $region108: #{up_forward.1} parent=103 // pred_fallthru
          _
      $region104: #{up_forward.1} parent=5 // pred_fallthru
        _
    $region6: #{up_forward.1} parent=1 // loop_footer
      %s29 = sadd.s32 1, %s25
    $region7: #{up_forward.1} parent=1 // loop_footer_branch
      %24 = sbr.rel target = $region3
    $region8: #{up_forward.1} parent=1 // loop_exit
      _
    %2210 = vsyncpa [#allocation3], 1
    %s2211 = scalar_lea.sflag [#allocation3], 1
    %2212 = vsyncpa %s2211, 1

</llo_original>
